<compile_context>
chip_gen: v7x
topology: tpu7x:2x2x1
jax: 0.10.0
libtpu: 0.0.40
codegen_flags: <defaults>
</compile_context>

<pallas_src>
import functools

import jax
import jax.numpy as jnp
import numpy as np
from jax.experimental import pallas as pl
from jax.experimental.pallas import tpu as pltpu


# ------------------------------ Pallas kernel -------------------------------

def _billnet_kernel(x_ref, n1_ref, b1_ref, s1l_ref, s1r_ref,
                    m2_ref, b2_ref, s2l_ref, w1p_ref, bf1_ref, wf2_ref, bf2_ref,
                    out_ref):
    f32 = jnp.float32

    # ---- conv1 (1->9, 5x5, valid) + bias + relu, channels-wide [36, 9*36] ----
    acc1 = jnp.dot(x_ref[0, 0:36, :], n1_ref[0], preferred_element_type=f32)
    for di in range(1, 5):
        acc1 = acc1 + jnp.dot(x_ref[0, di:di + 36, :], n1_ref[di],
                              preferred_element_type=f32)
    r1 = jnp.maximum(acc1 + b1_ref[...], 0.0)                                  # [36, 324]

    # ---- maxpool 3x3 stride 3: window max (VPU) + stride-3 selection (matmul) ----
    rm = jnp.maximum(jnp.maximum(r1[0:34, :], r1[1:35, :]), r1[2:36, :])       # [34, 324]
    cm = jnp.maximum(jnp.maximum(rm[:, 0:322], rm[:, 1:323]), rm[:, 2:324])    # [34, 322]
    p1 = jnp.dot(jnp.dot(s1l_ref[...], cm, preferred_element_type=f32),
                 s1r_ref[...], preferred_element_type=f32)                     # [12, 108]

    # ---- conv2 (9->4, 4x4, valid) + bias + relu, channels-wide [9, 4*9] ----
    acc2 = jnp.dot(p1[0:9, :], m2_ref[0], preferred_element_type=f32)
    for di in range(1, 4):
        acc2 = acc2 + jnp.dot(p1[di:di + 9, :], m2_ref[di],
                              preferred_element_type=f32)
    r2 = jnp.maximum(acc2 + b2_ref[...], 0.0)                                  # [9, 36]

    # ---- maxpool 3x3 stride 3 ----
    rm2 = jnp.maximum(jnp.maximum(r2[0:7, :], r2[1:8, :]), r2[2:9, :])         # [7, 36]
    cm2 = jnp.maximum(jnp.maximum(rm2[:, 0:34], rm2[:, 1:35]), rm2[:, 2:36])   # [7, 34]
    g = jnp.dot(s2l_ref[...], cm2, preferred_element_type=f32)                 # [3, 34]

    # ---- NCHW flatten + fc1 (36->7) folded into 3 small matmuls, + relu ----
    h = bf1_ref[...]                                                           # [1, 7]
    for p2 in range(3):
        h = h + jnp.dot(g[p2:p2 + 1, :], w1p_ref[p2], preferred_element_type=f32)
    h = jnp.maximum(h, 0.0)

    # ---- fc2 (7->2) + softmax ----
    logits = jnp.dot(h, wf2_ref[...], preferred_element_type=f32) + bf2_ref[...]  # [1, 2]
    m = jnp.max(logits, axis=-1, keepdims=True)
    e = jnp.exp(logits - m)
    s = jnp.sum(e, axis=-1, keepdims=True)
    r0 = pl.reciprocal(s, approx=True)        # EUP reciprocal estimate
    r = r0 * (2.0 - s * r0)                   # one Newton step -> ~f32 accuracy
    out_ref[0] = e * r


# --------------------------- wrapper / weight prep --------------------------

def _prep_operands(params):
    """Rearrange weights into banded / folded matrices + constant 0/1 selection
    matrices.  All rearrangements are exact data movement (gather / scatter)."""
    w1 = params["w_conv1"]   # [9, 1, 5, 5]
    b1 = params["b_conv1"]   # [9]
    w2 = params["w_conv2"]   # [4, 9, 4, 4]
    b2 = params["b_conv2"]   # [4]
    wf1 = params["w_fc1"]    # [7, 36]
    bf1 = params["b_fc1"]    # [7]
    wf2 = params["w_fc2"]    # [2, 7]
    bf2 = params["b_fc2"]    # [2]

    # conv1 banded weights: n1[di][w, oc*36 + j] = w1[oc, 0, di, w - j] (0 <= w-j <= 4)
    o_i, d_i, dj_i, j_i = np.meshgrid(np.arange(9), np.arange(5), np.arange(5),
                                      np.arange(36), indexing="ij")
    n1 = jnp.zeros((5, 40, 9 * 36), jnp.float32)
    n1 = n1.at[d_i, j_i + dj_i, o_i * 36 + j_i].set(w1[o_i, 0, d_i, dj_i])
    b1_row = jnp.repeat(b1, 36)[None, :]                          # [1, 324]

    # conv2 banded weights: m2[di][c*12 + w, oc*9 + j] = w2[oc, c, di, w - j]
    o_i, c_i, d_i, dj_i, j_i = np.meshgrid(np.arange(4), np.arange(9), np.arange(4),
                                           np.arange(4), np.arange(9), indexing="ij")
    m2 = jnp.zeros((4, 9 * 12, 4 * 9), jnp.float32)
    m2 = m2.at[d_i, c_i * 12 + j_i + dj_i, o_i * 9 + j_i].set(w2[o_i, c_i, d_i, dj_i])
    b2_row = jnp.repeat(b2, 9)[None, :]                           # [1, 36]

    # stride-3 downsample selection matrices (constant 0/1)
    s1l = np.zeros((12, 34), np.float32)
    s1l[np.arange(12), 3 * np.arange(12)] = 1.0                   # rows 3p of pool-1
    s1r = np.zeros((322, 108), np.float32)
    for oc in range(9):
        for q in range(12):
            s1r[oc * 36 + 3 * q, oc * 12 + q] = 1.0               # cols 3q per channel
    s2l = np.zeros((3, 7), np.float32)
    s2l[np.arange(3), 3 * np.arange(3)] = 1.0                     # rows 3p of pool-2

    # fc1 folded with pool-2 column selection and the PyTorch NCHW flatten:
    # w1p[p2][oc*9 + 3*q2, k] = wf1[k, oc*9 + p2*3 + q2]
    m_idx = np.array([oc * 9 + 3 * q2 for oc in range(4) for q2 in range(3)])
    w1p = jnp.zeros((3, 34, 7), jnp.float32)
    for p2 in range(3):
        n_idx = np.array([oc * 9 + p2 * 3 + q2 for oc in range(4) for q2 in range(3)])
        w1p = w1p.at[p2, m_idx, :].set(wf1[:, n_idx].T)

    return (n1, b1_row, jnp.asarray(s1l), jnp.asarray(s1r),
            m2, b2_row, jnp.asarray(s2l), w1p,
            bf1[None, :], wf2.T, bf2[None, :])


def billnet_forward(x_nchw, params):
    B = x_nchw.shape[0]
    x = x_nchw[:, 0, :, :]                                        # [B, 40, 40]
    operands = _prep_operands(params)

    def full(shape):
        nd = len(shape)
        return pl.BlockSpec(shape, lambda i, _nd=nd: (0,) * _nd)

    in_specs = [pl.BlockSpec((1, 40, 40), lambda i: (i, 0, 0))]
    in_specs += [full(tuple(op.shape)) for op in operands]

    out = pl.pallas_call(
        _billnet_kernel,
        grid=(B,),
        in_specs=in_specs,
        out_specs=pl.BlockSpec((1, 1, 2), lambda i: (i, 0, 0)),
        out_shape=jax.ShapeDtypeStruct((B, 1, 2), jnp.float32),
        compiler_params=pltpu.CompilerParams(
            dimension_semantics=("parallel",)),
    )(x, *operands)
    return out.reshape(B, 2)


# ----------------------------- pure-JAX reference ---------------------------

def ref_forward(x_nchw, params):
    hi = jax.lax.Precision.HIGHEST
    x = jax.lax.conv_general_dilated(
        x_nchw, params["w_conv1"], (1, 1), "VALID",
        dimension_numbers=("NCHW", "OIHW", "NCHW"), precision=hi)
    x = jax.nn.relu(x + params["b_conv1"][None, :, None, None])
    x = jax.lax.reduce_window(x, -jnp.inf, jax.lax.max,
                              (1, 1, 3, 3), (1, 1, 3, 3), "VALID")
    x = jax.lax.conv_general_dilated(
        x, params["w_conv2"], (1, 1), "VALID",
        dimension_numbers=("NCHW", "OIHW", "NCHW"), precision=hi)
    x = jax.nn.relu(x + params["b_conv2"][None, :, None, None])
    x = jax.lax.reduce_window(x, -jnp.inf, jax.lax.max,
                              (1, 1, 3, 3), (1, 1, 3, 3), "VALID")
    x = x.reshape(-1, 36)
    x = jax.nn.relu(jnp.dot(x, params["w_fc1"].T, precision=hi) + params["b_fc1"])
    x = jnp.dot(x, params["w_fc2"].T, precision=hi) + params["b_fc2"]
    return jax.nn.softmax(x, axis=-1)


# ---------------------------------- main -------------------------------------

def init_params(key):
    ks = jax.random.split(key, 8)

    def rnd(k, shape, scale):
        return jax.random.normal(k, shape, jnp.float32) * scale

    return {
        "w_conv1": rnd(ks[0], (9, 1, 5, 5), 0.2),
        "b_conv1": rnd(ks[1], (9,), 0.1),
        "w_conv2": rnd(ks[2], (4, 9, 4, 4), 0.1),
        "b_conv2": rnd(ks[3], (4,), 0.1),
        "w_fc1":   rnd(ks[4], (7, 36), 0.2),
        "b_fc1":   rnd(ks[5], (7,), 0.1),
        "w_fc2":   rnd(ks[6], (2, 7), 0.3),
        "b_fc2":   rnd(ks[7], (2,), 0.1),
    }


if __name__ == "__main__":
    key = jax.random.PRNGKey(0)
    pkey, xkey = jax.random.split(key)
    params = init_params(pkey)

    # Input: NCHW [B=2, C=1, H=40, W=40]  (40 -> 36 -> 12 -> 9 -> 3; 4*3*3 = 36)
    x = jax.random.normal(xkey, (2, 1, 40, 40), jnp.float32)

    fwd = jax.jit(functools.partial(billnet_forward, params=params))
    out = jax.block_until_ready(fwd(x))

    ref = np.asarray(ref_forward(x, params))
    out_np = np.asarray(out)

    assert out_np.shape == (2, 2), out_np.shape
    assert np.allclose(out_np.sum(axis=-1), 1.0, atol=1e-3)
    # Tightened from the previous 2e-2. Observed agreement is typically ~1e-5; the bound
    # is kept at 5e-3 only to stay robust to MXU f32 pass-count / approximate-reciprocal
    # differences across TPU generations.
    assert np.allclose(out_np, ref, atol=5e-3), (out_np, ref)

    print("KERNEL_OK")
</pallas_src>

<mosaic_0001>
module attributes {stable_mosaic.version = 11 : i64} {
  func.func @_billnet_kernel(%arg0: i32, %arg1: memref<1x40x40xf32, #tpu.memory_space<vmem>>, %arg2: memref<5x40x324xf32, #tpu.memory_space<vmem>>, %arg3: memref<1x324xf32, #tpu.memory_space<vmem>>, %arg4: memref<12x34xf32, #tpu.memory_space<vmem>>, %arg5: memref<322x108xf32, #tpu.memory_space<vmem>>, %arg6: memref<4x108x36xf32, #tpu.memory_space<vmem>>, %arg7: memref<1x36xf32, #tpu.memory_space<vmem>>, %arg8: memref<3x7xf32, #tpu.memory_space<vmem>>, %arg9: memref<3x34x7xf32, #tpu.memory_space<vmem>>, %arg10: memref<1x7xf32, #tpu.memory_space<vmem>>, %arg11: memref<7x2xf32, #tpu.memory_space<vmem>>, %arg12: memref<1x2xf32, #tpu.memory_space<vmem>>, %arg13: memref<1x1x2xf32, #tpu.memory_space<vmem>>) attributes {dimension_semantics = [#tpu.dimension_semantics<parallel>], iteration_bounds = array<i64: 2>, scalar_prefetch = 0 : i64, scratch_operands = 0 : i64, tpu.core_type = #tpu.core_type<tc>, window_params = [{transform_indices = @transform_0, window_bounds = array<i64: 1, 40, 40>}, {pipeline_mode = #tpu.pipeline_mode<synchronous>, transform_indices = @transform_1, window_bounds = array<i64: 5, 40, 324>}, {pipeline_mode = #tpu.pipeline_mode<synchronous>, transform_indices = @transform_2, window_bounds = array<i64: 1, 324>}, {pipeline_mode = #tpu.pipeline_mode<synchronous>, transform_indices = @transform_3, window_bounds = array<i64: 12, 34>}, {pipeline_mode = #tpu.pipeline_mode<synchronous>, transform_indices = @transform_4, window_bounds = array<i64: 322, 108>}, {pipeline_mode = #tpu.pipeline_mode<synchronous>, transform_indices = @transform_5, window_bounds = array<i64: 4, 108, 36>}, {pipeline_mode = #tpu.pipeline_mode<synchronous>, transform_indices = @transform_6, window_bounds = array<i64: 1, 36>}, {pipeline_mode = #tpu.pipeline_mode<synchronous>, transform_indices = @transform_7, window_bounds = array<i64: 3, 7>}, {pipeline_mode = #tpu.pipeline_mode<synchronous>, transform_indices = @transform_8, window_bounds = array<i64: 3, 34, 7>}, {pipeline_mode = #tpu.pipeline_mode<synchronous>, transform_indices = @transform_9, window_bounds = array<i64: 1, 7>}, {pipeline_mode = #tpu.pipeline_mode<synchronous>, transform_indices = @transform_10, window_bounds = array<i64: 7, 2>}, {pipeline_mode = #tpu.pipeline_mode<synchronous>, transform_indices = @transform_11, window_bounds = array<i64: 1, 2>}, {transform_indices = @transform_12, window_bounds = array<i64: 1, 1, 2>}]} {
    %c0 = arith.constant 0 : index
    %c0_0 = arith.constant 0 : index
    %c0_1 = arith.constant 0 : index
    %0 = vector.load %arg1[%c0, %c0_0, %c0_1] : memref<1x40x40xf32, #tpu.memory_space<vmem>>, vector<1x36x40xf32>
    %1 = vector.shape_cast %0 : vector<1x36x40xf32> to vector<36x40xf32>
    %c0_2 = arith.constant 0 : index
    %c0_3 = arith.constant 0 : index
    %c0_4 = arith.constant 0 : index
    %2 = vector.load %arg2[%c0_2, %c0_3, %c0_4] : memref<5x40x324xf32, #tpu.memory_space<vmem>>, vector<1x40x324xf32>
    %3 = vector.shape_cast %2 : vector<1x40x324xf32> to vector<40x324xf32>
    %cst = arith.constant dense<0.000000e+00> : vector<36x324xf32>
    %4 = tpu.matmul %1, %3, %cst {dimension_numbers = #tpu.dot_dimension_numbers<[1], [0], [0], [1], [0, 0, 1, 1], [], []>} : vector<36x40xf32>, vector<40x324xf32>, vector<36x324xf32> -> vector<36x324xf32>
    %c0_5 = arith.constant 0 : index
    %c1 = arith.constant 1 : index
    %c0_6 = arith.constant 0 : index
    %5 = vector.load %arg1[%c0_5, %c1, %c0_6] : memref<1x40x40xf32, #tpu.memory_space<vmem>>, vector<1x36x40xf32>
    %6 = vector.shape_cast %5 : vector<1x36x40xf32> to vector<36x40xf32>
    %c1_7 = arith.constant 1 : index
    %c0_8 = arith.constant 0 : index
    %c0_9 = arith.constant 0 : index
    %7 = vector.load %arg2[%c1_7, %c0_8, %c0_9] : memref<5x40x324xf32, #tpu.memory_space<vmem>>, vector<1x40x324xf32>
    %8 = vector.shape_cast %7 : vector<1x40x324xf32> to vector<40x324xf32>
    %cst_10 = arith.constant dense<0.000000e+00> : vector<36x324xf32>
    %9 = tpu.matmul %6, %8, %cst_10 {dimension_numbers = #tpu.dot_dimension_numbers<[1], [0], [0], [1], [0, 0, 1, 1], [], []>} : vector<36x40xf32>, vector<40x324xf32>, vector<36x324xf32> -> vector<36x324xf32>
    %10 = arith.addf %4, %9 : vector<36x324xf32>
    %c0_11 = arith.constant 0 : index
    %c2 = arith.constant 2 : index
    %c0_12 = arith.constant 0 : index
    %11 = vector.load %arg1[%c0_11, %c2, %c0_12] : memref<1x40x40xf32, #tpu.memory_space<vmem>>, vector<1x36x40xf32>
    %12 = vector.shape_cast %11 : vector<1x36x40xf32> to vector<36x40xf32>
    %c2_13 = arith.constant 2 : index
    %c0_14 = arith.constant 0 : index
    %c0_15 = arith.constant 0 : index
    %13 = vector.load %arg2[%c2_13, %c0_14, %c0_15] : memref<5x40x324xf32, #tpu.memory_space<vmem>>, vector<1x40x324xf32>
    %14 = vector.shape_cast %13 : vector<1x40x324xf32> to vector<40x324xf32>
    %cst_16 = arith.constant dense<0.000000e+00> : vector<36x324xf32>
    %15 = tpu.matmul %12, %14, %cst_16 {dimension_numbers = #tpu.dot_dimension_numbers<[1], [0], [0], [1], [0, 0, 1, 1], [], []>} : vector<36x40xf32>, vector<40x324xf32>, vector<36x324xf32> -> vector<36x324xf32>
    %16 = arith.addf %10, %15 : vector<36x324xf32>
    %c0_17 = arith.constant 0 : index
    %c3 = arith.constant 3 : index
    %c0_18 = arith.constant 0 : index
    %17 = vector.load %arg1[%c0_17, %c3, %c0_18] : memref<1x40x40xf32, #tpu.memory_space<vmem>>, vector<1x36x40xf32>
    %18 = vector.shape_cast %17 : vector<1x36x40xf32> to vector<36x40xf32>
    %c3_19 = arith.constant 3 : index
    %c0_20 = arith.constant 0 : index
    %c0_21 = arith.constant 0 : index
    %19 = vector.load %arg2[%c3_19, %c0_20, %c0_21] : memref<5x40x324xf32, #tpu.memory_space<vmem>>, vector<1x40x324xf32>
    %20 = vector.shape_cast %19 : vector<1x40x324xf32> to vector<40x324xf32>
    %cst_22 = arith.constant dense<0.000000e+00> : vector<36x324xf32>
    %21 = tpu.matmul %18, %20, %cst_22 {dimension_numbers = #tpu.dot_dimension_numbers<[1], [0], [0], [1], [0, 0, 1, 1], [], []>} : vector<36x40xf32>, vector<40x324xf32>, vector<36x324xf32> -> vector<36x324xf32>
    %22 = arith.addf %16, %21 : vector<36x324xf32>
    %c0_23 = arith.constant 0 : index
    %c4 = arith.constant 4 : index
    %c0_24 = arith.constant 0 : index
    %23 = vector.load %arg1[%c0_23, %c4, %c0_24] : memref<1x40x40xf32, #tpu.memory_space<vmem>>, vector<1x36x40xf32>
    %24 = vector.shape_cast %23 : vector<1x36x40xf32> to vector<36x40xf32>
    %c4_25 = arith.constant 4 : index
    %c0_26 = arith.constant 0 : index
    %c0_27 = arith.constant 0 : index
    %25 = vector.load %arg2[%c4_25, %c0_26, %c0_27] : memref<5x40x324xf32, #tpu.memory_space<vmem>>, vector<1x40x324xf32>
    %26 = vector.shape_cast %25 : vector<1x40x324xf32> to vector<40x324xf32>
    %cst_28 = arith.constant dense<0.000000e+00> : vector<36x324xf32>
    %27 = tpu.matmul %24, %26, %cst_28 {dimension_numbers = #tpu.dot_dimension_numbers<[1], [0], [0], [1], [0, 0, 1, 1], [], []>} : vector<36x40xf32>, vector<40x324xf32>, vector<36x324xf32> -> vector<36x324xf32>
    %28 = arith.addf %22, %27 : vector<36x324xf32>
    %c0_29 = arith.constant 0 : index
    %c0_30 = arith.constant 0 : index
    %29 = vector.load %arg3[%c0_29, %c0_30] : memref<1x324xf32, #tpu.memory_space<vmem>>, vector<1x324xf32>
    %30 = vector.broadcast %29 : vector<1x324xf32> to vector<36x324xf32>
    %31 = arith.addf %28, %30 : vector<36x324xf32>
    %cst_31 = arith.constant 0.000000e+00 : f32
    %32 = vector.broadcast %cst_31 : f32 to vector<36x324xf32>
    %33 = arith.maximumf %31, %32 : vector<36x324xf32>
    %34 = vector.extract_strided_slice %33 {offsets = [0, 0], sizes = [34, 324], strides = [1, 1]} : vector<36x324xf32> to vector<34x324xf32>
    %35 = vector.extract_strided_slice %33 {offsets = [1, 0], sizes = [34, 324], strides = [1, 1]} : vector<36x324xf32> to vector<34x324xf32>
    %36 = arith.maximumf %34, %35 : vector<34x324xf32>
    %37 = vector.extract_strided_slice %33 {offsets = [2, 0], sizes = [34, 324], strides = [1, 1]} : vector<36x324xf32> to vector<34x324xf32>
    %38 = arith.maximumf %36, %37 : vector<34x324xf32>
    %39 = vector.extract_strided_slice %38 {offsets = [0, 0], sizes = [34, 322], strides = [1, 1]} : vector<34x324xf32> to vector<34x322xf32>
    %40 = vector.extract_strided_slice %38 {offsets = [0, 1], sizes = [34, 322], strides = [1, 1]} : vector<34x324xf32> to vector<34x322xf32>
    %41 = arith.maximumf %39, %40 : vector<34x322xf32>
    %42 = vector.extract_strided_slice %38 {offsets = [0, 2], sizes = [34, 322], strides = [1, 1]} : vector<34x324xf32> to vector<34x322xf32>
    %43 = arith.maximumf %41, %42 : vector<34x322xf32>
    %c0_32 = arith.constant 0 : index
    %c0_33 = arith.constant 0 : index
    %44 = vector.load %arg4[%c0_32, %c0_33] : memref<12x34xf32, #tpu.memory_space<vmem>>, vector<12x34xf32>
    %cst_34 = arith.constant dense<0.000000e+00> : vector<12x322xf32>
    %45 = tpu.matmul %44, %43, %cst_34 {dimension_numbers = #tpu.dot_dimension_numbers<[1], [0], [0], [1], [0, 0, 1, 1], [], []>} : vector<12x34xf32>, vector<34x322xf32>, vector<12x322xf32> -> vector<12x322xf32>
    %c0_35 = arith.constant 0 : index
    %c0_36 = arith.constant 0 : index
    %46 = vector.load %arg5[%c0_35, %c0_36] : memref<322x108xf32, #tpu.memory_space<vmem>>, vector<322x108xf32>
    %cst_37 = arith.constant dense<0.000000e+00> : vector<12x108xf32>
    %47 = tpu.matmul %45, %46, %cst_37 {dimension_numbers = #tpu.dot_dimension_numbers<[1], [0], [0], [1], [0, 0, 1, 1], [], []>} : vector<12x322xf32>, vector<322x108xf32>, vector<12x108xf32> -> vector<12x108xf32>
    %48 = vector.extract_strided_slice %47 {offsets = [0, 0], sizes = [9, 108], strides = [1, 1]} : vector<12x108xf32> to vector<9x108xf32>
    %c0_38 = arith.constant 0 : index
    %c0_39 = arith.constant 0 : index
    %c0_40 = arith.constant 0 : index
    %49 = vector.load %arg6[%c0_38, %c0_39, %c0_40] : memref<4x108x36xf32, #tpu.memory_space<vmem>>, vector<1x108x36xf32>
    %50 = vector.shape_cast %49 : vector<1x108x36xf32> to vector<108x36xf32>
    %cst_41 = arith.constant dense<0.000000e+00> : vector<9x36xf32>
    %51 = tpu.matmul %48, %50, %cst_41 {dimension_numbers = #tpu.dot_dimension_numbers<[1], [0], [0], [1], [0, 0, 1, 1], [], []>} : vector<9x108xf32>, vector<108x36xf32>, vector<9x36xf32> -> vector<9x36xf32>
    %52 = vector.extract_strided_slice %47 {offsets = [1, 0], sizes = [9, 108], strides = [1, 1]} : vector<12x108xf32> to vector<9x108xf32>
    %c1_42 = arith.constant 1 : index
    %c0_43 = arith.constant 0 : index
    %c0_44 = arith.constant 0 : index
    %53 = vector.load %arg6[%c1_42, %c0_43, %c0_44] : memref<4x108x36xf32, #tpu.memory_space<vmem>>, vector<1x108x36xf32>
    %54 = vector.shape_cast %53 : vector<1x108x36xf32> to vector<108x36xf32>
    %cst_45 = arith.constant dense<0.000000e+00> : vector<9x36xf32>
    %55 = tpu.matmul %52, %54, %cst_45 {dimension_numbers = #tpu.dot_dimension_numbers<[1], [0], [0], [1], [0, 0, 1, 1], [], []>} : vector<9x108xf32>, vector<108x36xf32>, vector<9x36xf32> -> vector<9x36xf32>
    %56 = arith.addf %51, %55 : vector<9x36xf32>
    %57 = vector.extract_strided_slice %47 {offsets = [2, 0], sizes = [9, 108], strides = [1, 1]} : vector<12x108xf32> to vector<9x108xf32>
    %c2_46 = arith.constant 2 : index
    %c0_47 = arith.constant 0 : index
    %c0_48 = arith.constant 0 : index
    %58 = vector.load %arg6[%c2_46, %c0_47, %c0_48] : memref<4x108x36xf32, #tpu.memory_space<vmem>>, vector<1x108x36xf32>
    %59 = vector.shape_cast %58 : vector<1x108x36xf32> to vector<108x36xf32>
    %cst_49 = arith.constant dense<0.000000e+00> : vector<9x36xf32>
    %60 = tpu.matmul %57, %59, %cst_49 {dimension_numbers = #tpu.dot_dimension_numbers<[1], [0], [0], [1], [0, 0, 1, 1], [], []>} : vector<9x108xf32>, vector<108x36xf32>, vector<9x36xf32> -> vector<9x36xf32>
    %61 = arith.addf %56, %60 : vector<9x36xf32>
    %62 = vector.extract_strided_slice %47 {offsets = [3, 0], sizes = [9, 108], strides = [1, 1]} : vector<12x108xf32> to vector<9x108xf32>
    %c3_50 = arith.constant 3 : index
    %c0_51 = arith.constant 0 : index
    %c0_52 = arith.constant 0 : index
    %63 = vector.load %arg6[%c3_50, %c0_51, %c0_52] : memref<4x108x36xf32, #tpu.memory_space<vmem>>, vector<1x108x36xf32>
    %64 = vector.shape_cast %63 : vector<1x108x36xf32> to vector<108x36xf32>
    %cst_53 = arith.constant dense<0.000000e+00> : vector<9x36xf32>
    %65 = tpu.matmul %62, %64, %cst_53 {dimension_numbers = #tpu.dot_dimension_numbers<[1], [0], [0], [1], [0, 0, 1, 1], [], []>} : vector<9x108xf32>, vector<108x36xf32>, vector<9x36xf32> -> vector<9x36xf32>
    %66 = arith.addf %61, %65 : vector<9x36xf32>
    %c0_54 = arith.constant 0 : index
    %c0_55 = arith.constant 0 : index
    %67 = vector.load %arg7[%c0_54, %c0_55] : memref<1x36xf32, #tpu.memory_space<vmem>>, vector<1x36xf32>
    %68 = vector.broadcast %67 : vector<1x36xf32> to vector<9x36xf32>
    %69 = arith.addf %66, %68 : vector<9x36xf32>
    %cst_56 = arith.constant 0.000000e+00 : f32
    %70 = vector.broadcast %cst_56 : f32 to vector<9x36xf32>
    %71 = arith.maximumf %69, %70 : vector<9x36xf32>
    %72 = vector.extract_strided_slice %71 {offsets = [0, 0], sizes = [7, 36], strides = [1, 1]} : vector<9x36xf32> to vector<7x36xf32>
    %73 = vector.extract_strided_slice %71 {offsets = [1, 0], sizes = [7, 36], strides = [1, 1]} : vector<9x36xf32> to vector<7x36xf32>
    %74 = arith.maximumf %72, %73 : vector<7x36xf32>
    %75 = vector.extract_strided_slice %71 {offsets = [2, 0], sizes = [7, 36], strides = [1, 1]} : vector<9x36xf32> to vector<7x36xf32>
    %76 = arith.maximumf %74, %75 : vector<7x36xf32>
    %77 = vector.extract_strided_slice %76 {offsets = [0, 0], sizes = [7, 34], strides = [1, 1]} : vector<7x36xf32> to vector<7x34xf32>
    %78 = vector.extract_strided_slice %76 {offsets = [0, 1], sizes = [7, 34], strides = [1, 1]} : vector<7x36xf32> to vector<7x34xf32>
    %79 = arith.maximumf %77, %78 : vector<7x34xf32>
    %80 = vector.extract_strided_slice %76 {offsets = [0, 2], sizes = [7, 34], strides = [1, 1]} : vector<7x36xf32> to vector<7x34xf32>
    %81 = arith.maximumf %79, %80 : vector<7x34xf32>
    %c0_57 = arith.constant 0 : index
    %c0_58 = arith.constant 0 : index
    %82 = vector.load %arg8[%c0_57, %c0_58] : memref<3x7xf32, #tpu.memory_space<vmem>>, vector<3x7xf32>
    %cst_59 = arith.constant dense<0.000000e+00> : vector<3x34xf32>
    %83 = tpu.matmul %82, %81, %cst_59 {dimension_numbers = #tpu.dot_dimension_numbers<[1], [0], [0], [1], [0, 0, 1, 1], [], []>} : vector<3x7xf32>, vector<7x34xf32>, vector<3x34xf32> -> vector<3x34xf32>
    %c0_60 = arith.constant 0 : index
    %c0_61 = arith.constant 0 : index
    %84 = vector.load %arg10[%c0_60, %c0_61] : memref<1x7xf32, #tpu.memory_space<vmem>>, vector<1x7xf32>
    %85 = vector.extract_strided_slice %83 {offsets = [0, 0], sizes = [1, 34], strides = [1, 1]} : vector<3x34xf32> to vector<1x34xf32>
    %c0_62 = arith.constant 0 : index
    %c0_63 = arith.constant 0 : index
    %c0_64 = arith.constant 0 : index
    %86 = vector.load %arg9[%c0_62, %c0_63, %c0_64] : memref<3x34x7xf32, #tpu.memory_space<vmem>>, vector<1x34x7xf32>
    %87 = vector.shape_cast %86 : vector<1x34x7xf32> to vector<34x7xf32>
    %cst_65 = arith.constant dense<0.000000e+00> : vector<1x7xf32>
    %88 = tpu.matmul %85, %87, %cst_65 {dimension_numbers = #tpu.dot_dimension_numbers<[1], [0], [0], [1], [0, 0, 1, 1], [], []>} : vector<1x34xf32>, vector<34x7xf32>, vector<1x7xf32> -> vector<1x7xf32>
    %89 = arith.addf %84, %88 : vector<1x7xf32>
    %90 = vector.extract_strided_slice %83 {offsets = [1, 0], sizes = [1, 34], strides = [1, 1]} : vector<3x34xf32> to vector<1x34xf32>
    %c1_66 = arith.constant 1 : index
    %c0_67 = arith.constant 0 : index
    %c0_68 = arith.constant 0 : index
    %91 = vector.load %arg9[%c1_66, %c0_67, %c0_68] : memref<3x34x7xf32, #tpu.memory_space<vmem>>, vector<1x34x7xf32>
    %92 = vector.shape_cast %91 : vector<1x34x7xf32> to vector<34x7xf32>
    %cst_69 = arith.constant dense<0.000000e+00> : vector<1x7xf32>
    %93 = tpu.matmul %90, %92, %cst_69 {dimension_numbers = #tpu.dot_dimension_numbers<[1], [0], [0], [1], [0, 0, 1, 1], [], []>} : vector<1x34xf32>, vector<34x7xf32>, vector<1x7xf32> -> vector<1x7xf32>
    %94 = arith.addf %89, %93 : vector<1x7xf32>
    %95 = vector.extract_strided_slice %83 {offsets = [2, 0], sizes = [1, 34], strides = [1, 1]} : vector<3x34xf32> to vector<1x34xf32>
    %c2_70 = arith.constant 2 : index
    %c0_71 = arith.constant 0 : index
    %c0_72 = arith.constant 0 : index
    %96 = vector.load %arg9[%c2_70, %c0_71, %c0_72] : memref<3x34x7xf32, #tpu.memory_space<vmem>>, vector<1x34x7xf32>
    %97 = vector.shape_cast %96 : vector<1x34x7xf32> to vector<34x7xf32>
    %cst_73 = arith.constant dense<0.000000e+00> : vector<1x7xf32>
    %98 = tpu.matmul %95, %97, %cst_73 {dimension_numbers = #tpu.dot_dimension_numbers<[1], [0], [0], [1], [0, 0, 1, 1], [], []>} : vector<1x34xf32>, vector<34x7xf32>, vector<1x7xf32> -> vector<1x7xf32>
    %99 = arith.addf %94, %98 : vector<1x7xf32>
    %cst_74 = arith.constant 0.000000e+00 : f32
    %100 = vector.broadcast %cst_74 : f32 to vector<1x7xf32>
    %101 = arith.maximumf %99, %100 : vector<1x7xf32>
    %c0_75 = arith.constant 0 : index
    %c0_76 = arith.constant 0 : index
    %102 = vector.load %arg11[%c0_75, %c0_76] : memref<7x2xf32, #tpu.memory_space<vmem>>, vector<7x2xf32>
    %cst_77 = arith.constant dense<0.000000e+00> : vector<1x2xf32>
    %103 = tpu.matmul %101, %102, %cst_77 {dimension_numbers = #tpu.dot_dimension_numbers<[1], [0], [0], [1], [0, 0, 1, 1], [], []>} : vector<1x7xf32>, vector<7x2xf32>, vector<1x2xf32> -> vector<1x2xf32>
    %c0_78 = arith.constant 0 : index
    %c0_79 = arith.constant 0 : index
    %104 = vector.load %arg12[%c0_78, %c0_79] : memref<1x2xf32, #tpu.memory_space<vmem>>, vector<1x2xf32>
    %105 = arith.addf %103, %104 : vector<1x2xf32>
    %cst_80 = arith.constant dense<0xFF800000> : vector<1xf32>
    %106 = vector.multi_reduction <maximumf>, %105, %cst_80 [1] : vector<1x2xf32> to vector<1xf32>
    %107 = vector.shape_cast %106 : vector<1xf32> to vector<1x1xf32>
    %108 = vector.broadcast %107 : vector<1x1xf32> to vector<1x2xf32>
    %109 = arith.subf %105, %108 : vector<1x2xf32>
    %110 = math.exp %109 : vector<1x2xf32>
    %cst_81 = arith.constant dense<0.000000e+00> : vector<1xf32>
    %111 = vector.multi_reduction <add>, %110, %cst_81 [1] : vector<1x2xf32> to vector<1xf32>
    %112 = vector.shape_cast %111 : vector<1xf32> to vector<1x1xf32>
    %113 = tpu.reciprocal %112 {approx = true} : vector<1x1xf32> -> vector<1x1xf32>
    %114 = arith.mulf %112, %113 : vector<1x1xf32>
    %cst_82 = arith.constant 2.000000e+00 : f32
    %115 = vector.broadcast %cst_82 : f32 to vector<1x1xf32>
    %116 = arith.subf %115, %114 : vector<1x1xf32>
    %117 = arith.mulf %113, %116 : vector<1x1xf32>
    %118 = vector.broadcast %117 : vector<1x1xf32> to vector<1x2xf32>
    %119 = arith.mulf %110, %118 : vector<1x2xf32>
    %c0_83 = arith.constant 0 : index
    %c0_84 = arith.constant 0 : index
    %c0_85 = arith.constant 0 : index
    %120 = vector.load %arg13[%c0_83, %c0_84, %c0_85] : memref<1x1x2xf32, #tpu.memory_space<vmem>>, vector<1x1x2xf32>
    %121 = vector.shape_cast %120 : vector<1x1x2xf32> to vector<1x2xf32>
    %122 = vector.shape_cast %119 : vector<1x2xf32> to vector<1x1x2xf32>
    tpu.vector_store %arg13[%c0_83, %c0_84, %c0_85], %122 {strides = array<i32>} : memref<1x1x2xf32, #tpu.memory_space<vmem>>, vector<1x1x2xf32>,
    return
  }
  func.func @transform_0(%arg0: i32) -> (i32, i32, i32) {
    %c0_i32 = arith.constant 0 : i32
    %c0_i32_0 = arith.constant 0 : i32
    %c0_i32_1 = arith.constant 0 : i32
    return %arg0, %c0_i32, %c0_i32_0 : i32, i32, i32
  }
  func.func @transform_1(%arg0: i32) -> (i32, i32, i32) {
    %c0_i32 = arith.constant 0 : i32
    %c0_i32_0 = arith.constant 0 : i32
    %c0_i32_1 = arith.constant 0 : i32
    %c0_i32_2 = arith.constant 0 : i32
    return %c0_i32, %c0_i32_0, %c0_i32_1 : i32, i32, i32
  }
  func.func @transform_2(%arg0: i32) -> (i32, i32) {
    %c0_i32 = arith.constant 0 : i32
    %c0_i32_0 = arith.constant 0 : i32
    %c0_i32_1 = arith.constant 0 : i32
    return %c0_i32, %c0_i32_0 : i32, i32
  }
  func.func @transform_3(%arg0: i32) -> (i32, i32) {
    %c0_i32 = arith.constant 0 : i32
    %c0_i32_0 = arith.constant 0 : i32
    %c0_i32_1 = arith.constant 0 : i32
    return %c0_i32, %c0_i32_0 : i32, i32
  }
  func.func @transform_4(%arg0: i32) -> (i32, i32) {
    %c0_i32 = arith.constant 0 : i32
    %c0_i32_0 = arith.constant 0 : i32
    %c0_i32_1 = arith.constant 0 : i32
    return %c0_i32, %c0_i32_0 : i32, i32
  }
  func.func @transform_5(%arg0: i32) -> (i32, i32, i32) {
    %c0_i32 = arith.constant 0 : i32
    %c0_i32_0 = arith.constant 0 : i32
    %c0_i32_1 = arith.constant 0 : i32
    %c0_i32_2 = arith.constant 0 : i32
    return %c0_i32, %c0_i32_0, %c0_i32_1 : i32, i32, i32
  }
  func.func @transform_6(%arg0: i32) -> (i32, i32) {
    %c0_i32 = arith.constant 0 : i32
    %c0_i32_0 = arith.constant 0 : i32
    %c0_i32_1 = arith.constant 0 : i32
    return %c0_i32, %c0_i32_0 : i32, i32
  }
  func.func @transform_7(%arg0: i32) -> (i32, i32) {
    %c0_i32 = arith.constant 0 : i32
    %c0_i32_0 = arith.constant 0 : i32
    %c0_i32_1 = arith.constant 0 : i32
    return %c0_i32, %c0_i32_0 : i32, i32
  }
  func.func @transform_8(%arg0: i32) -> (i32, i32, i32) {
    %c0_i32 = arith.constant 0 : i32
    %c0_i32_0 = arith.constant 0 : i32
    %c0_i32_1 = arith.constant 0 : i32
    %c0_i32_2 = arith.constant 0 : i32
    return %c0_i32, %c0_i32_0, %c0_i32_1 : i32, i32, i32
  }
  func.func @transform_9(%arg0: i32) -> (i32, i32) {
    %c0_i32 = arith.constant 0 : i32
    %c0_i32_0 = arith.constant 0 : i32
    %c0_i32_1 = arith.constant 0 : i32
    return %c0_i32, %c0_i32_0 : i32, i32
  }
  func.func @transform_10(%arg0: i32) -> (i32, i32) {
    %c0_i32 = arith.constant 0 : i32
    %c0_i32_0 = arith.constant 0 : i32
    %c0_i32_1 = arith.constant 0 : i32
    return %c0_i32, %c0_i32_0 : i32, i32
  }
  func.func @transform_11(%arg0: i32) -> (i32, i32) {
    %c0_i32 = arith.constant 0 : i32
    %c0_i32_0 = arith.constant 0 : i32
    %c0_i32_1 = arith.constant 0 : i32
    return %c0_i32, %c0_i32_0 : i32, i32
  }
  func.func @transform_12(%arg0: i32) -> (i32, i32, i32) {
    %c0_i32 = arith.constant 0 : i32
    %c0_i32_0 = arith.constant 0 : i32
    %c0_i32_1 = arith.constant 0 : i32
    return %arg0, %c0_i32, %c0_i32_0 : i32, i32, i32
  }
}

</mosaic_0001>

<llo_original>
// kernel: billnet_forward.1
$region0: #{billnet_forward.1}
  #allocation0 [shape = 'u32[]', space=smem, size = 0x4, offset = 0x4, fixed_abs, tag = 'smem constant byte address 0x4 - core index']
  #allocation1 [shape = 'u32[144,128]{1,0:T(1,128)}', space=vmem, size = 0x12000, scoped, tag = 'internal scratch']
  %s0 = inlined_call_operand.hbm [shape: f32[2,40,40], index: 0, kind: input, shape index: {}]
  %s1 = inlined_call_operand.hbm [shape: f32[5,40,324], index: 1, kind: input, shape index: {}]
  %s2 = inlined_call_operand.vmem [shape: f32[1,324], index: 2, kind: input, shape index: {}]
  %s3 = inlined_call_operand.vmem [shape: f32[12,34], index: 3, kind: input, shape index: {}]
  %s4 = inlined_call_operand.hbm [shape: f32[322,108], index: 4, kind: input, shape index: {}]
  %s5 = inlined_call_operand.hbm [shape: f32[4,108,36], index: 5, kind: input, shape index: {}]
  %s6 = inlined_call_operand.vmem [shape: f32[1,36], index: 6, kind: input, shape index: {}]
  %s7 = inlined_call_operand.vmem [shape: f32[3,7], index: 7, kind: input, shape index: {}]
  %s8 = inlined_call_operand.hbm [shape: f32[3,34,7], index: 8, kind: input, shape index: {}]
  %s9 = inlined_call_operand.vmem [shape: f32[1,7], index: 9, kind: input, shape index: {}]
  %s10 = inlined_call_operand.vmem [shape: f32[7,2], index: 10, kind: input, shape index: {}]
  %s11 = inlined_call_operand.vmem [shape: f32[1,2], index: 11, kind: input, shape index: {}]
  %s12 = inlined_call_operand.hbm [shape: f32[2,1,2], index: 12, kind: output, shape index: {}]
  %s13 = sld [smem:[#allocation0]]
  $region101: #{billnet_forward.1} parent=0
    _
  %s15 = ssub.s32 1, %s13
  %s16 = scalar_select 0, %s15, %s13
  $region1: #{billnet_forward.1} parent=0
    #allocation2 [shape = 'u8[40960]{0}', space=vmem, size = 0xa000, scoped, tag = 'input window, operand 0']
    #allocation3 [shape = 's32[2]{0}', space=sflag, size = 0x8, scoped, tag = 'scoped memory for billnet_forward.1']
    #allocation4 [shape = 's32[2]{0}', space=sflag, size = 0x8, scoped, tag = 'scoped memory for billnet_forward.1']
    #allocation5 [shape = 'u8[307200]{0}', space=vmem, size = 0x4b000, scoped, tag = 'input window, operand 1, single buffered']
    #allocation6 [shape = 's32[1]{0}', space=sflag, size = 0x4, scoped, tag = 'scoped memory for billnet_forward.1']
    #allocation7 [shape = 'u8[167936]{0}', space=vmem, size = 0x29000, scoped, tag = 'input window, operand 4, single buffered']
    #allocation8 [shape = 'u8[229376]{0}', space=vmem, size = 0x38000, scoped, tag = 'input window, operand 5, single buffered']
    #allocation9 [shape = 's32[1]{0}', space=sflag, size = 0x4, scoped, tag = 'scoped memory for billnet_forward.1']
    #allocation10 [shape = 'u8[61440]{0}', space=vmem, size = 0xf000, scoped, tag = 'input window, operand 8, single buffered']
    #allocation11 [shape = 'u8[1024]{0}', space=vmem, size = 0x400, scoped, tag = 'output window, operand 0']
    %17 = vsyncpa [#allocation3], 0
    %s18 = scalar_lea.sflag [#allocation3], 1
    %19 = vsyncpa %s18, 0
    %20 = vsyncpa [#allocation6], 0
    %21 = vsyncpa [#allocation9], 0
    %22 = vsyncpa [#allocation4], 0
    %s23 = scalar_lea.sflag [#allocation4], 1
    %24 = vsyncpa %s23, 0
    loop: start=0, step=1, limit=4
    $region2: #{billnet_forward.1} parent=1 // loop_pre_header
      _
    $region3: #{billnet_forward.1} parent=1 // loop_header
      %s26 = sphi 0, %s30
      %p27 = scmp.ge.s32.totalorder %s26, 4
      %s36 = sphi 0, %s38
      %s39 = sphi 0, %s36
      %s40 = sphi 0, %s39
      %s56 = sphi 0, %s40
      %s60 = sphi 0, %s60
      %s62 = sphi 0, %s60
      %s63 = sphi 0, %s62
      %s77 = sphi 0, %s63
      %s81 = sphi 0, %s81
      %s83 = sphi 0, %s81
      %s84 = sphi 0, %s83
      %s98 = sphi 0, %s84
      %s102 = sphi 0, %s102
      %s104 = sphi 0, %s102
      %s105 = sphi 0, %s104
      %s119 = sphi 0, %s105
      %s123 = sphi 0, %s123
      %s125 = sphi 0, %s123
      %s126 = sphi 0, %s125
      %s140 = sphi 0, %s126
      %s144 = sphi 0, %s144
      %s146 = sphi 0, %s144
      %s147 = sphi 0, %s146
      %s161 = sphi 0, %s147
      %s165 = sphi 0, %s165
      %s167 = sphi 0, %s165
      %s168 = sphi 0, %s167
      %s182 = sphi 0, %s168
      %s186 = sphi 0, %s186
      %s188 = sphi 0, %s186
      %s189 = sphi 0, %s188
      %s203 = sphi 0, %s189
      %s207 = sphi 0, %s207
      %s209 = sphi 0, %s207
      %s210 = sphi 0, %s209
      %s224 = sphi 0, %s210
      %s228 = sphi 0, %s228
      %s230 = sphi 0, %s228
      %s231 = sphi 0, %s230
      %s245 = sphi 0, %s231
      %s249 = sphi 0, %s249
      %s251 = sphi 0, %s249
      %s252 = sphi 0, %s251
      %s266 = sphi 0, %s252
      %s270 = sphi 0, %s270
      %s272 = sphi 0, %s270
      %s273 = sphi 0, %s272
      %s287 = sphi 0, %s273
      %s293 = sphi 0, %s295
      %s296 = sphi 0, %s293
      %s297 = sphi 0, %s296
      %s313 = sphi 0, %s297
    $region4: #{billnet_forward.1} parent=1 // loop_header_branch
      %29 = sbr.rel (%p27) target = $region8
    $region5: #{billnet_forward.1} parent=1 // loop_body
      %s31 = ssub.s32 %s26, 1
      %s32 = ssub.s32 %s26, 2
      %s33 = sadd.s32 %s26, 1
      %s34 = ssub.s32 %s26, %s33
      %p35 = scmp.eq.s32.totalorder %s34, 0
      %s37 = sadd.s32 %s36, 1
      %s38 = scalar_select %p35, %s36, %s37
      %p41 = pneg %p35
      %p42 = scmp.eq.s32.totalorder %s26, 1
      %p43 = por %p41, %p42
      %p44 = scmp.ne.s32.totalorder %s36, %s39
      %p45 = scmp.eq.s32.totalorder %s26, 0
      %p46 = por %p44, %p45
      %p47 = scmp.ne.s32.totalorder %s36, %s39
      %p48 = scmp.eq.s32.totalorder %s31, 1
      %p49 = por %p47, %p48
      %p50 = scmp.ne.s32.totalorder %s39, %s40
      %p51 = scmp.eq.s32.totalorder %s31, 0
      %p52 = por %p50, %p51
      %p53 = scmp.ne.s32.totalorder %s39, %s40
      %p54 = scmp.eq.s32.totalorder %s32, 1
      %p55 = por %p53, %p54
      %p57 = scmp.ne.s32.totalorder %s40, %s56
      %p58 = scmp.eq.s32.totalorder %s32, 0
      %p59 = por %p57, %p58
      %s61 = sadd.s32 %s60, 1
      %p64 = scmp.eq.s32.totalorder %s26, 1
      %p65 = scmp.ne.s32.totalorder %s60, %s62
      %p66 = scmp.eq.s32.totalorder %s26, 0
      %p67 = por %p65, %p66
      %p68 = scmp.ne.s32.totalorder %s60, %s62
      %p69 = scmp.eq.s32.totalorder %s31, 1
      %p70 = por %p68, %p69
      %p71 = scmp.ne.s32.totalorder %s62, %s63
      %p72 = scmp.eq.s32.totalorder %s31, 0
      %p73 = por %p71, %p72
      %p74 = scmp.ne.s32.totalorder %s62, %s63
      %p75 = scmp.eq.s32.totalorder %s32, 1
      %p76 = por %p74, %p75
      %p78 = scmp.ne.s32.totalorder %s63, %s77
      %p79 = scmp.eq.s32.totalorder %s32, 0
      %p80 = por %p78, %p79
      %s82 = sadd.s32 %s81, 1
      %p85 = scmp.eq.s32.totalorder %s26, 1
      %p86 = scmp.ne.s32.totalorder %s81, %s83
      %p87 = scmp.eq.s32.totalorder %s26, 0
      %p88 = por %p86, %p87
      %p89 = scmp.ne.s32.totalorder %s81, %s83
      %p90 = scmp.eq.s32.totalorder %s31, 1
      %p91 = por %p89, %p90
      %p92 = scmp.ne.s32.totalorder %s83, %s84
      %p93 = scmp.eq.s32.totalorder %s31, 0
      %p94 = por %p92, %p93
      %p95 = scmp.ne.s32.totalorder %s83, %s84
      %p96 = scmp.eq.s32.totalorder %s32, 1
      %p97 = por %p95, %p96
      %p99 = scmp.ne.s32.totalorder %s84, %s98
      %p100 = scmp.eq.s32.totalorder %s32, 0
      %p101 = por %p99, %p100
      %s103 = sadd.s32 %s102, 1
      %p106 = scmp.eq.s32.totalorder %s26, 1
      %p107 = scmp.ne.s32.totalorder %s102, %s104
      %p108 = scmp.eq.s32.totalorder %s26, 0
      %p109 = por %p107, %p108
      %p110 = scmp.ne.s32.totalorder %s102, %s104
      %p111 = scmp.eq.s32.totalorder %s31, 1
      %p112 = por %p110, %p111
      %p113 = scmp.ne.s32.totalorder %s104, %s105
      %p114 = scmp.eq.s32.totalorder %s31, 0
      %p115 = por %p113, %p114
      %p116 = scmp.ne.s32.totalorder %s104, %s105
      %p117 = scmp.eq.s32.totalorder %s32, 1
      %p118 = por %p116, %p117
      %p120 = scmp.ne.s32.totalorder %s105, %s119
      %p121 = scmp.eq.s32.totalorder %s32, 0
      %p122 = por %p120, %p121
      %s124 = sadd.s32 %s123, 1
      %p127 = scmp.eq.s32.totalorder %s26, 1
      %p128 = scmp.ne.s32.totalorder %s123, %s125
      %p129 = scmp.eq.s32.totalorder %s26, 0
      %p130 = por %p128, %p129
      %p131 = scmp.ne.s32.totalorder %s123, %s125
      %p132 = scmp.eq.s32.totalorder %s31, 1
      %p133 = por %p131, %p132
      %p134 = scmp.ne.s32.totalorder %s125, %s126
      %p135 = scmp.eq.s32.totalorder %s31, 0
      %p136 = por %p134, %p135
      %p137 = scmp.ne.s32.totalorder %s125, %s126
      %p138 = scmp.eq.s32.totalorder %s32, 1
      %p139 = por %p137, %p138
      %p141 = scmp.ne.s32.totalorder %s126, %s140
      %p142 = scmp.eq.s32.totalorder %s32, 0
      %p143 = por %p141, %p142
      %s145 = sadd.s32 %s144, 1
      %p148 = scmp.eq.s32.totalorder %s26, 1
      %p149 = scmp.ne.s32.totalorder %s144, %s146
      %p150 = scmp.eq.s32.totalorder %s26, 0
      %p151 = por %p149, %p150
      %p152 = scmp.ne.s32.totalorder %s144, %s146
      %p153 = scmp.eq.s32.totalorder %s31, 1
      %p154 = por %p152, %p153
      %p155 = scmp.ne.s32.totalorder %s146, %s147
      %p156 = scmp.eq.s32.totalorder %s31, 0
      %p157 = por %p155, %p156
      %p158 = scmp.ne.s32.totalorder %s146, %s147
      %p159 = scmp.eq.s32.totalorder %s32, 1
      %p160 = por %p158, %p159
      %p162 = scmp.ne.s32.totalorder %s147, %s161
      %p163 = scmp.eq.s32.totalorder %s32, 0
      %p164 = por %p162, %p163
      %s166 = sadd.s32 %s165, 1
      %p169 = scmp.eq.s32.totalorder %s26, 1
      %p170 = scmp.ne.s32.totalorder %s165, %s167
      %p171 = scmp.eq.s32.totalorder %s26, 0
      %p172 = por %p170, %p171
      %p173 = scmp.ne.s32.totalorder %s165, %s167
      %p174 = scmp.eq.s32.totalorder %s31, 1
      %p175 = por %p173, %p174
      %p176 = scmp.ne.s32.totalorder %s167, %s168
      %p177 = scmp.eq.s32.totalorder %s31, 0
      %p178 = por %p176, %p177
      %p179 = scmp.ne.s32.totalorder %s167, %s168
      %p180 = scmp.eq.s32.totalorder %s32, 1
      %p181 = por %p179, %p180
      %p183 = scmp.ne.s32.totalorder %s168, %s182
      %p184 = scmp.eq.s32.totalorder %s32, 0
      %p185 = por %p183, %p184
      %s187 = sadd.s32 %s186, 1
      %p190 = scmp.eq.s32.totalorder %s26, 1
      %p191 = scmp.ne.s32.totalorder %s186, %s188
      %p192 = scmp.eq.s32.totalorder %s26, 0
      %p193 = por %p191, %p192
      %p194 = scmp.ne.s32.totalorder %s186, %s188
      %p195 = scmp.eq.s32.totalorder %s31, 1
      %p196 = por %p194, %p195
      %p197 = scmp.ne.s32.totalorder %s188, %s189
      %p198 = scmp.eq.s32.totalorder %s31, 0
      %p199 = por %p197, %p198
      %p200 = scmp.ne.s32.totalorder %s188, %s189
      %p201 = scmp.eq.s32.totalorder %s32, 1
      %p202 = por %p200, %p201
      %p204 = scmp.ne.s32.totalorder %s189, %s203
      %p205 = scmp.eq.s32.totalorder %s32, 0
      %p206 = por %p204, %p205
      %s208 = sadd.s32 %s207, 1
      %p211 = scmp.eq.s32.totalorder %s26, 1
      %p212 = scmp.ne.s32.totalorder %s207, %s209
      %p213 = scmp.eq.s32.totalorder %s26, 0
      %p214 = por %p212, %p213
      %p215 = scmp.ne.s32.totalorder %s207, %s209
      %p216 = scmp.eq.s32.totalorder %s31, 1
      %p217 = por %p215, %p216
      %p218 = scmp.ne.s32.totalorder %s209, %s210
      %p219 = scmp.eq.s32.totalorder %s31, 0
      %p220 = por %p218, %p219
      %p221 = scmp.ne.s32.totalorder %s209, %s210
      %p222 = scmp.eq.s32.totalorder %s32, 1
      %p223 = por %p221, %p222
      %p225 = scmp.ne.s32.totalorder %s210, %s224
      %p226 = scmp.eq.s32.totalorder %s32, 0
      %p227 = por %p225, %p226
      %s229 = sadd.s32 %s228, 1
      %p232 = scmp.eq.s32.totalorder %s26, 1
      %p233 = scmp.ne.s32.totalorder %s228, %s230
      %p234 = scmp.eq.s32.totalorder %s26, 0
      %p235 = por %p233, %p234
      %p236 = scmp.ne.s32.totalorder %s228, %s230
      %p237 = scmp.eq.s32.totalorder %s31, 1
      %p238 = por %p236, %p237
      %p239 = scmp.ne.s32.totalorder %s230, %s231
      %p240 = scmp.eq.s32.totalorder %s31, 0
      %p241 = por %p239, %p240
      %p242 = scmp.ne.s32.totalorder %s230, %s231
      %p243 = scmp.eq.s32.totalorder %s32, 1
      %p244 = por %p242, %p243
      %p246 = scmp.ne.s32.totalorder %s231, %s245
      %p247 = scmp.eq.s32.totalorder %s32, 0
      %p248 = por %p246, %p247
      %s250 = sadd.s32 %s249, 1
      %p253 = scmp.eq.s32.totalorder %s26, 1
      %p254 = scmp.ne.s32.totalorder %s249, %s251
      %p255 = scmp.eq.s32.totalorder %s26, 0
      %p256 = por %p254, %p255
      %p257 = scmp.ne.s32.totalorder %s249, %s251
      %p258 = scmp.eq.s32.totalorder %s31, 1
      %p259 = por %p257, %p258
      %p260 = scmp.ne.s32.totalorder %s251, %s252
      %p261 = scmp.eq.s32.totalorder %s31, 0
      %p262 = por %p260, %p261
      %p263 = scmp.ne.s32.totalorder %s251, %s252
      %p264 = scmp.eq.s32.totalorder %s32, 1
      %p265 = por %p263, %p264
      %p267 = scmp.ne.s32.totalorder %s252, %s266
      %p268 = scmp.eq.s32.totalorder %s32, 0
      %p269 = por %p267, %p268
      %s271 = sadd.s32 %s270, 1
      %p274 = scmp.eq.s32.totalorder %s26, 1
      %p275 = scmp.ne.s32.totalorder %s270, %s272
      %p276 = scmp.eq.s32.totalorder %s26, 0
      %p277 = por %p275, %p276
      %p278 = scmp.ne.s32.totalorder %s270, %s272
      %p279 = scmp.eq.s32.totalorder %s31, 1
      %p280 = por %p278, %p279
      %p281 = scmp.ne.s32.totalorder %s272, %s273
      %p282 = scmp.eq.s32.totalorder %s31, 0
      %p283 = por %p281, %p282
      %p284 = scmp.ne.s32.totalorder %s272, %s273
      %p285 = scmp.eq.s32.totalorder %s32, 1
      %p286 = por %p284, %p285
      %p288 = scmp.ne.s32.totalorder %s273, %s287
      %p289 = scmp.eq.s32.totalorder %s32, 0
      %p290 = por %p288, %p289
      %s291 = ssub.s32 %s26, %s33
      %p292 = scmp.eq.s32.totalorder %s291, 0
      %s294 = sadd.s32 %s293, 1
      %s295 = scalar_select %p292, %s293, %s294
      %p298 = pneg %p292
      %p299 = scmp.eq.s32.totalorder %s26, 1
      %p300 = por %p298, %p299
      %p301 = scmp.ne.s32.totalorder %s293, %s296
      %p302 = scmp.eq.s32.totalorder %s26, 0
      %p303 = por %p301, %p302
      %p304 = scmp.ne.s32.totalorder %s293, %s296
      %p305 = scmp.eq.s32.totalorder %s31, 1
      %p306 = por %p304, %p305
      %p307 = scmp.ne.s32.totalorder %s296, %s297
      %p308 = scmp.eq.s32.totalorder %s31, 0
      %p309 = por %p307, %p308
      %p310 = scmp.ne.s32.totalorder %s296, %s297
      %p311 = scmp.eq.s32.totalorder %s32, 1
      %p312 = por %p310, %p311
      %p314 = scmp.ne.s32.totalorder %s297, %s313
      %p315 = scmp.eq.s32.totalorder %s32, 0
      %p316 = por %p314, %p315
      %p317 = scmp.le.s32.totalorder 1, %s26
      %p318 = scmp.lt.s32.totalorder %s26, 3
      %p319 = pnand %p317, %p318
      %p320 = pneg %p319
      // Predicated region
      $region9: #{billnet_forward.1} parent=5 // pred_check
        _
      $region10: #{billnet_forward.1} parent=5 // pred_check_branch
        %322 = sbr.rel (%p319) target = $region12
      $region11: #{billnet_forward.1} parent=5 // pred_region
        %s323 = ssub.s32 %s26, 1
        // Predicated region
        $region13: #{billnet_forward.1} parent=11 // pred_check
          %p324 = pneg %p73
        $region14: #{billnet_forward.1} parent=11 // pred_check_branch
          %326 = sbr.rel (%p324) target = $region16
        $region15: #{billnet_forward.1} parent=11 // pred_region
          %s328 = ssub.s32 9600, 9600
          %329 = vsyncadd [#allocation6], %s328
          %s330 = sshll.u32 [#allocation5], 4
          %s331 = int_to_ptr.vmem [resolvable:$true] %s330
          %336 = dma.hbm_to_vmem [thread:$0]  %s1, 9600, %s331, [#allocation6], 384, 384, 24
        $region16: #{billnet_forward.1} parent=11 // pred_fallthru
          _
        // Predicated region
        $region17: #{billnet_forward.1} parent=11 // pred_check
          %p337 = pneg %p94
        $region18: #{billnet_forward.1} parent=11 // pred_check_branch
          %339 = sbr.rel (%p337) target = $region20
        $region19: #{billnet_forward.1} parent=11 // pred_region
          _
        $region20: #{billnet_forward.1} parent=11 // pred_fallthru
          _
        // Predicated region
        $region21: #{billnet_forward.1} parent=11 // pred_check
          %p340 = pneg %p115
        $region22: #{billnet_forward.1} parent=11 // pred_check_branch
          %342 = sbr.rel (%p340) target = $region24
        $region23: #{billnet_forward.1} parent=11 // pred_region
          _
        $region24: #{billnet_forward.1} parent=11 // pred_fallthru
          _
        // Predicated region
        $region25: #{billnet_forward.1} parent=11 // pred_check
          %p343 = pneg %p136
        $region26: #{billnet_forward.1} parent=11 // pred_check_branch
          %345 = sbr.rel (%p343) target = $region28
        $region27: #{billnet_forward.1} parent=11 // pred_region
          %s347 = ssub.s32 5248, 5248
          %348 = vsyncadd [#allocation6], %s347
          %s349 = sshll.u32 [#allocation7], 4
          %s350 = int_to_ptr.vmem [resolvable:$true] %s349
          %355 = dma.hbm_to_vmem [thread:$0]  %s4, 5248, %s350, [#allocation6], 128, 128, 8
        $region28: #{billnet_forward.1} parent=11 // pred_fallthru
          _
        // Predicated region
        $region29: #{billnet_forward.1} parent=11 // pred_check
          %p356 = pneg %p157
        $region30: #{billnet_forward.1} parent=11 // pred_check_branch
          %358 = sbr.rel (%p356) target = $region32
        $region31: #{billnet_forward.1} parent=11 // pred_region
          %s360 = ssub.s32 7168, 7168
          %361 = vsyncadd [#allocation9], %s360
          %s362 = sshll.u32 [#allocation8], 4
          %s363 = int_to_ptr.vmem [resolvable:$true] %s362
          %368 = dma.hbm_to_vmem [thread:$0]  %s5, 7168, %s363, [#allocation9], 128, 128, 8
        $region32: #{billnet_forward.1} parent=11 // pred_fallthru
          _
        // Predicated region
        $region33: #{billnet_forward.1} parent=11 // pred_check
          %p369 = pneg %p178
        $region34: #{billnet_forward.1} parent=11 // pred_check_branch
          %371 = sbr.rel (%p369) target = $region36
        $region35: #{billnet_forward.1} parent=11 // pred_region
          _
        $region36: #{billnet_forward.1} parent=11 // pred_fallthru
          _
        // Predicated region
        $region37: #{billnet_forward.1} parent=11 // pred_check
          %p372 = pneg %p199
        $region38: #{billnet_forward.1} parent=11 // pred_check_branch
          %374 = sbr.rel (%p372) target = $region40
        $region39: #{billnet_forward.1} parent=11 // pred_region
          _
        $region40: #{billnet_forward.1} parent=11 // pred_fallthru
          _
        // Predicated region
        $region41: #{billnet_forward.1} parent=11 // pred_check
          %p375 = pneg %p220
        $region42: #{billnet_forward.1} parent=11 // pred_check_branch
          %377 = sbr.rel (%p375) target = $region44
        $region43: #{billnet_forward.1} parent=11 // pred_region
          %s379 = ssub.s32 1920, 1920
          %380 = vsyncadd [#allocation9], %s379
          %s381 = sshll.u32 [#allocation10], 4
          %s382 = int_to_ptr.vmem [resolvable:$true] %s381
          %387 = dma.hbm_to_vmem [thread:$0]  %s8, 1920, %s382, [#allocation9], 128, 128, 8
        $region44: #{billnet_forward.1} parent=11 // pred_fallthru
          _
        // Predicated region
        $region45: #{billnet_forward.1} parent=11 // pred_check
          %p388 = pneg %p241
        $region46: #{billnet_forward.1} parent=11 // pred_check_branch
          %390 = sbr.rel (%p388) target = $region48
        $region47: #{billnet_forward.1} parent=11 // pred_region
          _
        $region48: #{billnet_forward.1} parent=11 // pred_fallthru
          _
        // Predicated region
        $region49: #{billnet_forward.1} parent=11 // pred_check
          %p391 = pneg %p262
        $region50: #{billnet_forward.1} parent=11 // pred_check_branch
          %393 = sbr.rel (%p391) target = $region52
        $region51: #{billnet_forward.1} parent=11 // pred_region
          _
        $region52: #{billnet_forward.1} parent=11 // pred_fallthru
          _
        // Predicated region
        $region53: #{billnet_forward.1} parent=11 // pred_check
          %p394 = pneg %p283
        $region54: #{billnet_forward.1} parent=11 // pred_check_branch
          %396 = sbr.rel (%p394) target = $region56
        $region55: #{billnet_forward.1} parent=11 // pred_region
          _
        $region56: #{billnet_forward.1} parent=11 // pred_fallthru
          _
      $region12: #{billnet_forward.1} parent=5 // pred_fallthru
        _
      %p397 = scmp.lt.s32.totalorder %s26, 2
      // Predicated region
      $region57: #{billnet_forward.1} parent=5 // pred_check
        %p398 = pneg %p397
      $region58: #{billnet_forward.1} parent=5 // pred_check_branch
        %400 = sbr.rel (%p398) target = $region60
      $region59: #{billnet_forward.1} parent=5 // pred_region
        // Predicated region
        $region61: #{billnet_forward.1} parent=59 // pred_check
          %p401 = pneg %p46
        $region62: #{billnet_forward.1} parent=59 // pred_check_branch
          %403 = sbr.rel (%p401) target = $region64
        $region63: #{billnet_forward.1} parent=59 // pred_region
          %s404 = sand.u32 %s36, 1
          %s405 = scalar_lea.sflag [#allocation3], %s404
          %s406 = sand.u32 %s36, 1
          %s407 = smul.addr %s406, 40
          %s408 = scalar_lea.vmem [#allocation2], %s407
          %s410 = ssub.s32 640, 640
          %411 = vsyncadd %s405, %s410
          %s412 = smul.addr %s26, 5
          %s413 = smul.addr %s412, 128
          %s414 = scalar_lea.hbm %s0, %s413
          %s415 = sshll.u32 %s408, 4
          %s416 = int_to_ptr.vmem [resolvable:$true] %s415
          %421 = dma.hbm_to_vmem [thread:$0]  %s414, 640, %s416, %s405, 128, 128, 8
        $region64: #{billnet_forward.1} parent=59 // pred_fallthru
          _
      $region60: #{billnet_forward.1} parent=5 // pred_fallthru
        _
      %p422 = scmp.le.s32.totalorder 1, %s26
      %p423 = scmp.lt.s32.totalorder %s26, 3
      %p424 = pnand %p422, %p423
      %p425 = pneg %p424
      // Predicated region
      $region65: #{billnet_forward.1} parent=5 // pred_check
        _
      $region66: #{billnet_forward.1} parent=5 // pred_check_branch
        %427 = sbr.rel (%p424) target = $region68
      $region67: #{billnet_forward.1} parent=5 // pred_region
        %s428 = ssub.s32 %s26, 1
        %s429 = sand.u32 %s39, 1
        %s430 = scalar_lea.sflag [#allocation3], %s429
        %s431 = sand.u32 %s39, 1
        %s432 = smul.addr %s431, 40
        %s433 = scalar_lea.vmem [#allocation2], %s432
        // Predicated region
        $region69: #{billnet_forward.1} parent=67 // pred_check
          %p434 = pneg %p52
        $region70: #{billnet_forward.1} parent=67 // pred_check_branch
          %436 = sbr.rel (%p434) target = $region72
        $region71: #{billnet_forward.1} parent=67 // pred_region
          %437 = dma.done %s430, 640
        $region72: #{billnet_forward.1} parent=67 // pred_fallthru
          _
        // Predicated region
        $region73: #{billnet_forward.1} parent=67 // pred_check
          %p438 = pneg %p73
        $region74: #{billnet_forward.1} parent=67 // pred_check_branch
          %440 = sbr.rel (%p438) target = $region76
        $region75: #{billnet_forward.1} parent=67 // pred_region
          %441 = dma.done [#allocation6], 9600
        $region76: #{billnet_forward.1} parent=67 // pred_fallthru
          _
        // Predicated region
        $region77: #{billnet_forward.1} parent=67 // pred_check
          %p442 = pneg %p136
        $region78: #{billnet_forward.1} parent=67 // pred_check_branch
          %444 = sbr.rel (%p442) target = $region80
        $region79: #{billnet_forward.1} parent=67 // pred_region
          %445 = dma.done [#allocation6], 5248
        $region80: #{billnet_forward.1} parent=67 // pred_fallthru
          _
        // Predicated region
        $region81: #{billnet_forward.1} parent=67 // pred_check
          %p446 = pneg %p157
        $region82: #{billnet_forward.1} parent=67 // pred_check_branch
          %448 = sbr.rel (%p446) target = $region84
        $region83: #{billnet_forward.1} parent=67 // pred_region
          %449 = dma.done [#allocation9], 7168
        $region84: #{billnet_forward.1} parent=67 // pred_fallthru
          _
        // Predicated region
        $region85: #{billnet_forward.1} parent=67 // pred_check
          %p450 = pneg %p220
        $region86: #{billnet_forward.1} parent=67 // pred_check_branch
          %452 = sbr.rel (%p450) target = $region88
        $region87: #{billnet_forward.1} parent=67 // pred_region
          %453 = dma.done [#allocation9], 1920
        $region88: #{billnet_forward.1} parent=67 // pred_fallthru
          _
        %s454 = sand.u32 %s39, 1
        %s455 = scalar_lea.sflag [#allocation3], %s454
        %s456 = sand.u32 %s39, 1
        %s457 = smul.addr %s456, 40
        %s458 = scalar_lea.vmem [#allocation2], %s457
        %p459 = pneg %p52
        %p460 = pneg %p49
        %p461 = pneg %p73
        %p462 = pneg %p70
        %p463 = pneg %p94
        %p464 = pneg %p91
        %p465 = pneg %p115
        %p466 = pneg %p112
        %p467 = pneg %p136
        %p468 = pneg %p133
        %p469 = pneg %p157
        %p470 = pneg %p154
        %p471 = pneg %p178
        %p472 = pneg %p175
        %p473 = pneg %p199
        %p474 = pneg %p196
        %p475 = pneg %p220
        %p476 = pneg %p217
        %p477 = pneg %p241
        %p478 = pneg %p238
        %p479 = pneg %p262
        %p480 = pneg %p259
        %p481 = pneg %p283
        %p482 = pneg %p280
        %p483 = pneg %p309
        %p484 = pneg %p306
        %s485 = sand.u32 %s296, 1
        %s486 = scalar_lea.sflag [#allocation4], %s485
        %s487 = sand.u32 %s296, 1
        %s488 = scalar_lea.vmem [#allocation11], %s487
        %v489 = vld [vmem:[%s433] sm:$0xff]
        %v490 = vld [vmem:[%s433 + $0x8] sm:$0xff]
        %v491 = vld [vmem:[%s433 + $0x10] sm:$0xff]
        %v492 = vld [vmem:[%s433 + $0x18] sm:$0xff]
        %v493 = vld [vmem:[%s433 + $0x20] sm:$0xf]
        %v494 = vld [vmem:[#allocation5] sm:$0xff]
        %v495 = vld [vmem:[#allocation5 + $0x8] sm:$0xff]
        %v496 = vld [vmem:[#allocation5 + $0x10] sm:$0xff]
        %v497 = vld [vmem:[#allocation5 + $0x18] sm:$0xff]
        %v498 = vld [vmem:[#allocation5 + $0x20] sm:$0xff]
        %v499 = vld [vmem:[#allocation5 + $0x28] sm:$0xff]
        %v500 = vld [vmem:[#allocation5 + $0x30] sm:$0xff]
        %v501 = vld [vmem:[#allocation5 + $0x38] sm:$0xff]
        %v502 = vld [vmem:[#allocation5 + $0x40] sm:$0xff]
        %v503 = vld [vmem:[#allocation5 + $0x48] sm:$0xff]
        %v504 = vld [vmem:[#allocation5 + $0x50] sm:$0xff]
        %v505 = vld [vmem:[#allocation5 + $0x58] sm:$0xff]
        %v506 = vld [vmem:[#allocation5 + $0x60] sm:$0xff]
        %v507 = vld [vmem:[#allocation5 + $0x68] sm:$0xff]
        %v508 = vld [vmem:[#allocation5 + $0x70] sm:$0xff]
        %v509 = vld [vmem:[%s433 + $0x1] sm:$0xff]
        %v510 = vld [vmem:[%s433 + $0x9] sm:$0xff]
        %v511 = vld [vmem:[%s433 + $0x11] sm:$0xff]
        %v512 = vld [vmem:[%s433 + $0x19] sm:$0xff]
        %v513 = vld [vmem:[%s433 + $0x21] sm:$0xf]
        %s514 = scalar_lea.vmem [#allocation5], 120
        %v515 = vld [vmem:[%s514] sm:$0xff]
        %v516 = vld [vmem:[%s514 + $0x8] sm:$0xff]
        %v517 = vld [vmem:[%s514 + $0x10] sm:$0xff]
        %v518 = vld [vmem:[%s514 + $0x18] sm:$0xff]
        %v519 = vld [vmem:[%s514 + $0x20] sm:$0xff]
        %v520 = vld [vmem:[%s514 + $0x28] sm:$0xff]
        %v521 = vld [vmem:[%s514 + $0x30] sm:$0xff]
        %v522 = vld [vmem:[%s514 + $0x38] sm:$0xff]
        %v523 = vld [vmem:[%s514 + $0x40] sm:$0xff]
        %v524 = vld [vmem:[%s514 + $0x48] sm:$0xff]
        %v525 = vld [vmem:[%s514 + $0x50] sm:$0xff]
        %v526 = vld [vmem:[%s514 + $0x58] sm:$0xff]
        %v527 = vld [vmem:[%s514 + $0x60] sm:$0xff]
        %v528 = vld [vmem:[%s514 + $0x68] sm:$0xff]
        %v529 = vld [vmem:[%s514 + $0x70] sm:$0xff]
        %vm530 = vcmask 326656
        %v532 = vsel %vm530, %v509, 0
        %v535 = vsel %vm530, %v510, 0
        %v538 = vsel %vm530, %v511, 0
        %v541 = vsel %vm530, %v512, 0
        %v544 = vsel %vm530, %v513, 0
        %546 = vmatprep.subr.mxu0 %v516
        %547 = vmatpush1.msra.mxu0 %v515
        %548 = vmatprep.subr.mxu0 %v519
        %549 = vmatpush1.msra.mxu0 %v518
        %550 = vmatprep.subr.mxu0 %v522
        %551 = vmatpush1.msra.mxu0 %v521
        %552 = vmatprep.subr.mxu0 %v525
        %553 = vmatpush1.msra.mxu0 %v524
        %554 = vmatprep.subr.mxu0 %v528
        %555 = vmatpush1.msra.mxu0 %v527
        %556 = vmatprep.subr.mxu0 0.0
        %557 = vmatpush1.msra.mxu0 0.0
        %558 = vmatprep.subr.mxu0 0.0
        %559 = vmatpush1.msra.mxu0 0.0
        %560 = vmatprep.subr.mxu0 0.0
        %561 = vmatpush1.msra.mxu0 0.0
        %562 = vmatprep.subr.mxu0 0.0
        %563 = vmatpush1.msra.mxu0 0.0
        %564 = vmatprep.subr.mxu0 0.0
        %565 = vmatpush1.msra.mxu0 0.0
        %566 = vmatprep.subr.mxu0 0.0
        %567 = vmatpush1.msra.mxu0 0.0
        %568 = vmatprep.subr.mxu0 0.0
        %569 = vmatpush1.msra.mxu0 0.0
        %570 = vmatprep.subr.mxu0 0.0
        %571 = vmatpush1.msra.mxu0 0.0
        %572 = vmatprep.subr.mxu0 0.0
        %573 = vmatpush1.msra.mxu0 0.0
        %574 = vmatprep.subr.mxu0 0.0
        %575 = vmatpush1.msra.mxu0 0.0
        %576 = vmatprep.subr.mxu0 0.0
        %577 = vmatpush1.msra.mxu0 0.0
        %578 = vmatprep.subr.mxu0 0.0
        %579 = vmatpush1.msra.mxu0 0.0
        %580 = vmatprep.subr.mxu0 0.0
        %581 = vmatpush1.msra.mxu0 0.0
        %582 = vmatprep.subr.mxu0 0.0
        %583 = vmatpush1.msra.mxu0 0.0
        %584 = vmatprep.subr.mxu0 0.0
        %585 = vmatpush1.msra.mxu0 0.0
        %586 = vmatprep.subr.mxu0 0.0
        %587 = vmatpush1.msra.mxu0 0.0
        %588 = vmatprep.subr.mxu0 0.0
        %589 = vmatpush1.msra.mxu0 0.0
        %590 = vmatprep.subr.mxu0 0.0
        %591 = vmatpush1.msra.mxu0 0.0
        %592 = vmatprep.subr.mxu0 0.0
        %593 = vmatpush1.msra.mxu0 0.0
        %594 = vmatprep.subr.mxu0 0.0
        %595 = vmatpush1.msra.mxu0 0.0
        %596 = vmatprep.subr.mxu0 0.0
        %597 = vmatpush1.msra.mxu0 0.0
        %598 = vmatprep.subr.mxu0 0.0
        %599 = vmatpush1.msra.mxu0 0.0
        %600 = vmatprep.subr.mxu0 0.0
        %601 = vmatpush1.msra.mxu0 0.0
        %602 = vmatprep.subr.mxu0 0.0
        %603 = vmatpush1.msra.mxu0 0.0
        %604 = vmatprep.subr.mxu0 0.0
        %605 = vmatpush1.msra.mxu0 0.0
        %606 = vmatprep.subr.mxu0 0.0
        %607 = vmatpush1.msra.mxu0 0.0
        %608 = vmatprep.subr.mxu0 0.0
        %609 = vmatpush1.msra.mxu0 0.0
        %610 = vmatprep.mubr.f32.mxu0 0.0
        %611 = vmatmul.mubr.f32.gmra.mrb[0].mxu0 %v532
        %v612 = vpop.f32.mrb[0].mxu0
        %v613 = vadd.f32 0.0, %v612
        %v614 = vpop.f32.mrb[0].mxu0
        %v615 = vadd.f32 0.0, %v614
        %616 = vmatprep.mubr.f32.mxu0 0.0
        %617 = vmatmul.mubr.f32.gmra.mrb[0].mxu0 %v535
        %v618 = vpop.f32.mrb[0].mxu0
        %v619 = vadd.f32 0.0, %v618
        %v620 = vpop.f32.mrb[0].mxu0
        %v621 = vadd.f32 0.0, %v620
        %622 = vmatprep.mubr.f32.mxu0 0.0
        %623 = vmatmul.mubr.f32.gmra.mrb[0].mxu0 %v538
        %v624 = vpop.f32.mrb[0].mxu0
        %v625 = vadd.f32 0.0, %v624
        %v626 = vpop.f32.mrb[0].mxu0
        %v627 = vadd.f32 0.0, %v626
        %628 = vmatprep.mubr.f32.mxu0 0.0
        %629 = vmatmul.mubr.f32.gmra.mrb[0].mxu0 %v541
        %v630 = vpop.f32.mrb[0].mxu0
        %v631 = vadd.f32 0.0, %v630
        %v632 = vpop.f32.mrb[0].mxu0
        %v633 = vadd.f32 0.0, %v632
        %634 = vmatprep.mubr.f32.mxu0 0.0
        %635 = vmatmul.mubr.f32.gmra.mrb[0].mxu0 %v544
        %v636 = vpop.f32.mrb[0].mxu0
        %v637 = vadd.f32 0.0, %v636
        %v638 = vpop.f32.mrb[0].mxu0
        %v639 = vadd.f32 0.0, %v638
        %640 = vdwg.mxu0
        %641 = vmatprep.subr.mxu0 0.0
        %642 = vmatpush1.msra.mxu0 %v517
        %643 = vmatprep.subr.mxu0 0.0
        %644 = vmatpush1.msra.mxu0 %v520
        %645 = vmatprep.subr.mxu0 0.0
        %646 = vmatpush1.msra.mxu0 %v523
        %647 = vmatprep.subr.mxu0 0.0
        %648 = vmatpush1.msra.mxu0 %v526
        %649 = vmatprep.subr.mxu0 0.0
        %650 = vmatpush1.msra.mxu0 %v529
        %651 = vmatprep.subr.mxu0 0.0
        %652 = vmatpush1.msra.mxu0 0.0
        %653 = vmatprep.subr.mxu0 0.0
        %654 = vmatpush1.msra.mxu0 0.0
        %655 = vmatprep.subr.mxu0 0.0
        %656 = vmatpush1.msra.mxu0 0.0
        %657 = vmatprep.subr.mxu0 0.0
        %658 = vmatpush1.msra.mxu0 0.0
        %659 = vmatprep.subr.mxu0 0.0
        %660 = vmatpush1.msra.mxu0 0.0
        %661 = vmatprep.subr.mxu0 0.0
        %662 = vmatpush1.msra.mxu0 0.0
        %663 = vmatprep.subr.mxu0 0.0
        %664 = vmatpush1.msra.mxu0 0.0
        %665 = vmatprep.subr.mxu0 0.0
        %666 = vmatpush1.msra.mxu0 0.0
        %667 = vmatprep.subr.mxu0 0.0
        %668 = vmatpush1.msra.mxu0 0.0
        %669 = vmatprep.subr.mxu0 0.0
        %670 = vmatpush1.msra.mxu0 0.0
        %671 = vmatprep.subr.mxu0 0.0
        %672 = vmatpush1.msra.mxu0 0.0
        %673 = vmatprep.subr.mxu0 0.0
        %674 = vmatpush1.msra.mxu0 0.0
        %675 = vmatprep.subr.mxu0 0.0
        %676 = vmatpush1.msra.mxu0 0.0
        %677 = vmatprep.subr.mxu0 0.0
        %678 = vmatpush1.msra.mxu0 0.0
        %679 = vmatprep.subr.mxu0 0.0
        %680 = vmatpush1.msra.mxu0 0.0
        %681 = vmatprep.subr.mxu0 0.0
        %682 = vmatpush1.msra.mxu0 0.0
        %683 = vmatprep.subr.mxu0 0.0
        %684 = vmatpush1.msra.mxu0 0.0
        %685 = vmatprep.subr.mxu0 0.0
        %686 = vmatpush1.msra.mxu0 0.0
        %687 = vmatprep.subr.mxu0 0.0
        %688 = vmatpush1.msra.mxu0 0.0
        %689 = vmatprep.subr.mxu0 0.0
        %690 = vmatpush1.msra.mxu0 0.0
        %691 = vmatprep.subr.mxu0 0.0
        %692 = vmatpush1.msra.mxu0 0.0
        %693 = vmatprep.subr.mxu0 0.0
        %694 = vmatpush1.msra.mxu0 0.0
        %695 = vmatprep.subr.mxu0 0.0
        %696 = vmatpush1.msra.mxu0 0.0
        %697 = vmatprep.subr.mxu0 0.0
        %698 = vmatpush1.msra.mxu0 0.0
        %699 = vmatprep.subr.mxu0 0.0
        %700 = vmatpush1.msra.mxu0 0.0
        %701 = vmatprep.subr.mxu0 0.0
        %702 = vmatpush1.msra.mxu0 0.0
        %703 = vmatprep.subr.mxu0 0.0
        %704 = vmatpush1.msra.mxu0 0.0
        %705 = vmatprep.mubr.f32.mxu0 0.0
        %706 = vmatmul.mubr.f32.gmra.mrb[0].mxu0 %v532
        %v707 = vpop.f32.mrb[0].mxu0
        %v708 = vadd.f32 0.0, %v707
        %v709 = vpop.f32.mrb[0].mxu0
        %710 = vmatprep.mubr.f32.mxu0 0.0
        %711 = vmatmul.mubr.f32.gmra.mrb[0].mxu0 %v535
        %v712 = vpop.f32.mrb[0].mxu0
        %v713 = vadd.f32 0.0, %v712
        %v714 = vpop.f32.mrb[0].mxu0
        %715 = vmatprep.mubr.f32.mxu0 0.0
        %716 = vmatmul.mubr.f32.gmra.mrb[0].mxu0 %v538
        %v717 = vpop.f32.mrb[0].mxu0
        %v718 = vadd.f32 0.0, %v717
        %v719 = vpop.f32.mrb[0].mxu0
        %720 = vmatprep.mubr.f32.mxu0 0.0
        %721 = vmatmul.mubr.f32.gmra.mrb[0].mxu0 %v541
        %v722 = vpop.f32.mrb[0].mxu0
        %v723 = vadd.f32 0.0, %v722
        %v724 = vpop.f32.mrb[0].mxu0
        %725 = vmatprep.mubr.f32.mxu0 0.0
        %726 = vmatmul.mubr.f32.gmra.mrb[0].mxu0 %v544
        %v727 = vpop.f32.mrb[0].mxu0
        %v728 = vadd.f32 0.0, %v727
        %v729 = vpop.f32.mrb[0].mxu0
        %730 = vdwg.mxu0
        %v732 = vsel %vm530, %v489, 0
        %v735 = vsel %vm530, %v490, 0
        %v738 = vsel %vm530, %v491, 0
        %v741 = vsel %vm530, %v492, 0
        %v744 = vsel %vm530, %v493, 0
        %746 = vmatprep.subr.mxu0 %v495
        %747 = vmatpush1.msra.mxu0 %v494
        %748 = vmatprep.subr.mxu0 %v498
        %749 = vmatpush1.msra.mxu0 %v497
        %750 = vmatprep.subr.mxu0 %v501
        %751 = vmatpush1.msra.mxu0 %v500
        %752 = vmatprep.subr.mxu0 %v504
        %753 = vmatpush1.msra.mxu0 %v503
        %754 = vmatprep.subr.mxu0 %v507
        %755 = vmatpush1.msra.mxu0 %v506
        %756 = vmatprep.subr.mxu0 0.0
        %757 = vmatpush1.msra.mxu0 0.0
        %758 = vmatprep.subr.mxu0 0.0
        %759 = vmatpush1.msra.mxu0 0.0
        %760 = vmatprep.subr.mxu0 0.0
        %761 = vmatpush1.msra.mxu0 0.0
        %762 = vmatprep.subr.mxu0 0.0
        %763 = vmatpush1.msra.mxu0 0.0
        %764 = vmatprep.subr.mxu0 0.0
        %765 = vmatpush1.msra.mxu0 0.0
        %766 = vmatprep.subr.mxu0 0.0
        %767 = vmatpush1.msra.mxu0 0.0
        %768 = vmatprep.subr.mxu0 0.0
        %769 = vmatpush1.msra.mxu0 0.0
        %770 = vmatprep.subr.mxu0 0.0
        %771 = vmatpush1.msra.mxu0 0.0
        %772 = vmatprep.subr.mxu0 0.0
        %773 = vmatpush1.msra.mxu0 0.0
        %774 = vmatprep.subr.mxu0 0.0
        %775 = vmatpush1.msra.mxu0 0.0
        %776 = vmatprep.subr.mxu0 0.0
        %777 = vmatpush1.msra.mxu0 0.0
        %778 = vmatprep.subr.mxu0 0.0
        %779 = vmatpush1.msra.mxu0 0.0
        %780 = vmatprep.subr.mxu0 0.0
        %781 = vmatpush1.msra.mxu0 0.0
        %782 = vmatprep.subr.mxu0 0.0
        %783 = vmatpush1.msra.mxu0 0.0
        %784 = vmatprep.subr.mxu0 0.0
        %785 = vmatpush1.msra.mxu0 0.0
        %786 = vmatprep.subr.mxu0 0.0
        %787 = vmatpush1.msra.mxu0 0.0
        %788 = vmatprep.subr.mxu0 0.0
        %789 = vmatpush1.msra.mxu0 0.0
        %790 = vmatprep.subr.mxu0 0.0
        %791 = vmatpush1.msra.mxu0 0.0
        %792 = vmatprep.subr.mxu0 0.0
        %793 = vmatpush1.msra.mxu0 0.0
        %794 = vmatprep.subr.mxu0 0.0
        %795 = vmatpush1.msra.mxu0 0.0
        %796 = vmatprep.subr.mxu0 0.0
        %797 = vmatpush1.msra.mxu0 0.0
        %798 = vmatprep.subr.mxu0 0.0
        %799 = vmatpush1.msra.mxu0 0.0
        %800 = vmatprep.subr.mxu0 0.0
        %801 = vmatpush1.msra.mxu0 0.0
        %802 = vmatprep.subr.mxu0 0.0
        %803 = vmatpush1.msra.mxu0 0.0
        %804 = vmatprep.subr.mxu0 0.0
        %805 = vmatpush1.msra.mxu0 0.0
        %806 = vmatprep.subr.mxu0 0.0
        %807 = vmatpush1.msra.mxu0 0.0
        %808 = vmatprep.subr.mxu0 0.0
        %809 = vmatpush1.msra.mxu0 0.0
        %810 = vmatprep.mubr.f32.mxu0 0.0
        %811 = vmatmul.mubr.f32.gmra.mrb[0].mxu0 %v732
        %v812 = vpop.f32.mrb[0].mxu0
        %v813 = vadd.f32 %v613, %v812
        %v814 = vpop.f32.mrb[0].mxu0
        %v815 = vadd.f32 %v615, %v814
        %816 = vmatprep.mubr.f32.mxu0 0.0
        %817 = vmatmul.mubr.f32.gmra.mrb[0].mxu0 %v735
        %v818 = vpop.f32.mrb[0].mxu0
        %v819 = vadd.f32 %v619, %v818
        %v820 = vpop.f32.mrb[0].mxu0
        %v821 = vadd.f32 %v621, %v820
        %822 = vmatprep.mubr.f32.mxu0 0.0
        %823 = vmatmul.mubr.f32.gmra.mrb[0].mxu0 %v738
        %v824 = vpop.f32.mrb[0].mxu0
        %v825 = vadd.f32 %v625, %v824
        %v826 = vpop.f32.mrb[0].mxu0
        %v827 = vadd.f32 %v627, %v826
        %828 = vmatprep.mubr.f32.mxu0 0.0
        %829 = vmatmul.mubr.f32.gmra.mrb[0].mxu0 %v741
        %v830 = vpop.f32.mrb[0].mxu0
        %v831 = vadd.f32 %v631, %v830
        %v832 = vpop.f32.mrb[0].mxu0
        %v833 = vadd.f32 %v633, %v832
        %834 = vmatprep.mubr.f32.mxu0 0.0
        %835 = vmatmul.mubr.f32.gmra.mrb[0].mxu0 %v744
        %v836 = vpop.f32.mrb[0].mxu0
        %v837 = vadd.f32 %v637, %v836
        %v838 = vpop.f32.mrb[0].mxu0
        %v839 = vadd.f32 %v639, %v838
        %840 = vdwg.mxu0
        %841 = vmatprep.subr.mxu0 0.0
        %842 = vmatpush1.msra.mxu0 %v496
        %843 = vmatprep.subr.mxu0 0.0
        %844 = vmatpush1.msra.mxu0 %v499
        %845 = vmatprep.subr.mxu0 0.0
        %846 = vmatpush1.msra.mxu0 %v502
        %847 = vmatprep.subr.mxu0 0.0
        %848 = vmatpush1.msra.mxu0 %v505
        %849 = vmatprep.subr.mxu0 0.0
        %850 = vmatpush1.msra.mxu0 %v508
        %851 = vmatprep.subr.mxu0 0.0
        %852 = vmatpush1.msra.mxu0 0.0
        %853 = vmatprep.subr.mxu0 0.0
        %854 = vmatpush1.msra.mxu0 0.0
        %855 = vmatprep.subr.mxu0 0.0
        %856 = vmatpush1.msra.mxu0 0.0
        %857 = vmatprep.subr.mxu0 0.0
        %858 = vmatpush1.msra.mxu0 0.0
        %859 = vmatprep.subr.mxu0 0.0
        %860 = vmatpush1.msra.mxu0 0.0
        %861 = vmatprep.subr.mxu0 0.0
        %862 = vmatpush1.msra.mxu0 0.0
        %863 = vmatprep.subr.mxu0 0.0
        %864 = vmatpush1.msra.mxu0 0.0
        %865 = vmatprep.subr.mxu0 0.0
        %866 = vmatpush1.msra.mxu0 0.0
        %867 = vmatprep.subr.mxu0 0.0
        %868 = vmatpush1.msra.mxu0 0.0
        %869 = vmatprep.subr.mxu0 0.0
        %870 = vmatpush1.msra.mxu0 0.0
        %871 = vmatprep.subr.mxu0 0.0
        %872 = vmatpush1.msra.mxu0 0.0
        %873 = vmatprep.subr.mxu0 0.0
        %874 = vmatpush1.msra.mxu0 0.0
        %875 = vmatprep.subr.mxu0 0.0
        %876 = vmatpush1.msra.mxu0 0.0
        %877 = vmatprep.subr.mxu0 0.0
        %878 = vmatpush1.msra.mxu0 0.0
        %879 = vmatprep.subr.mxu0 0.0
        %880 = vmatpush1.msra.mxu0 0.0
        %881 = vmatprep.subr.mxu0 0.0
        %882 = vmatpush1.msra.mxu0 0.0
        %883 = vmatprep.subr.mxu0 0.0
        %884 = vmatpush1.msra.mxu0 0.0
        %885 = vmatprep.subr.mxu0 0.0
        %886 = vmatpush1.msra.mxu0 0.0
        %887 = vmatprep.subr.mxu0 0.0
        %888 = vmatpush1.msra.mxu0 0.0
        %889 = vmatprep.subr.mxu0 0.0
        %890 = vmatpush1.msra.mxu0 0.0
        %891 = vmatprep.subr.mxu0 0.0
        %892 = vmatpush1.msra.mxu0 0.0
        %893 = vmatprep.subr.mxu0 0.0
        %894 = vmatpush1.msra.mxu0 0.0
        %895 = vmatprep.subr.mxu0 0.0
        %896 = vmatpush1.msra.mxu0 0.0
        %897 = vmatprep.subr.mxu0 0.0
        %898 = vmatpush1.msra.mxu0 0.0
        %899 = vmatprep.subr.mxu0 0.0
        %900 = vmatpush1.msra.mxu0 0.0
        %901 = vmatprep.subr.mxu0 0.0
        %902 = vmatpush1.msra.mxu0 0.0
        %903 = vmatprep.subr.mxu0 0.0
        %904 = vmatpush1.msra.mxu0 0.0
        %905 = vmatprep.mubr.f32.mxu0 0.0
        %906 = vmatmul.mubr.f32.gmra.mrb[0].mxu0 %v732
        %v907 = vpop.f32.mrb[0].mxu0
        %v908 = vadd.f32 %v708, %v907
        %v909 = vpop.f32.mrb[0].mxu0
        %910 = vmatprep.mubr.f32.mxu0 0.0
        %911 = vmatmul.mubr.f32.gmra.mrb[0].mxu0 %v735
        %v912 = vpop.f32.mrb[0].mxu0
        %v913 = vadd.f32 %v713, %v912
        %v914 = vpop.f32.mrb[0].mxu0
        %915 = vmatprep.mubr.f32.mxu0 0.0
        %916 = vmatmul.mubr.f32.gmra.mrb[0].mxu0 %v738
        %v917 = vpop.f32.mrb[0].mxu0
        %v918 = vadd.f32 %v718, %v917
        %v919 = vpop.f32.mrb[0].mxu0
        %920 = vmatprep.mubr.f32.mxu0 0.0
        %921 = vmatmul.mubr.f32.gmra.mrb[0].mxu0 %v741
        %v922 = vpop.f32.mrb[0].mxu0
        %v923 = vadd.f32 %v723, %v922
        %v924 = vpop.f32.mrb[0].mxu0
        %925 = vmatprep.mubr.f32.mxu0 0.0
        %926 = vmatmul.mubr.f32.gmra.mrb[0].mxu0 %v744
        %v927 = vpop.f32.mrb[0].mxu0
        %v928 = vadd.f32 %v728, %v927
        %v929 = vpop.f32.mrb[0].mxu0
        %930 = vdwg.mxu0
        %v931 = vld [vmem:[%s433 + $0x2] sm:$0xff]
        %v932 = vld [vmem:[%s433 + $0xa] sm:$0xff]
        %v933 = vld [vmem:[%s433 + $0x12] sm:$0xff]
        %v934 = vld [vmem:[%s433 + $0x1a] sm:$0xff]
        %v935 = vld [vmem:[%s433 + $0x22] sm:$0xf]
        %s936 = scalar_lea.vmem [#allocation5], 240
        %v937 = vld [vmem:[%s936] sm:$0xff]
        %v938 = vld [vmem:[%s936 + $0x8] sm:$0xff]
        %v939 = vld [vmem:[%s936 + $0x10] sm:$0xff]
        %v940 = vld [vmem:[%s936 + $0x18] sm:$0xff]
        %v941 = vld [vmem:[%s936 + $0x20] sm:$0xff]
        %v942 = vld [vmem:[%s936 + $0x28] sm:$0xff]
        %v943 = vld [vmem:[%s936 + $0x30] sm:$0xff]
        %v944 = vld [vmem:[%s936 + $0x38] sm:$0xff]
        %v945 = vld [vmem:[%s936 + $0x40] sm:$0xff]
        %v946 = vld [vmem:[%s936 + $0x48] sm:$0xff]
        %v947 = vld [vmem:[%s936 + $0x50] sm:$0xff]
        %v948 = vld [vmem:[%s936 + $0x58] sm:$0xff]
        %v949 = vld [vmem:[%s936 + $0x60] sm:$0xff]
        %v950 = vld [vmem:[%s936 + $0x68] sm:$0xff]
        %v951 = vld [vmem:[%s936 + $0x70] sm:$0xff]
        %v953 = vsel %vm530, %v931, 0
        %v956 = vsel %vm530, %v932, 0
        %v959 = vsel %vm530, %v933, 0
        %v962 = vsel %vm530, %v934, 0
        %v965 = vsel %vm530, %v935, 0
        %967 = vmatprep.subr.mxu0 %v938
        %968 = vmatpush1.msra.mxu0 %v937
        %969 = vmatprep.subr.mxu0 %v941
        %970 = vmatpush1.msra.mxu0 %v940
        %971 = vmatprep.subr.mxu0 %v944
        %972 = vmatpush1.msra.mxu0 %v943
        %973 = vmatprep.subr.mxu0 %v947
        %974 = vmatpush1.msra.mxu0 %v946
        %975 = vmatprep.subr.mxu0 %v950
        %976 = vmatpush1.msra.mxu0 %v949
        %977 = vmatprep.subr.mxu0 0.0
        %978 = vmatpush1.msra.mxu0 0.0
        %979 = vmatprep.subr.mxu0 0.0
        %980 = vmatpush1.msra.mxu0 0.0
        %981 = vmatprep.subr.mxu0 0.0
        %982 = vmatpush1.msra.mxu0 0.0
        %983 = vmatprep.subr.mxu0 0.0
        %984 = vmatpush1.msra.mxu0 0.0
        %985 = vmatprep.subr.mxu0 0.0
        %986 = vmatpush1.msra.mxu0 0.0
        %987 = vmatprep.subr.mxu0 0.0
        %988 = vmatpush1.msra.mxu0 0.0
        %989 = vmatprep.subr.mxu0 0.0
        %990 = vmatpush1.msra.mxu0 0.0
        %991 = vmatprep.subr.mxu0 0.0
        %992 = vmatpush1.msra.mxu0 0.0
        %993 = vmatprep.subr.mxu0 0.0
        %994 = vmatpush1.msra.mxu0 0.0
        %995 = vmatprep.subr.mxu0 0.0
        %996 = vmatpush1.msra.mxu0 0.0
        %997 = vmatprep.subr.mxu0 0.0
        %998 = vmatpush1.msra.mxu0 0.0
        %999 = vmatprep.subr.mxu0 0.0
        %1000 = vmatpush1.msra.mxu0 0.0
        %1001 = vmatprep.subr.mxu0 0.0
        %1002 = vmatpush1.msra.mxu0 0.0
        %1003 = vmatprep.subr.mxu0 0.0
        %1004 = vmatpush1.msra.mxu0 0.0
        %1005 = vmatprep.subr.mxu0 0.0
        %1006 = vmatpush1.msra.mxu0 0.0
        %1007 = vmatprep.subr.mxu0 0.0
        %1008 = vmatpush1.msra.mxu0 0.0
        %1009 = vmatprep.subr.mxu0 0.0
        %1010 = vmatpush1.msra.mxu0 0.0
        %1011 = vmatprep.subr.mxu0 0.0
        %1012 = vmatpush1.msra.mxu0 0.0
        %1013 = vmatprep.subr.mxu0 0.0
        %1014 = vmatpush1.msra.mxu0 0.0
        %1015 = vmatprep.subr.mxu0 0.0
        %1016 = vmatpush1.msra.mxu0 0.0
        %1017 = vmatprep.subr.mxu0 0.0
        %1018 = vmatpush1.msra.mxu0 0.0
        %1019 = vmatprep.subr.mxu0 0.0
        %1020 = vmatpush1.msra.mxu0 0.0
        %1021 = vmatprep.subr.mxu0 0.0
        %1022 = vmatpush1.msra.mxu0 0.0
        %1023 = vmatprep.subr.mxu0 0.0
        %1024 = vmatpush1.msra.mxu0 0.0
        %1025 = vmatprep.subr.mxu0 0.0
        %1026 = vmatpush1.msra.mxu0 0.0
        %1027 = vmatprep.subr.mxu0 0.0
        %1028 = vmatpush1.msra.mxu0 0.0
        %1029 = vmatprep.subr.mxu0 0.0
        %1030 = vmatpush1.msra.mxu0 0.0
        %1031 = vmatprep.mubr.f32.mxu0 0.0
        %1032 = vmatmul.mubr.f32.gmra.mrb[0].mxu0 %v953
        %v1033 = vpop.f32.mrb[0].mxu0
        %v1034 = vadd.f32 0.0, %v1033
        %v1035 = vpop.f32.mrb[0].mxu0
        %v1036 = vadd.f32 0.0, %v1035
        %1037 = vmatprep.mubr.f32.mxu0 0.0
        %1038 = vmatmul.mubr.f32.gmra.mrb[0].mxu0 %v956
        %v1039 = vpop.f32.mrb[0].mxu0
        %v1040 = vadd.f32 0.0, %v1039
        %v1041 = vpop.f32.mrb[0].mxu0
        %v1042 = vadd.f32 0.0, %v1041
        %1043 = vmatprep.mubr.f32.mxu0 0.0
        %1044 = vmatmul.mubr.f32.gmra.mrb[0].mxu0 %v959
        %v1045 = vpop.f32.mrb[0].mxu0
        %v1046 = vadd.f32 0.0, %v1045
        %v1047 = vpop.f32.mrb[0].mxu0
        %v1048 = vadd.f32 0.0, %v1047
        %1049 = vmatprep.mubr.f32.mxu0 0.0
        %1050 = vmatmul.mubr.f32.gmra.mrb[0].mxu0 %v962
        %v1051 = vpop.f32.mrb[0].mxu0
        %v1052 = vadd.f32 0.0, %v1051
        %v1053 = vpop.f32.mrb[0].mxu0
        %v1054 = vadd.f32 0.0, %v1053
        %1055 = vmatprep.mubr.f32.mxu0 0.0
        %1056 = vmatmul.mubr.f32.gmra.mrb[0].mxu0 %v965
        %v1057 = vpop.f32.mrb[0].mxu0
        %v1058 = vadd.f32 0.0, %v1057
        %v1059 = vpop.f32.mrb[0].mxu0
        %v1060 = vadd.f32 0.0, %v1059
        %1061 = vdwg.mxu0
        %1062 = vmatprep.subr.mxu0 0.0
        %1063 = vmatpush1.msra.mxu0 %v939
        %1064 = vmatprep.subr.mxu0 0.0
        %1065 = vmatpush1.msra.mxu0 %v942
        %1066 = vmatprep.subr.mxu0 0.0
        %1067 = vmatpush1.msra.mxu0 %v945
        %1068 = vmatprep.subr.mxu0 0.0
        %1069 = vmatpush1.msra.mxu0 %v948
        %1070 = vmatprep.subr.mxu0 0.0
        %1071 = vmatpush1.msra.mxu0 %v951
        %1072 = vmatprep.subr.mxu0 0.0
        %1073 = vmatpush1.msra.mxu0 0.0
        %1074 = vmatprep.subr.mxu0 0.0
        %1075 = vmatpush1.msra.mxu0 0.0
        %1076 = vmatprep.subr.mxu0 0.0
        %1077 = vmatpush1.msra.mxu0 0.0
        %1078 = vmatprep.subr.mxu0 0.0
        %1079 = vmatpush1.msra.mxu0 0.0
        %1080 = vmatprep.subr.mxu0 0.0
        %1081 = vmatpush1.msra.mxu0 0.0
        %1082 = vmatprep.subr.mxu0 0.0
        %1083 = vmatpush1.msra.mxu0 0.0
        %1084 = vmatprep.subr.mxu0 0.0
        %1085 = vmatpush1.msra.mxu0 0.0
        %1086 = vmatprep.subr.mxu0 0.0
        %1087 = vmatpush1.msra.mxu0 0.0
        %1088 = vmatprep.subr.mxu0 0.0
        %1089 = vmatpush1.msra.mxu0 0.0
        %1090 = vmatprep.subr.mxu0 0.0
        %1091 = vmatpush1.msra.mxu0 0.0
        %1092 = vmatprep.subr.mxu0 0.0
        %1093 = vmatpush1.msra.mxu0 0.0
        %1094 = vmatprep.subr.mxu0 0.0
        %1095 = vmatpush1.msra.mxu0 0.0
        %1096 = vmatprep.subr.mxu0 0.0
        %1097 = vmatpush1.msra.mxu0 0.0
        %1098 = vmatprep.subr.mxu0 0.0
        %1099 = vmatpush1.msra.mxu0 0.0
        %1100 = vmatprep.subr.mxu0 0.0
        %1101 = vmatpush1.msra.mxu0 0.0
        %1102 = vmatprep.subr.mxu0 0.0
        %1103 = vmatpush1.msra.mxu0 0.0
        %1104 = vmatprep.subr.mxu0 0.0
        %1105 = vmatpush1.msra.mxu0 0.0
        %1106 = vmatprep.subr.mxu0 0.0
        %1107 = vmatpush1.msra.mxu0 0.0
        %1108 = vmatprep.subr.mxu0 0.0
        %1109 = vmatpush1.msra.mxu0 0.0
        %1110 = vmatprep.subr.mxu0 0.0
        %1111 = vmatpush1.msra.mxu0 0.0
        %1112 = vmatprep.subr.mxu0 0.0
        %1113 = vmatpush1.msra.mxu0 0.0
        %1114 = vmatprep.subr.mxu0 0.0
        %1115 = vmatpush1.msra.mxu0 0.0
        %1116 = vmatprep.subr.mxu0 0.0
        %1117 = vmatpush1.msra.mxu0 0.0
        %1118 = vmatprep.subr.mxu0 0.0
        %1119 = vmatpush1.msra.mxu0 0.0
        %1120 = vmatprep.subr.mxu0 0.0
        %1121 = vmatpush1.msra.mxu0 0.0
        %1122 = vmatprep.subr.mxu0 0.0
        %1123 = vmatpush1.msra.mxu0 0.0
        %1124 = vmatprep.subr.mxu0 0.0
        %1125 = vmatpush1.msra.mxu0 0.0
        %1126 = vmatprep.mubr.f32.mxu0 0.0
        %1127 = vmatmul.mubr.f32.gmra.mrb[0].mxu0 %v953
        %v1128 = vpop.f32.mrb[0].mxu0
        %v1129 = vadd.f32 0.0, %v1128
        %v1130 = vpop.f32.mrb[0].mxu0
        %1131 = vmatprep.mubr.f32.mxu0 0.0
        %1132 = vmatmul.mubr.f32.gmra.mrb[0].mxu0 %v956
        %v1133 = vpop.f32.mrb[0].mxu0
        %v1134 = vadd.f32 0.0, %v1133
        %v1135 = vpop.f32.mrb[0].mxu0
        %1136 = vmatprep.mubr.f32.mxu0 0.0
        %1137 = vmatmul.mubr.f32.gmra.mrb[0].mxu0 %v959
        %v1138 = vpop.f32.mrb[0].mxu0
        %v1139 = vadd.f32 0.0, %v1138
        %v1140 = vpop.f32.mrb[0].mxu0
        %1141 = vmatprep.mubr.f32.mxu0 0.0
        %1142 = vmatmul.mubr.f32.gmra.mrb[0].mxu0 %v962
        %v1143 = vpop.f32.mrb[0].mxu0
        %v1144 = vadd.f32 0.0, %v1143
        %v1145 = vpop.f32.mrb[0].mxu0
        %1146 = vmatprep.mubr.f32.mxu0 0.0
        %1147 = vmatmul.mubr.f32.gmra.mrb[0].mxu0 %v965
        %v1148 = vpop.f32.mrb[0].mxu0
        %v1149 = vadd.f32 0.0, %v1148
        %v1150 = vpop.f32.mrb[0].mxu0
        %1151 = vdwg.mxu0
        %v1152 = vadd.f32 %v813, %v1034
        %v1153 = vadd.f32 %v815, %v1036
        %v1154 = vadd.f32 %v908, %v1129
        %v1155 = vadd.f32 %v819, %v1040
        %v1156 = vadd.f32 %v821, %v1042
        %v1157 = vadd.f32 %v913, %v1134
        %v1158 = vadd.f32 %v825, %v1046
        %v1159 = vadd.f32 %v827, %v1048
        %v1160 = vadd.f32 %v918, %v1139
        %v1161 = vadd.f32 %v831, %v1052
        %v1162 = vadd.f32 %v833, %v1054
        %v1163 = vadd.f32 %v923, %v1144
        %v1164 = vadd.f32 %v837, %v1058
        %v1165 = vadd.f32 %v839, %v1060
        %v1166 = vadd.f32 %v928, %v1149
        %v1167 = vld [vmem:[%s433 + $0x3] sm:$0xff]
        %v1168 = vld [vmem:[%s433 + $0xb] sm:$0xff]
        %v1169 = vld [vmem:[%s433 + $0x13] sm:$0xff]
        %v1170 = vld [vmem:[%s433 + $0x1b] sm:$0xff]
        %v1171 = vld [vmem:[%s433 + $0x23] sm:$0xf]
        %s1172 = scalar_lea.vmem [#allocation5], 360
        %v1173 = vld [vmem:[%s1172] sm:$0xff]
        %v1174 = vld [vmem:[%s1172 + $0x8] sm:$0xff]
        %v1175 = vld [vmem:[%s1172 + $0x10] sm:$0xff]
        %v1176 = vld [vmem:[%s1172 + $0x18] sm:$0xff]
        %v1177 = vld [vmem:[%s1172 + $0x20] sm:$0xff]
        %v1178 = vld [vmem:[%s1172 + $0x28] sm:$0xff]
        %v1179 = vld [vmem:[%s1172 + $0x30] sm:$0xff]
        %v1180 = vld [vmem:[%s1172 + $0x38] sm:$0xff]
        %v1181 = vld [vmem:[%s1172 + $0x40] sm:$0xff]
        %v1182 = vld [vmem:[%s1172 + $0x48] sm:$0xff]
        %v1183 = vld [vmem:[%s1172 + $0x50] sm:$0xff]
        %v1184 = vld [vmem:[%s1172 + $0x58] sm:$0xff]
        %v1185 = vld [vmem:[%s1172 + $0x60] sm:$0xff]
        %v1186 = vld [vmem:[%s1172 + $0x68] sm:$0xff]
        %v1187 = vld [vmem:[%s1172 + $0x70] sm:$0xff]
        %v1189 = vsel %vm530, %v1167, 0
        %v1192 = vsel %vm530, %v1168, 0
        %v1195 = vsel %vm530, %v1169, 0
        %v1198 = vsel %vm530, %v1170, 0
        %v1201 = vsel %vm530, %v1171, 0
        %1203 = vmatprep.subr.mxu0 %v1174
        %1204 = vmatpush1.msra.mxu0 %v1173
        %1205 = vmatprep.subr.mxu0 %v1177
        %1206 = vmatpush1.msra.mxu0 %v1176
        %1207 = vmatprep.subr.mxu0 %v1180
        %1208 = vmatpush1.msra.mxu0 %v1179
        %1209 = vmatprep.subr.mxu0 %v1183
        %1210 = vmatpush1.msra.mxu0 %v1182
        %1211 = vmatprep.subr.mxu0 %v1186
        %1212 = vmatpush1.msra.mxu0 %v1185
        %1213 = vmatprep.subr.mxu0 0.0
        %1214 = vmatpush1.msra.mxu0 0.0
        %1215 = vmatprep.subr.mxu0 0.0
        %1216 = vmatpush1.msra.mxu0 0.0
        %1217 = vmatprep.subr.mxu0 0.0
        %1218 = vmatpush1.msra.mxu0 0.0
        %1219 = vmatprep.subr.mxu0 0.0
        %1220 = vmatpush1.msra.mxu0 0.0
        %1221 = vmatprep.subr.mxu0 0.0
        %1222 = vmatpush1.msra.mxu0 0.0
        %1223 = vmatprep.subr.mxu0 0.0
        %1224 = vmatpush1.msra.mxu0 0.0
        %1225 = vmatprep.subr.mxu0 0.0
        %1226 = vmatpush1.msra.mxu0 0.0
        %1227 = vmatprep.subr.mxu0 0.0
        %1228 = vmatpush1.msra.mxu0 0.0
        %1229 = vmatprep.subr.mxu0 0.0
        %1230 = vmatpush1.msra.mxu0 0.0
        %1231 = vmatprep.subr.mxu0 0.0
        %1232 = vmatpush1.msra.mxu0 0.0
        %1233 = vmatprep.subr.mxu0 0.0
        %1234 = vmatpush1.msra.mxu0 0.0
        %1235 = vmatprep.subr.mxu0 0.0
        %1236 = vmatpush1.msra.mxu0 0.0
        %1237 = vmatprep.subr.mxu0 0.0
        %1238 = vmatpush1.msra.mxu0 0.0
        %1239 = vmatprep.subr.mxu0 0.0
        %1240 = vmatpush1.msra.mxu0 0.0
        %1241 = vmatprep.subr.mxu0 0.0
        %1242 = vmatpush1.msra.mxu0 0.0
        %1243 = vmatprep.subr.mxu0 0.0
        %1244 = vmatpush1.msra.mxu0 0.0
        %1245 = vmatprep.subr.mxu0 0.0
        %1246 = vmatpush1.msra.mxu0 0.0
        %1247 = vmatprep.subr.mxu0 0.0
        %1248 = vmatpush1.msra.mxu0 0.0
        %1249 = vmatprep.subr.mxu0 0.0
        %1250 = vmatpush1.msra.mxu0 0.0
        %1251 = vmatprep.subr.mxu0 0.0
        %1252 = vmatpush1.msra.mxu0 0.0
        %1253 = vmatprep.subr.mxu0 0.0
        %1254 = vmatpush1.msra.mxu0 0.0
        %1255 = vmatprep.subr.mxu0 0.0
        %1256 = vmatpush1.msra.mxu0 0.0
        %1257 = vmatprep.subr.mxu0 0.0
        %1258 = vmatpush1.msra.mxu0 0.0
        %1259 = vmatprep.subr.mxu0 0.0
        %1260 = vmatpush1.msra.mxu0 0.0
        %1261 = vmatprep.subr.mxu0 0.0
        %1262 = vmatpush1.msra.mxu0 0.0
        %1263 = vmatprep.subr.mxu0 0.0
        %1264 = vmatpush1.msra.mxu0 0.0
        %1265 = vmatprep.subr.mxu0 0.0
        %1266 = vmatpush1.msra.mxu0 0.0
        %1267 = vmatprep.mubr.f32.mxu0 0.0
        %1268 = vmatmul.mubr.f32.gmra.mrb[0].mxu0 %v1189
        %v1269 = vpop.f32.mrb[0].mxu0
        %v1270 = vadd.f32 0.0, %v1269
        %v1271 = vpop.f32.mrb[0].mxu0
        %v1272 = vadd.f32 0.0, %v1271
        %1273 = vmatprep.mubr.f32.mxu0 0.0
        %1274 = vmatmul.mubr.f32.gmra.mrb[0].mxu0 %v1192
        %v1275 = vpop.f32.mrb[0].mxu0
        %v1276 = vadd.f32 0.0, %v1275
        %v1277 = vpop.f32.mrb[0].mxu0
        %v1278 = vadd.f32 0.0, %v1277
        %1279 = vmatprep.mubr.f32.mxu0 0.0
        %1280 = vmatmul.mubr.f32.gmra.mrb[0].mxu0 %v1195
        %v1281 = vpop.f32.mrb[0].mxu0
        %v1282 = vadd.f32 0.0, %v1281
        %v1283 = vpop.f32.mrb[0].mxu0
        %v1284 = vadd.f32 0.0, %v1283
        %1285 = vmatprep.mubr.f32.mxu0 0.0
        %1286 = vmatmul.mubr.f32.gmra.mrb[0].mxu0 %v1198
        %v1287 = vpop.f32.mrb[0].mxu0
        %v1288 = vadd.f32 0.0, %v1287
        %v1289 = vpop.f32.mrb[0].mxu0
        %v1290 = vadd.f32 0.0, %v1289
        %1291 = vmatprep.mubr.f32.mxu0 0.0
        %1292 = vmatmul.mubr.f32.gmra.mrb[0].mxu0 %v1201
        %v1293 = vpop.f32.mrb[0].mxu0
        %v1294 = vadd.f32 0.0, %v1293
        %v1295 = vpop.f32.mrb[0].mxu0
        %v1296 = vadd.f32 0.0, %v1295
        %1297 = vdwg.mxu0
        %1298 = vmatprep.subr.mxu0 0.0
        %1299 = vmatpush1.msra.mxu0 %v1175
        %1300 = vmatprep.subr.mxu0 0.0
        %1301 = vmatpush1.msra.mxu0 %v1178
        %1302 = vmatprep.subr.mxu0 0.0
        %1303 = vmatpush1.msra.mxu0 %v1181
        %1304 = vmatprep.subr.mxu0 0.0
        %1305 = vmatpush1.msra.mxu0 %v1184
        %1306 = vmatprep.subr.mxu0 0.0
        %1307 = vmatpush1.msra.mxu0 %v1187
        %1308 = vmatprep.subr.mxu0 0.0
        %1309 = vmatpush1.msra.mxu0 0.0
        %1310 = vmatprep.subr.mxu0 0.0
        %1311 = vmatpush1.msra.mxu0 0.0
        %1312 = vmatprep.subr.mxu0 0.0
        %1313 = vmatpush1.msra.mxu0 0.0
        %1314 = vmatprep.subr.mxu0 0.0
        %1315 = vmatpush1.msra.mxu0 0.0
        %1316 = vmatprep.subr.mxu0 0.0
        %1317 = vmatpush1.msra.mxu0 0.0
        %1318 = vmatprep.subr.mxu0 0.0
        %1319 = vmatpush1.msra.mxu0 0.0
        %1320 = vmatprep.subr.mxu0 0.0
        %1321 = vmatpush1.msra.mxu0 0.0
        %1322 = vmatprep.subr.mxu0 0.0
        %1323 = vmatpush1.msra.mxu0 0.0
        %1324 = vmatprep.subr.mxu0 0.0
        %1325 = vmatpush1.msra.mxu0 0.0
        %1326 = vmatprep.subr.mxu0 0.0
        %1327 = vmatpush1.msra.mxu0 0.0
        %1328 = vmatprep.subr.mxu0 0.0
        %1329 = vmatpush1.msra.mxu0 0.0
        %1330 = vmatprep.subr.mxu0 0.0
        %1331 = vmatpush1.msra.mxu0 0.0
        %1332 = vmatprep.subr.mxu0 0.0
        %1333 = vmatpush1.msra.mxu0 0.0
        %1334 = vmatprep.subr.mxu0 0.0
        %1335 = vmatpush1.msra.mxu0 0.0
        %1336 = vmatprep.subr.mxu0 0.0
        %1337 = vmatpush1.msra.mxu0 0.0
        %1338 = vmatprep.subr.mxu0 0.0
        %1339 = vmatpush1.msra.mxu0 0.0
        %1340 = vmatprep.subr.mxu0 0.0
        %1341 = vmatpush1.msra.mxu0 0.0
        %1342 = vmatprep.subr.mxu0 0.0
        %1343 = vmatpush1.msra.mxu0 0.0
        %1344 = vmatprep.subr.mxu0 0.0
        %1345 = vmatpush1.msra.mxu0 0.0
        %1346 = vmatprep.subr.mxu0 0.0
        %1347 = vmatpush1.msra.mxu0 0.0
        %1348 = vmatprep.subr.mxu0 0.0
        %1349 = vmatpush1.msra.mxu0 0.0
        %1350 = vmatprep.subr.mxu0 0.0
        %1351 = vmatpush1.msra.mxu0 0.0
        %1352 = vmatprep.subr.mxu0 0.0
        %1353 = vmatpush1.msra.mxu0 0.0
        %1354 = vmatprep.subr.mxu0 0.0
        %1355 = vmatpush1.msra.mxu0 0.0
        %1356 = vmatprep.subr.mxu0 0.0
        %1357 = vmatpush1.msra.mxu0 0.0
        %1358 = vmatprep.subr.mxu0 0.0
        %1359 = vmatpush1.msra.mxu0 0.0
        %1360 = vmatprep.subr.mxu0 0.0
        %1361 = vmatpush1.msra.mxu0 0.0
        %1362 = vmatprep.mubr.f32.mxu0 0.0
        %1363 = vmatmul.mubr.f32.gmra.mrb[0].mxu0 %v1189
        %v1364 = vpop.f32.mrb[0].mxu0
        %v1365 = vadd.f32 0.0, %v1364
        %v1366 = vpop.f32.mrb[0].mxu0
        %1367 = vmatprep.mubr.f32.mxu0 0.0
        %1368 = vmatmul.mubr.f32.gmra.mrb[0].mxu0 %v1192
        %v1369 = vpop.f32.mrb[0].mxu0
        %v1370 = vadd.f32 0.0, %v1369
        %v1371 = vpop.f32.mrb[0].mxu0
        %1372 = vmatprep.mubr.f32.mxu0 0.0
        %1373 = vmatmul.mubr.f32.gmra.mrb[0].mxu0 %v1195
        %v1374 = vpop.f32.mrb[0].mxu0
        %v1375 = vadd.f32 0.0, %v1374
        %v1376 = vpop.f32.mrb[0].mxu0
        %1377 = vmatprep.mubr.f32.mxu0 0.0
        %1378 = vmatmul.mubr.f32.gmra.mrb[0].mxu0 %v1198
        %v1379 = vpop.f32.mrb[0].mxu0
        %v1380 = vadd.f32 0.0, %v1379
        %v1381 = vpop.f32.mrb[0].mxu0
        %1382 = vmatprep.mubr.f32.mxu0 0.0
        %1383 = vmatmul.mubr.f32.gmra.mrb[0].mxu0 %v1201
        %v1384 = vpop.f32.mrb[0].mxu0
        %v1385 = vadd.f32 0.0, %v1384
        %v1386 = vpop.f32.mrb[0].mxu0
        %1387 = vdwg.mxu0
        %v1388 = vadd.f32 %v1152, %v1270
        %v1389 = vadd.f32 %v1153, %v1272
        %v1390 = vadd.f32 %v1154, %v1365
        %v1391 = vadd.f32 %v1155, %v1276
        %v1392 = vadd.f32 %v1156, %v1278
        %v1393 = vadd.f32 %v1157, %v1370
        %v1394 = vadd.f32 %v1158, %v1282
        %v1395 = vadd.f32 %v1159, %v1284
        %v1396 = vadd.f32 %v1160, %v1375
        %v1397 = vadd.f32 %v1161, %v1288
        %v1398 = vadd.f32 %v1162, %v1290
        %v1399 = vadd.f32 %v1163, %v1380
        %v1400 = vadd.f32 %v1164, %v1294
        %v1401 = vadd.f32 %v1165, %v1296
        %v1402 = vadd.f32 %v1166, %v1385
        %v1403 = vld [vmem:[%s433 + $0x4] sm:$0xff]
        %v1404 = vld [vmem:[%s433 + $0xc] sm:$0xff]
        %v1405 = vld [vmem:[%s433 + $0x14] sm:$0xff]
        %v1406 = vld [vmem:[%s433 + $0x1c] sm:$0xff]
        %v1407 = vld [vmem:[%s433 + $0x24] sm:$0xf]
        %s1408 = scalar_lea.vmem [#allocation5], 480
        %v1409 = vld [vmem:[%s1408] sm:$0xff]
        %v1410 = vld [vmem:[%s1408 + $0x8] sm:$0xff]
        %v1411 = vld [vmem:[%s1408 + $0x10] sm:$0xff]
        %v1412 = vld [vmem:[%s1408 + $0x18] sm:$0xff]
        %v1413 = vld [vmem:[%s1408 + $0x20] sm:$0xff]
        %v1414 = vld [vmem:[%s1408 + $0x28] sm:$0xff]
        %v1415 = vld [vmem:[%s1408 + $0x30] sm:$0xff]
        %v1416 = vld [vmem:[%s1408 + $0x38] sm:$0xff]
        %v1417 = vld [vmem:[%s1408 + $0x40] sm:$0xff]
        %v1418 = vld [vmem:[%s1408 + $0x48] sm:$0xff]
        %v1419 = vld [vmem:[%s1408 + $0x50] sm:$0xff]
        %v1420 = vld [vmem:[%s1408 + $0x58] sm:$0xff]
        %v1421 = vld [vmem:[%s1408 + $0x60] sm:$0xff]
        %v1422 = vld [vmem:[%s1408 + $0x68] sm:$0xff]
        %v1423 = vld [vmem:[%s1408 + $0x70] sm:$0xff]
        %v1425 = vsel %vm530, %v1403, 0
        %v1428 = vsel %vm530, %v1404, 0
        %v1431 = vsel %vm530, %v1405, 0
        %v1434 = vsel %vm530, %v1406, 0
        %v1437 = vsel %vm530, %v1407, 0
        %1439 = vmatprep.subr.mxu0 %v1410
        %1440 = vmatpush1.msra.mxu0 %v1409
        %1441 = vmatprep.subr.mxu0 %v1413
        %1442 = vmatpush1.msra.mxu0 %v1412
        %1443 = vmatprep.subr.mxu0 %v1416
        %1444 = vmatpush1.msra.mxu0 %v1415
        %1445 = vmatprep.subr.mxu0 %v1419
        %1446 = vmatpush1.msra.mxu0 %v1418
        %1447 = vmatprep.subr.mxu0 %v1422
        %1448 = vmatpush1.msra.mxu0 %v1421
        %1449 = vmatprep.subr.mxu0 0.0
        %1450 = vmatpush1.msra.mxu0 0.0
        %1451 = vmatprep.subr.mxu0 0.0
        %1452 = vmatpush1.msra.mxu0 0.0
        %1453 = vmatprep.subr.mxu0 0.0
        %1454 = vmatpush1.msra.mxu0 0.0
        %1455 = vmatprep.subr.mxu0 0.0
        %1456 = vmatpush1.msra.mxu0 0.0
        %1457 = vmatprep.subr.mxu0 0.0
        %1458 = vmatpush1.msra.mxu0 0.0
        %1459 = vmatprep.subr.mxu0 0.0
        %1460 = vmatpush1.msra.mxu0 0.0
        %1461 = vmatprep.subr.mxu0 0.0
        %1462 = vmatpush1.msra.mxu0 0.0
        %1463 = vmatprep.subr.mxu0 0.0
        %1464 = vmatpush1.msra.mxu0 0.0
        %1465 = vmatprep.subr.mxu0 0.0
        %1466 = vmatpush1.msra.mxu0 0.0
        %1467 = vmatprep.subr.mxu0 0.0
        %1468 = vmatpush1.msra.mxu0 0.0
        %1469 = vmatprep.subr.mxu0 0.0
        %1470 = vmatpush1.msra.mxu0 0.0
        %1471 = vmatprep.subr.mxu0 0.0
        %1472 = vmatpush1.msra.mxu0 0.0
        %1473 = vmatprep.subr.mxu0 0.0
        %1474 = vmatpush1.msra.mxu0 0.0
        %1475 = vmatprep.subr.mxu0 0.0
        %1476 = vmatpush1.msra.mxu0 0.0
        %1477 = vmatprep.subr.mxu0 0.0
        %1478 = vmatpush1.msra.mxu0 0.0
        %1479 = vmatprep.subr.mxu0 0.0
        %1480 = vmatpush1.msra.mxu0 0.0
        %1481 = vmatprep.subr.mxu0 0.0
        %1482 = vmatpush1.msra.mxu0 0.0
        %1483 = vmatprep.subr.mxu0 0.0
        %1484 = vmatpush1.msra.mxu0 0.0
        %1485 = vmatprep.subr.mxu0 0.0
        %1486 = vmatpush1.msra.mxu0 0.0
        %1487 = vmatprep.subr.mxu0 0.0
        %1488 = vmatpush1.msra.mxu0 0.0
        %1489 = vmatprep.subr.mxu0 0.0
        %1490 = vmatpush1.msra.mxu0 0.0
        %1491 = vmatprep.subr.mxu0 0.0
        %1492 = vmatpush1.msra.mxu0 0.0
        %1493 = vmatprep.subr.mxu0 0.0
        %1494 = vmatpush1.msra.mxu0 0.0
        %1495 = vmatprep.subr.mxu0 0.0
        %1496 = vmatpush1.msra.mxu0 0.0
        %1497 = vmatprep.subr.mxu0 0.0
        %1498 = vmatpush1.msra.mxu0 0.0
        %1499 = vmatprep.subr.mxu0 0.0
        %1500 = vmatpush1.msra.mxu0 0.0
        %1501 = vmatprep.subr.mxu0 0.0
        %1502 = vmatpush1.msra.mxu0 0.0
        %1503 = vmatprep.mubr.f32.mxu0 0.0
        %1504 = vmatmul.mubr.f32.gmra.mrb[0].mxu0 %v1425
        %v1505 = vpop.f32.mrb[0].mxu0
        %v1506 = vadd.f32 0.0, %v1505
        %v1507 = vpop.f32.mrb[0].mxu0
        %v1508 = vadd.f32 0.0, %v1507
        %1509 = vmatprep.mubr.f32.mxu0 0.0
        %1510 = vmatmul.mubr.f32.gmra.mrb[0].mxu0 %v1428
        %v1511 = vpop.f32.mrb[0].mxu0
        %v1512 = vadd.f32 0.0, %v1511
        %v1513 = vpop.f32.mrb[0].mxu0
        %v1514 = vadd.f32 0.0, %v1513
        %1515 = vmatprep.mubr.f32.mxu0 0.0
        %1516 = vmatmul.mubr.f32.gmra.mrb[0].mxu0 %v1431
        %v1517 = vpop.f32.mrb[0].mxu0
        %v1518 = vadd.f32 0.0, %v1517
        %v1519 = vpop.f32.mrb[0].mxu0
        %v1520 = vadd.f32 0.0, %v1519
        %1521 = vmatprep.mubr.f32.mxu0 0.0
        %1522 = vmatmul.mubr.f32.gmra.mrb[0].mxu0 %v1434
        %v1523 = vpop.f32.mrb[0].mxu0
        %v1524 = vadd.f32 0.0, %v1523
        %v1525 = vpop.f32.mrb[0].mxu0
        %v1526 = vadd.f32 0.0, %v1525
        %1527 = vmatprep.mubr.f32.mxu0 0.0
        %1528 = vmatmul.mubr.f32.gmra.mrb[0].mxu0 %v1437
        %v1529 = vpop.f32.mrb[0].mxu0
        %v1530 = vadd.f32 0.0, %v1529
        %v1531 = vpop.f32.mrb[0].mxu0
        %v1532 = vadd.f32 0.0, %v1531
        %1533 = vdwg.mxu0
        %1534 = vmatprep.subr.mxu0 0.0
        %1535 = vmatpush1.msra.mxu0 %v1411
        %1536 = vmatprep.subr.mxu0 0.0
        %1537 = vmatpush1.msra.mxu0 %v1414
        %1538 = vmatprep.subr.mxu0 0.0
        %1539 = vmatpush1.msra.mxu0 %v1417
        %1540 = vmatprep.subr.mxu0 0.0
        %1541 = vmatpush1.msra.mxu0 %v1420
        %1542 = vmatprep.subr.mxu0 0.0
        %1543 = vmatpush1.msra.mxu0 %v1423
        %1544 = vmatprep.subr.mxu0 0.0
        %1545 = vmatpush1.msra.mxu0 0.0
        %1546 = vmatprep.subr.mxu0 0.0
        %1547 = vmatpush1.msra.mxu0 0.0
        %1548 = vmatprep.subr.mxu0 0.0
        %1549 = vmatpush1.msra.mxu0 0.0
        %1550 = vmatprep.subr.mxu0 0.0
        %1551 = vmatpush1.msra.mxu0 0.0
        %1552 = vmatprep.subr.mxu0 0.0
        %1553 = vmatpush1.msra.mxu0 0.0
        %1554 = vmatprep.subr.mxu0 0.0
        %1555 = vmatpush1.msra.mxu0 0.0
        %1556 = vmatprep.subr.mxu0 0.0
        %1557 = vmatpush1.msra.mxu0 0.0
        %1558 = vmatprep.subr.mxu0 0.0
        %1559 = vmatpush1.msra.mxu0 0.0
        %1560 = vmatprep.subr.mxu0 0.0
        %1561 = vmatpush1.msra.mxu0 0.0
        %1562 = vmatprep.subr.mxu0 0.0
        %1563 = vmatpush1.msra.mxu0 0.0
        %1564 = vmatprep.subr.mxu0 0.0
        %1565 = vmatpush1.msra.mxu0 0.0
        %1566 = vmatprep.subr.mxu0 0.0
        %1567 = vmatpush1.msra.mxu0 0.0
        %1568 = vmatprep.subr.mxu0 0.0
        %1569 = vmatpush1.msra.mxu0 0.0
        %1570 = vmatprep.subr.mxu0 0.0
        %1571 = vmatpush1.msra.mxu0 0.0
        %1572 = vmatprep.subr.mxu0 0.0
        %1573 = vmatpush1.msra.mxu0 0.0
        %1574 = vmatprep.subr.mxu0 0.0
        %1575 = vmatpush1.msra.mxu0 0.0
        %1576 = vmatprep.subr.mxu0 0.0
        %1577 = vmatpush1.msra.mxu0 0.0
        %1578 = vmatprep.subr.mxu0 0.0
        %1579 = vmatpush1.msra.mxu0 0.0
        %1580 = vmatprep.subr.mxu0 0.0
        %1581 = vmatpush1.msra.mxu0 0.0
        %1582 = vmatprep.subr.mxu0 0.0
        %1583 = vmatpush1.msra.mxu0 0.0
        %1584 = vmatprep.subr.mxu0 0.0
        %1585 = vmatpush1.msra.mxu0 0.0
        %1586 = vmatprep.subr.mxu0 0.0
        %1587 = vmatpush1.msra.mxu0 0.0
        %1588 = vmatprep.subr.mxu0 0.0
        %1589 = vmatpush1.msra.mxu0 0.0
        %1590 = vmatprep.subr.mxu0 0.0
        %1591 = vmatpush1.msra.mxu0 0.0
        %1592 = vmatprep.subr.mxu0 0.0
        %1593 = vmatpush1.msra.mxu0 0.0
        %1594 = vmatprep.subr.mxu0 0.0
        %1595 = vmatpush1.msra.mxu0 0.0
        %1596 = vmatprep.subr.mxu0 0.0
        %1597 = vmatpush1.msra.mxu0 0.0
        %1598 = vmatprep.mubr.f32.mxu0 0.0
        %1599 = vmatmul.mubr.f32.gmra.mrb[0].mxu0 %v1425
        %v1600 = vpop.f32.mrb[0].mxu0
        %v1601 = vadd.f32 0.0, %v1600
        %v1602 = vpop.f32.mrb[0].mxu0
        %1603 = vmatprep.mubr.f32.mxu0 0.0
        %1604 = vmatmul.mubr.f32.gmra.mrb[0].mxu0 %v1428
        %v1605 = vpop.f32.mrb[0].mxu0
        %v1606 = vadd.f32 0.0, %v1605
        %v1607 = vpop.f32.mrb[0].mxu0
        %1608 = vmatprep.mubr.f32.mxu0 0.0
        %1609 = vmatmul.mubr.f32.gmra.mrb[0].mxu0 %v1431
        %v1610 = vpop.f32.mrb[0].mxu0
        %v1611 = vadd.f32 0.0, %v1610
        %v1612 = vpop.f32.mrb[0].mxu0
        %1613 = vmatprep.mubr.f32.mxu0 0.0
        %1614 = vmatmul.mubr.f32.gmra.mrb[0].mxu0 %v1434
        %v1615 = vpop.f32.mrb[0].mxu0
        %v1616 = vadd.f32 0.0, %v1615
        %v1617 = vpop.f32.mrb[0].mxu0
        %1618 = vmatprep.mubr.f32.mxu0 0.0
        %1619 = vmatmul.mubr.f32.gmra.mrb[0].mxu0 %v1437
        %v1620 = vpop.f32.mrb[0].mxu0
        %v1621 = vadd.f32 0.0, %v1620
        %v1622 = vpop.f32.mrb[0].mxu0
        %1623 = vdwg.mxu0
        %v1624 = vadd.f32 %v1388, %v1506
        %v1625 = vadd.f32 %v1389, %v1508
        %v1626 = vadd.f32 %v1390, %v1601
        %v1627 = vadd.f32 %v1391, %v1512
        %v1628 = vadd.f32 %v1392, %v1514
        %v1629 = vadd.f32 %v1393, %v1606
        %v1630 = vadd.f32 %v1394, %v1518
        %v1631 = vadd.f32 %v1395, %v1520
        %v1632 = vadd.f32 %v1396, %v1611
        %v1633 = vadd.f32 %v1397, %v1524
        %v1634 = vadd.f32 %v1398, %v1526
        %v1635 = vadd.f32 %v1399, %v1616
        %v1636 = vadd.f32 %v1400, %v1530
        %v1637 = vadd.f32 %v1401, %v1532
        %v1638 = vadd.f32 %v1402, %v1621
        %v1639 = vld [vmem:[%s2] sm:$0x7]
        %v1641 = vlaneseq
        %v1642 = vshrl.u32 %v1641, 7
        %v1643 = vsub.s32 0, %v1642
        %v1644 = vrot.slane %v1639, %v1643
        %v1645 = vlaneseq
        %v1646 = vshrl.u32 %v1645, 7
        %v1647 = vsub.s32 1, %v1646
        %v1648 = vrot.slane %v1639, %v1647
        %v1649 = vlaneseq
        %v1650 = vshrl.u32 %v1649, 7
        %v1651 = vsub.s32 2, %v1650
        %v1652 = vrot.slane %v1639, %v1651
        %v1656 = vadd.f32 %v1624, %v1644
        %v1657 = vadd.f32 %v1625, %v1648
        %v1658 = vadd.f32 %v1626, %v1652
        %v1659 = vadd.f32 %v1627, %v1644
        %v1660 = vadd.f32 %v1628, %v1648
        %v1661 = vadd.f32 %v1629, %v1652
        %v1662 = vadd.f32 %v1630, %v1644
        %v1663 = vadd.f32 %v1631, %v1648
        %v1664 = vadd.f32 %v1632, %v1652
        %v1665 = vadd.f32 %v1633, %v1644
        %v1666 = vadd.f32 %v1634, %v1648
        %v1667 = vadd.f32 %v1635, %v1652
        %v1668 = vadd.f32 %v1636, %v1644
        %v1669 = vadd.f32 %v1637, %v1648
        %v1670 = vadd.f32 %v1638, %v1652
        %v1671 = vmax.f32 %v1656, 0.0
        %v1672 = vmax.f32 %v1657, 0.0
        %v1673 = vmax.f32 %v1658, 0.0
        %v1674 = vmax.f32 %v1659, 0.0
        %v1675 = vmax.f32 %v1660, 0.0
        %v1676 = vmax.f32 %v1661, 0.0
        %v1677 = vmax.f32 %v1662, 0.0
        %v1678 = vmax.f32 %v1663, 0.0
        %v1679 = vmax.f32 %v1664, 0.0
        %v1680 = vmax.f32 %v1665, 0.0
        %v1681 = vmax.f32 %v1666, 0.0
        %v1682 = vmax.f32 %v1667, 0.0
        %v1683 = vmax.f32 %v1668, 0.0
        %v1684 = vmax.f32 %v1669, 0.0
        %v1685 = vmax.f32 %v1670, 0.0
        %vm1701 = vcmask 1046528
        %v1702 = vrot.slane %v1671, 1
        %v1703 = vrot.slane %v1674, 1
        %v1704 = vsel %vm1701, %v1702, %v1703
        %v1705 = vrot.slane %v1672, 1
        %v1706 = vrot.slane %v1675, 1
        %v1707 = vsel %vm1701, %v1705, %v1706
        %v1708 = vrot.slane %v1673, 1
        %v1709 = vrot.slane %v1676, 1
        %v1710 = vsel %vm1701, %v1708, %v1709
        %v1711 = vrot.slane %v1677, 1
        %v1712 = vsel %vm1701, %v1703, %v1711
        %v1713 = vrot.slane %v1678, 1
        %v1714 = vsel %vm1701, %v1706, %v1713
        %v1715 = vrot.slane %v1679, 1
        %v1716 = vsel %vm1701, %v1709, %v1715
        %v1717 = vrot.slane %v1680, 1
        %v1718 = vsel %vm1701, %v1711, %v1717
        %v1719 = vrot.slane %v1681, 1
        %v1720 = vsel %vm1701, %v1713, %v1719
        %v1721 = vrot.slane %v1682, 1
        %v1722 = vsel %vm1701, %v1715, %v1721
        %v1723 = vrot.slane %v1683, 1
        %v1724 = vsel %vm1701, %v1717, %v1723
        %v1725 = vrot.slane %v1684, 1
        %v1726 = vsel %vm1701, %v1719, %v1725
        %v1727 = vrot.slane %v1685, 1
        %v1728 = vsel %vm1701, %v1721, %v1727
        %v1744 = vmax.f32 %v1671, %v1704
        %v1745 = vmax.f32 %v1672, %v1707
        %v1746 = vmax.f32 %v1673, %v1710
        %v1747 = vmax.f32 %v1674, %v1712
        %v1748 = vmax.f32 %v1675, %v1714
        %v1749 = vmax.f32 %v1676, %v1716
        %v1750 = vmax.f32 %v1677, %v1718
        %v1751 = vmax.f32 %v1678, %v1720
        %v1752 = vmax.f32 %v1679, %v1722
        %v1753 = vmax.f32 %v1680, %v1724
        %v1754 = vmax.f32 %v1681, %v1726
        %v1755 = vmax.f32 %v1682, %v1728
        %v1756 = vmax.f32 %v1683, %v1723
        %v1757 = vmax.f32 %v1684, %v1725
        %v1758 = vmax.f32 %v1685, %v1727
        %vm1759 = vcmask 1045504
        %v1760 = vrot.slane %v1671, 2
        %v1761 = vrot.slane %v1674, 2
        %v1762 = vsel %vm1759, %v1760, %v1761
        %v1763 = vrot.slane %v1672, 2
        %v1764 = vrot.slane %v1675, 2
        %v1765 = vsel %vm1759, %v1763, %v1764
        %v1766 = vrot.slane %v1673, 2
        %v1767 = vrot.slane %v1676, 2
        %v1768 = vsel %vm1759, %v1766, %v1767
        %v1769 = vrot.slane %v1677, 2
        %v1770 = vsel %vm1759, %v1761, %v1769
        %v1771 = vrot.slane %v1678, 2
        %v1772 = vsel %vm1759, %v1764, %v1771
        %v1773 = vrot.slane %v1679, 2
        %v1774 = vsel %vm1759, %v1767, %v1773
        %v1775 = vrot.slane %v1680, 2
        %v1776 = vsel %vm1759, %v1769, %v1775
        %v1777 = vrot.slane %v1681, 2
        %v1778 = vsel %vm1759, %v1771, %v1777
        %v1779 = vrot.slane %v1682, 2
        %v1780 = vsel %vm1759, %v1773, %v1779
        %v1781 = vrot.slane %v1683, 2
        %v1782 = vsel %vm1759, %v1775, %v1781
        %v1783 = vrot.slane %v1684, 2
        %v1784 = vsel %vm1759, %v1777, %v1783
        %v1785 = vrot.slane %v1685, 2
        %v1786 = vsel %vm1759, %v1779, %v1785
        %v1802 = vmax.f32 %v1744, %v1762
        %v1803 = vmax.f32 %v1745, %v1765
        %v1804 = vmax.f32 %v1746, %v1768
        %v1805 = vmax.f32 %v1747, %v1770
        %v1806 = vmax.f32 %v1748, %v1772
        %v1807 = vmax.f32 %v1749, %v1774
        %v1808 = vmax.f32 %v1750, %v1776
        %v1809 = vmax.f32 %v1751, %v1778
        %v1810 = vmax.f32 %v1752, %v1780
        %v1811 = vmax.f32 %v1753, %v1782
        %v1812 = vmax.f32 %v1754, %v1784
        %v1813 = vmax.f32 %v1755, %v1786
        %v1814 = vmax.f32 %v1756, %v1781
        %v1815 = vmax.f32 %v1757, %v1783
        %v1816 = vmax.f32 %v1758, %v1785
        %1832 = vrot.lane.b32.xlu0 %v1802, 127
        %v1833 = vpop.permute.xlu0 %1832
        %1834 = vrot.lane.b32.xlu0 %v1803, 127
        %v1835 = vpop.permute.xlu0 %1834
        %1836 = vrot.lane.b32.xlu0 %v1804, 127
        %v1837 = vpop.permute.xlu0 %1836
        %1838 = vrot.lane.b32.xlu0 %v1805, 127
        %v1839 = vpop.permute.xlu0 %1838
        %1840 = vrot.lane.b32.xlu0 %v1806, 127
        %v1841 = vpop.permute.xlu0 %1840
        %1842 = vrot.lane.b32.xlu0 %v1807, 127
        %v1843 = vpop.permute.xlu0 %1842
        %1844 = vrot.lane.b32.xlu0 %v1808, 127
        %v1845 = vpop.permute.xlu0 %1844
        %1846 = vrot.lane.b32.xlu0 %v1809, 127
        %v1847 = vpop.permute.xlu0 %1846
        %1848 = vrot.lane.b32.xlu0 %v1810, 127
        %v1849 = vpop.permute.xlu0 %1848
        %1850 = vrot.lane.b32.xlu0 %v1811, 127
        %v1851 = vpop.permute.xlu0 %1850
        %1852 = vrot.lane.b32.xlu0 %v1812, 127
        %v1853 = vpop.permute.xlu0 %1852
        %1854 = vrot.lane.b32.xlu0 %v1813, 127
        %v1855 = vpop.permute.xlu0 %1854
        %1856 = vrot.lane.b32.xlu0 %v1814, 127
        %v1857 = vpop.permute.xlu0 %1856
        %1858 = vrot.lane.b32.xlu0 %v1815, 127
        %v1859 = vpop.permute.xlu0 %1858
        %1860 = vrot.lane.b32.xlu0 %v1816, 127
        %v1861 = vpop.permute.xlu0 %1860
        %vm1862 = vcmask 1039360
        %v1863 = vsel %vm1862, %v1833, %v1835
        %v1864 = vsel %vm1862, %v1835, %v1837
        %v1865 = vsel %vm1862, %v1839, %v1841
        %v1866 = vsel %vm1862, %v1841, %v1843
        %v1867 = vsel %vm1862, %v1845, %v1847
        %v1868 = vsel %vm1862, %v1847, %v1849
        %v1869 = vsel %vm1862, %v1851, %v1853
        %v1870 = vsel %vm1862, %v1853, %v1855
        %v1871 = vsel %vm1862, %v1857, %v1859
        %v1872 = vsel %vm1862, %v1859, %v1861
        %v1888 = vmax.f32 %v1802, %v1863
        %v1889 = vmax.f32 %v1803, %v1864
        %v1890 = vmax.f32 %v1804, %v1837
        %v1891 = vmax.f32 %v1805, %v1865
        %v1892 = vmax.f32 %v1806, %v1866
        %v1893 = vmax.f32 %v1807, %v1843
        %v1894 = vmax.f32 %v1808, %v1867
        %v1895 = vmax.f32 %v1809, %v1868
        %v1896 = vmax.f32 %v1810, %v1849
        %v1897 = vmax.f32 %v1811, %v1869
        %v1898 = vmax.f32 %v1812, %v1870
        %v1899 = vmax.f32 %v1813, %v1855
        %v1900 = vmax.f32 %v1814, %v1871
        %v1901 = vmax.f32 %v1815, %v1872
        %v1902 = vmax.f32 %v1816, %v1861
        %1903 = vrot.lane.b32.xlu0 %v1802, 126
        %v1904 = vpop.permute.xlu0 %1903
        %1905 = vrot.lane.b32.xlu0 %v1803, 126
        %v1906 = vpop.permute.xlu0 %1905
        %1907 = vrot.lane.b32.xlu0 %v1804, 126
        %v1908 = vpop.permute.xlu0 %1907
        %1909 = vrot.lane.b32.xlu0 %v1805, 126
        %v1910 = vpop.permute.xlu0 %1909
        %1911 = vrot.lane.b32.xlu0 %v1806, 126
        %v1912 = vpop.permute.xlu0 %1911
        %1913 = vrot.lane.b32.xlu0 %v1807, 126
        %v1914 = vpop.permute.xlu0 %1913
        %1915 = vrot.lane.b32.xlu0 %v1808, 126
        %v1916 = vpop.permute.xlu0 %1915
        %1917 = vrot.lane.b32.xlu0 %v1809, 126
        %v1918 = vpop.permute.xlu0 %1917
        %1919 = vrot.lane.b32.xlu0 %v1810, 126
        %v1920 = vpop.permute.xlu0 %1919
        %1921 = vrot.lane.b32.xlu0 %v1811, 126
        %v1922 = vpop.permute.xlu0 %1921
        %1923 = vrot.lane.b32.xlu0 %v1812, 126
        %v1924 = vpop.permute.xlu0 %1923
        %1925 = vrot.lane.b32.xlu0 %v1813, 126
        %v1926 = vpop.permute.xlu0 %1925
        %1927 = vrot.lane.b32.xlu0 %v1814, 126
        %v1928 = vpop.permute.xlu0 %1927
        %1929 = vrot.lane.b32.xlu0 %v1815, 126
        %v1930 = vpop.permute.xlu0 %1929
        %1931 = vrot.lane.b32.xlu0 %v1816, 126
        %v1932 = vpop.permute.xlu0 %1931
        %vm1933 = vcmask 1031168
        %v1934 = vsel %vm1933, %v1904, %v1906
        %v1935 = vsel %vm1933, %v1906, %v1908
        %v1936 = vsel %vm1933, %v1910, %v1912
        %v1937 = vsel %vm1933, %v1912, %v1914
        %v1938 = vsel %vm1933, %v1916, %v1918
        %v1939 = vsel %vm1933, %v1918, %v1920
        %v1940 = vsel %vm1933, %v1922, %v1924
        %v1941 = vsel %vm1933, %v1924, %v1926
        %v1942 = vsel %vm1933, %v1928, %v1930
        %v1943 = vsel %vm1933, %v1930, %v1932
        %v1959 = vmax.f32 %v1888, %v1934
        %v1960 = vmax.f32 %v1889, %v1935
        %v1961 = vmax.f32 %v1890, %v1908
        %v1962 = vmax.f32 %v1891, %v1936
        %v1963 = vmax.f32 %v1892, %v1937
        %v1964 = vmax.f32 %v1893, %v1914
        %v1965 = vmax.f32 %v1894, %v1938
        %v1966 = vmax.f32 %v1895, %v1939
        %v1967 = vmax.f32 %v1896, %v1920
        %v1968 = vmax.f32 %v1897, %v1940
        %v1969 = vmax.f32 %v1898, %v1941
        %v1970 = vmax.f32 %v1899, %v1926
        %v1971 = vmax.f32 %v1900, %v1942
        %v1972 = vmax.f32 %v1901, %v1943
        %v1973 = vmax.f32 %v1902, %v1932
        %v1974 = vld [vmem:[%s3] sm:$0xff]
        %v1975 = vld [vmem:[%s3 + $0x8] sm:$0xf]
        %vm1976 = vcmask 277504
        %v1978 = vsel %vm1976, %v1974, 0
        %v1981 = vsel %vm1976, %v1975, 0
        %vm1983 = vcmask 1041408
        %v1985 = vsel %vm1983, %v1971, 0
        %v1988 = vsel %vm1983, %v1972, 0
        %v1991 = vsel %vm1983, %v1973, 0
        %1993 = vmatprep.subr.mxu0 %v1960
        %1994 = vmatpush1.msra.mxu0 %v1959
        %1995 = vmatprep.subr.mxu0 %v1963
        %1996 = vmatpush1.msra.mxu0 %v1962
        %1997 = vmatprep.subr.mxu0 %v1966
        %1998 = vmatpush1.msra.mxu0 %v1965
        %1999 = vmatprep.subr.mxu0 %v1969
        %2000 = vmatpush1.msra.mxu0 %v1968
        %2001 = vmatprep.subr.mxu0 %v1988
        %2002 = vmatpush1.msra.mxu0 %v1985
        %2003 = vmatprep.subr.mxu0 0.0
        %2004 = vmatpush1.msra.mxu0 0.0
        %2005 = vmatprep.subr.mxu0 0.0
        %2006 = vmatpush1.msra.mxu0 0.0
        %2007 = vmatprep.subr.mxu0 0.0
        %2008 = vmatpush1.msra.mxu0 0.0
        %2009 = vmatprep.subr.mxu0 0.0
        %2010 = vmatpush1.msra.mxu0 0.0
        %2011 = vmatprep.subr.mxu0 0.0
        %2012 = vmatpush1.msra.mxu0 0.0
        %2013 = vmatprep.subr.mxu0 0.0
        %2014 = vmatpush1.msra.mxu0 0.0
        %2015 = vmatprep.subr.mxu0 0.0
        %2016 = vmatpush1.msra.mxu0 0.0
        %2017 = vmatprep.subr.mxu0 0.0
        %2018 = vmatpush1.msra.mxu0 0.0
        %2019 = vmatprep.subr.mxu0 0.0
        %2020 = vmatpush1.msra.mxu0 0.0
        %2021 = vmatprep.subr.mxu0 0.0
        %2022 = vmatpush1.msra.mxu0 0.0
        %2023 = vmatprep.subr.mxu0 0.0
        %2024 = vmatpush1.msra.mxu0 0.0
        %2025 = vmatprep.subr.mxu0 0.0
        %2026 = vmatpush1.msra.mxu0 0.0
        %2027 = vmatprep.subr.mxu0 0.0
        %2028 = vmatpush1.msra.mxu0 0.0
        %2029 = vmatprep.subr.mxu0 0.0
        %2030 = vmatpush1.msra.mxu0 0.0
        %2031 = vmatprep.subr.mxu0 0.0
        %2032 = vmatpush1.msra.mxu0 0.0
        %2033 = vmatprep.subr.mxu0 0.0
        %2034 = vmatpush1.msra.mxu0 0.0
        %2035 = vmatprep.subr.mxu0 0.0
        %2036 = vmatpush1.msra.mxu0 0.0
        %2037 = vmatprep.subr.mxu0 0.0
        %2038 = vmatpush1.msra.mxu0 0.0
        %2039 = vmatprep.subr.mxu0 0.0
        %2040 = vmatpush1.msra.mxu0 0.0
        %2041 = vmatprep.subr.mxu0 0.0
        %2042 = vmatpush1.msra.mxu0 0.0
        %2043 = vmatprep.subr.mxu0 0.0
        %2044 = vmatpush1.msra.mxu0 0.0
        %2045 = vmatprep.subr.mxu0 0.0
        %2046 = vmatpush1.msra.mxu0 0.0
        %2047 = vmatprep.subr.mxu0 0.0
        %2048 = vmatpush1.msra.mxu0 0.0
        %2049 = vmatprep.subr.mxu0 0.0
        %2050 = vmatpush1.msra.mxu0 0.0
        %2051 = vmatprep.subr.mxu0 0.0
        %2052 = vmatpush1.msra.mxu0 0.0
        %2053 = vmatprep.subr.mxu0 0.0
        %2054 = vmatpush1.msra.mxu0 0.0
        %2055 = vmatprep.subr.mxu0 0.0
        %2056 = vmatpush1.msra.mxu0 0.0
        %2057 = vmatprep.mubr.f32.mxu0 0.0
        %2058 = vmatmul.mubr.f32.gmra.mrb[0].mxu0 %v1978
        %v2059 = vpop.f32.mrb[0].mxu0
        %v2060 = vadd.f32 0.0, %v2059
        %v2061 = vpop.f32.mrb[0].mxu0
        %v2062 = vadd.f32 0.0, %v2061
        %2063 = vmatprep.mubr.f32.mxu0 0.0
        %2064 = vmatmul.mubr.f32.gmra.mrb[0].mxu0 %v1981
        %v2065 = vpop.f32.mrb[0].mxu0
        %v2066 = vadd.f32 0.0, %v2065
        %v2067 = vpop.f32.mrb[0].mxu0
        %v2068 = vadd.f32 0.0, %v2067
        %2069 = vdwg.mxu0
        %2070 = vmatprep.subr.mxu0 0.0
        %2071 = vmatpush1.msra.mxu0 %v1961
        %2072 = vmatprep.subr.mxu0 0.0
        %2073 = vmatpush1.msra.mxu0 %v1964
        %2074 = vmatprep.subr.mxu0 0.0
        %2075 = vmatpush1.msra.mxu0 %v1967
        %2076 = vmatprep.subr.mxu0 0.0
        %2077 = vmatpush1.msra.mxu0 %v1970
        %2078 = vmatprep.subr.mxu0 0.0
        %2079 = vmatpush1.msra.mxu0 %v1991
        %2080 = vmatprep.subr.mxu0 0.0
        %2081 = vmatpush1.msra.mxu0 0.0
        %2082 = vmatprep.subr.mxu0 0.0
        %2083 = vmatpush1.msra.mxu0 0.0
        %2084 = vmatprep.subr.mxu0 0.0
        %2085 = vmatpush1.msra.mxu0 0.0
        %2086 = vmatprep.subr.mxu0 0.0
        %2087 = vmatpush1.msra.mxu0 0.0
        %2088 = vmatprep.subr.mxu0 0.0
        %2089 = vmatpush1.msra.mxu0 0.0
        %2090 = vmatprep.subr.mxu0 0.0
        %2091 = vmatpush1.msra.mxu0 0.0
        %2092 = vmatprep.subr.mxu0 0.0
        %2093 = vmatpush1.msra.mxu0 0.0
        %2094 = vmatprep.subr.mxu0 0.0
        %2095 = vmatpush1.msra.mxu0 0.0
        %2096 = vmatprep.subr.mxu0 0.0
        %2097 = vmatpush1.msra.mxu0 0.0
        %2098 = vmatprep.subr.mxu0 0.0
        %2099 = vmatpush1.msra.mxu0 0.0
        %2100 = vmatprep.subr.mxu0 0.0
        %2101 = vmatpush1.msra.mxu0 0.0
        %2102 = vmatprep.subr.mxu0 0.0
        %2103 = vmatpush1.msra.mxu0 0.0
        %2104 = vmatprep.subr.mxu0 0.0
        %2105 = vmatpush1.msra.mxu0 0.0
        %2106 = vmatprep.subr.mxu0 0.0
        %2107 = vmatpush1.msra.mxu0 0.0
        %2108 = vmatprep.subr.mxu0 0.0
        %2109 = vmatpush1.msra.mxu0 0.0
        %2110 = vmatprep.subr.mxu0 0.0
        %2111 = vmatpush1.msra.mxu0 0.0
        %2112 = vmatprep.subr.mxu0 0.0
        %2113 = vmatpush1.msra.mxu0 0.0
        %2114 = vmatprep.subr.mxu0 0.0
        %2115 = vmatpush1.msra.mxu0 0.0
        %2116 = vmatprep.subr.mxu0 0.0
        %2117 = vmatpush1.msra.mxu0 0.0
        %2118 = vmatprep.subr.mxu0 0.0
        %2119 = vmatpush1.msra.mxu0 0.0
        %2120 = vmatprep.subr.mxu0 0.0
        %2121 = vmatpush1.msra.mxu0 0.0
        %2122 = vmatprep.subr.mxu0 0.0
        %2123 = vmatpush1.msra.mxu0 0.0
        %2124 = vmatprep.subr.mxu0 0.0
        %2125 = vmatpush1.msra.mxu0 0.0
        %2126 = vmatprep.subr.mxu0 0.0
        %2127 = vmatpush1.msra.mxu0 0.0
        %2128 = vmatprep.subr.mxu0 0.0
        %2129 = vmatpush1.msra.mxu0 0.0
        %2130 = vmatprep.subr.mxu0 0.0
        %2131 = vmatpush1.msra.mxu0 0.0
        %2132 = vmatprep.subr.mxu0 0.0
        %2133 = vmatpush1.msra.mxu0 0.0
        %2134 = vmatprep.mubr.f32.mxu0 0.0
        %2135 = vmatmul.mubr.f32.gmra.mrb[0].mxu0 %v1978
        %v2136 = vpop.f32.mrb[0].mxu0
        %v2137 = vadd.f32 0.0, %v2136
        %v2138 = vpop.f32.mrb[0].mxu0
        %2139 = vmatprep.mubr.f32.mxu0 0.0
        %2140 = vmatmul.mubr.f32.gmra.mrb[0].mxu0 %v1981
        %v2141 = vpop.f32.mrb[0].mxu0
        %v2142 = vadd.f32 0.0, %v2141
        %v2143 = vpop.f32.mrb[0].mxu0
        %2144 = vdwg.mxu0
        %v2145 = vld [vmem:[#allocation7] sm:$0xff]
        %v2146 = vld [vmem:[#allocation7 + $0x8] sm:$0xff]
        %v2147 = vld [vmem:[#allocation7 + $0x10] sm:$0xff]
        %v2148 = vld [vmem:[#allocation7 + $0x18] sm:$0xff]
        %v2149 = vld [vmem:[#allocation7 + $0x20] sm:$0xff]
        %v2150 = vld [vmem:[#allocation7 + $0x28] sm:$0xff]
        %v2151 = vld [vmem:[#allocation7 + $0x30] sm:$0xff]
        %v2152 = vld [vmem:[#allocation7 + $0x38] sm:$0xff]
        %v2153 = vld [vmem:[#allocation7 + $0x40] sm:$0xff]
        %v2154 = vld [vmem:[#allocation7 + $0x48] sm:$0xff]
        %v2155 = vld [vmem:[#allocation7 + $0x50] sm:$0xff]
        %v2156 = vld [vmem:[#allocation7 + $0x58] sm:$0xff]
        %v2157 = vld [vmem:[#allocation7 + $0x60] sm:$0xff]
        %v2158 = vld [vmem:[#allocation7 + $0x68] sm:$0xff]
        %v2159 = vld [vmem:[#allocation7 + $0x70] sm:$0xff]
        %v2160 = vld [vmem:[#allocation7 + $0x78] sm:$0xff]
        %v2161 = vld [vmem:[#allocation7 + $0x80] sm:$0xff]
        %v2162 = vld [vmem:[#allocation7 + $0x88] sm:$0xff]
        %v2163 = vld [vmem:[#allocation7 + $0x90] sm:$0xff]
        %v2164 = vld [vmem:[#allocation7 + $0x98] sm:$0xff]
        %v2165 = vld [vmem:[#allocation7 + $0xa0] sm:$0xff]
        %v2166 = vld [vmem:[#allocation7 + $0xa8] sm:$0xff]
        %v2167 = vld [vmem:[#allocation7 + $0xb0] sm:$0xff]
        %v2168 = vld [vmem:[#allocation7 + $0xb8] sm:$0xff]
        %v2169 = vld [vmem:[#allocation7 + $0xc0] sm:$0xff]
        %v2170 = vld [vmem:[#allocation7 + $0xc8] sm:$0xff]
        %v2171 = vld [vmem:[#allocation7 + $0xd0] sm:$0xff]
        %v2172 = vld [vmem:[#allocation7 + $0xd8] sm:$0xff]
        %v2173 = vld [vmem:[#allocation7 + $0xe0] sm:$0xff]
        %v2174 = vld [vmem:[#allocation7 + $0xe8] sm:$0xff]
        %v2175 = vld [vmem:[#allocation7 + $0xf0] sm:$0xff]
        %v2176 = vld [vmem:[#allocation7 + $0xf8] sm:$0xff]
        %v2177 = vld [vmem:[#allocation7 + $0x100] sm:$0xff]
        %v2178 = vld [vmem:[#allocation7 + $0x108] sm:$0xff]
        %v2179 = vld [vmem:[#allocation7 + $0x110] sm:$0xff]
        %v2180 = vld [vmem:[#allocation7 + $0x118] sm:$0xff]
        %v2181 = vld [vmem:[#allocation7 + $0x120] sm:$0xff]
        %v2182 = vld [vmem:[#allocation7 + $0x128] sm:$0xff]
        %v2183 = vld [vmem:[#allocation7 + $0x130] sm:$0xff]
        %v2184 = vld [vmem:[#allocation7 + $0x138] sm:$0xff]
        %v2185 = vld [vmem:[#allocation7 + $0x140] sm:$0x3]
        %vm2186 = vcmask 539648
        %v2188 = vsel %vm2186, %v2137, 0
        %v2191 = vsel %vm2186, %v2142, 0
        %v2194 = vsel %vm1983, %v2185, 0
        %2196 = vmatprep.subr.mxu0 0.0
        %2197 = vmatpush1.msra.mxu0 %v2145
        %2198 = vmatprep.subr.mxu0 0.0
        %2199 = vmatpush1.msra.mxu0 %v2146
        %2200 = vmatprep.subr.mxu0 0.0
        %2201 = vmatpush1.msra.mxu0 %v2147
        %2202 = vmatprep.subr.mxu0 0.0
        %2203 = vmatpush1.msra.mxu0 %v2148
        %2204 = vmatprep.subr.mxu0 0.0
        %2205 = vmatpush1.msra.mxu0 %v2149
        %2206 = vmatprep.subr.mxu0 0.0
        %2207 = vmatpush1.msra.mxu0 %v2150
        %2208 = vmatprep.subr.mxu0 0.0
        %2209 = vmatpush1.msra.mxu0 %v2151
        %2210 = vmatprep.subr.mxu0 0.0
        %2211 = vmatpush1.msra.mxu0 %v2152
        %2212 = vmatprep.subr.mxu0 0.0
        %2213 = vmatpush1.msra.mxu0 %v2153
        %2214 = vmatprep.subr.mxu0 0.0
        %2215 = vmatpush1.msra.mxu0 %v2154
        %2216 = vmatprep.subr.mxu0 0.0
        %2217 = vmatpush1.msra.mxu0 %v2155
        %2218 = vmatprep.subr.mxu0 0.0
        %2219 = vmatpush1.msra.mxu0 %v2156
        %2220 = vmatprep.subr.mxu0 0.0
        %2221 = vmatpush1.msra.mxu0 %v2157
        %2222 = vmatprep.subr.mxu0 0.0
        %2223 = vmatpush1.msra.mxu0 %v2158
        %2224 = vmatprep.subr.mxu0 0.0
        %2225 = vmatpush1.msra.mxu0 %v2159
        %2226 = vmatprep.subr.mxu0 0.0
        %2227 = vmatpush1.msra.mxu0 %v2160
        %2228 = vmatprep.subr.mxu0 0.0
        %2229 = vmatpush1.msra.mxu0 %v2161
        %2230 = vmatprep.subr.mxu0 0.0
        %2231 = vmatpush1.msra.mxu0 %v2162
        %2232 = vmatprep.subr.mxu0 0.0
        %2233 = vmatpush1.msra.mxu0 %v2163
        %2234 = vmatprep.subr.mxu0 0.0
        %2235 = vmatpush1.msra.mxu0 %v2164
        %2236 = vmatprep.subr.mxu0 0.0
        %2237 = vmatpush1.msra.mxu0 %v2165
        %2238 = vmatprep.subr.mxu0 0.0
        %2239 = vmatpush1.msra.mxu0 %v2166
        %2240 = vmatprep.subr.mxu0 0.0
        %2241 = vmatpush1.msra.mxu0 %v2167
        %2242 = vmatprep.subr.mxu0 0.0
        %2243 = vmatpush1.msra.mxu0 %v2168
        %2244 = vmatprep.subr.mxu0 0.0
        %2245 = vmatpush1.msra.mxu0 %v2169
        %2246 = vmatprep.subr.mxu0 0.0
        %2247 = vmatpush1.msra.mxu0 %v2170
        %2248 = vmatprep.subr.mxu0 0.0
        %2249 = vmatpush1.msra.mxu0 %v2171
        %2250 = vmatprep.subr.mxu0 0.0
        %2251 = vmatpush1.msra.mxu0 %v2172
        %2252 = vmatprep.subr.mxu0 0.0
        %2253 = vmatpush1.msra.mxu0 %v2173
        %2254 = vmatprep.subr.mxu0 0.0
        %2255 = vmatpush1.msra.mxu0 %v2174
        %2256 = vmatprep.subr.mxu0 0.0
        %2257 = vmatpush1.msra.mxu0 %v2175
        %2258 = vmatprep.subr.mxu0 0.0
        %2259 = vmatpush1.msra.mxu0 %v2176
        %2260 = vmatprep.mubr.f32.mxu0 %v2062
        %2261 = vmatmul.mubr.f32.gmra.mrb[0].mxu0 %v2060
        %v2262 = vpop.f32.mrb[0].mxu0
        %v2263 = vadd.f32 0.0, %v2262
        %v2264 = vpop.f32.mrb[0].mxu0
        %2265 = vmatprep.mubr.f32.mxu0 %v2068
        %2266 = vmatmul.mubr.f32.gmra.mrb[0].mxu0 %v2066
        %v2267 = vpop.f32.mrb[0].mxu0
        %v2268 = vadd.f32 0.0, %v2267
        %v2269 = vpop.f32.mrb[0].mxu0
        %2270 = vdwg.mxu0
        %2271 = vmatprep.subr.mxu0 0.0
        %2272 = vmatpush1.msra.mxu0 %v2177
        %2273 = vmatprep.subr.mxu0 0.0
        %2274 = vmatpush1.msra.mxu0 %v2178
        %2275 = vmatprep.subr.mxu0 0.0
        %2276 = vmatpush1.msra.mxu0 %v2179
        %2277 = vmatprep.subr.mxu0 0.0
        %2278 = vmatpush1.msra.mxu0 %v2180
        %2279 = vmatprep.subr.mxu0 0.0
        %2280 = vmatpush1.msra.mxu0 %v2181
        %2281 = vmatprep.subr.mxu0 0.0
        %2282 = vmatpush1.msra.mxu0 %v2182
        %2283 = vmatprep.subr.mxu0 0.0
        %2284 = vmatpush1.msra.mxu0 %v2183
        %2285 = vmatprep.subr.mxu0 0.0
        %2286 = vmatpush1.msra.mxu0 %v2184
        %2287 = vmatprep.subr.mxu0 0.0
        %2288 = vmatpush1.msra.mxu0 %v2194
        %2289 = vmatprep.subr.mxu0 0.0
        %2290 = vmatpush1.msra.mxu0 0.0
        %2291 = vmatprep.subr.mxu0 0.0
        %2292 = vmatpush1.msra.mxu0 0.0
        %2293 = vmatprep.subr.mxu0 0.0
        %2294 = vmatpush1.msra.mxu0 0.0
        %2295 = vmatprep.subr.mxu0 0.0
        %2296 = vmatpush1.msra.mxu0 0.0
        %2297 = vmatprep.subr.mxu0 0.0
        %2298 = vmatpush1.msra.mxu0 0.0
        %2299 = vmatprep.subr.mxu0 0.0
        %2300 = vmatpush1.msra.mxu0 0.0
        %2301 = vmatprep.subr.mxu0 0.0
        %2302 = vmatpush1.msra.mxu0 0.0
        %2303 = vmatprep.subr.mxu0 0.0
        %2304 = vmatpush1.msra.mxu0 0.0
        %2305 = vmatprep.subr.mxu0 0.0
        %2306 = vmatpush1.msra.mxu0 0.0
        %2307 = vmatprep.subr.mxu0 0.0
        %2308 = vmatpush1.msra.mxu0 0.0
        %2309 = vmatprep.subr.mxu0 0.0
        %2310 = vmatpush1.msra.mxu0 0.0
        %2311 = vmatprep.subr.mxu0 0.0
        %2312 = vmatpush1.msra.mxu0 0.0
        %2313 = vmatprep.subr.mxu0 0.0
        %2314 = vmatpush1.msra.mxu0 0.0
        %2315 = vmatprep.subr.mxu0 0.0
        %2316 = vmatpush1.msra.mxu0 0.0
        %2317 = vmatprep.subr.mxu0 0.0
        %2318 = vmatpush1.msra.mxu0 0.0
        %2319 = vmatprep.subr.mxu0 0.0
        %2320 = vmatpush1.msra.mxu0 0.0
        %2321 = vmatprep.subr.mxu0 0.0
        %2322 = vmatpush1.msra.mxu0 0.0
        %2323 = vmatprep.subr.mxu0 0.0
        %2324 = vmatpush1.msra.mxu0 0.0
        %2325 = vmatprep.subr.mxu0 0.0
        %2326 = vmatpush1.msra.mxu0 0.0
        %2327 = vmatprep.subr.mxu0 0.0
        %2328 = vmatpush1.msra.mxu0 0.0
        %2329 = vmatprep.subr.mxu0 0.0
        %2330 = vmatpush1.msra.mxu0 0.0
        %2331 = vmatprep.subr.mxu0 0.0
        %2332 = vmatpush1.msra.mxu0 0.0
        %2333 = vmatprep.subr.mxu0 0.0
        %2334 = vmatpush1.msra.mxu0 0.0
        %2335 = vmatprep.mubr.f32.mxu0 0.0
        %2336 = vmatmul.mubr.f32.gmra.mrb[0].mxu0 %v2188
        %v2337 = vpop.f32.mrb[0].mxu0
        %v2338 = vadd.f32 %v2263, %v2337
        %v2339 = vpop.f32.mrb[0].mxu0
        %2340 = vmatprep.mubr.f32.mxu0 0.0
        %2341 = vmatmul.mubr.f32.gmra.mrb[0].mxu0 %v2191
        %v2342 = vpop.f32.mrb[0].mxu0
        %v2343 = vadd.f32 %v2268, %v2342
        %v2344 = vpop.f32.mrb[0].mxu0
        %2345 = vdwg.mxu0
        %v2346 = vld [vmem:[#allocation8] sm:$0xff]
        %v2347 = vld [vmem:[#allocation8 + $0x8] sm:$0xff]
        %v2348 = vld [vmem:[#allocation8 + $0x10] sm:$0xff]
        %v2349 = vld [vmem:[#allocation8 + $0x18] sm:$0xff]
        %v2350 = vld [vmem:[#allocation8 + $0x20] sm:$0xff]
        %v2351 = vld [vmem:[#allocation8 + $0x28] sm:$0xff]
        %v2352 = vld [vmem:[#allocation8 + $0x30] sm:$0xff]
        %v2353 = vld [vmem:[#allocation8 + $0x38] sm:$0xff]
        %v2354 = vld [vmem:[#allocation8 + $0x40] sm:$0xff]
        %v2355 = vld [vmem:[#allocation8 + $0x48] sm:$0xff]
        %v2356 = vld [vmem:[#allocation8 + $0x50] sm:$0xff]
        %v2357 = vld [vmem:[#allocation8 + $0x58] sm:$0xff]
        %v2358 = vld [vmem:[#allocation8 + $0x60] sm:$0xff]
        %v2359 = vld [vmem:[#allocation8 + $0x68] sm:$0xf]
        %s2360 = scalar_lea.vmem [#allocation8], 112
        %v2361 = vld [vmem:[%s2360] sm:$0xff]
        %v2362 = vld [vmem:[%s2360 + $0x8] sm:$0xff]
        %v2363 = vld [vmem:[%s2360 + $0x10] sm:$0xff]
        %v2364 = vld [vmem:[%s2360 + $0x18] sm:$0xff]
        %v2365 = vld [vmem:[%s2360 + $0x20] sm:$0xff]
        %v2366 = vld [vmem:[%s2360 + $0x28] sm:$0xff]
        %v2367 = vld [vmem:[%s2360 + $0x30] sm:$0xff]
        %v2368 = vld [vmem:[%s2360 + $0x38] sm:$0xff]
        %v2369 = vld [vmem:[%s2360 + $0x40] sm:$0xff]
        %v2370 = vld [vmem:[%s2360 + $0x48] sm:$0xff]
        %v2371 = vld [vmem:[%s2360 + $0x50] sm:$0xff]
        %v2372 = vld [vmem:[%s2360 + $0x58] sm:$0xff]
        %v2373 = vld [vmem:[%s2360 + $0x60] sm:$0xff]
        %v2374 = vld [vmem:[%s2360 + $0x68] sm:$0xf]
        %v2377 = vrot.slane %v2338, 1
        %v2378 = vrot.slane %v2343, 1
        %v2379 = vsel %vm1701, %v2377, %v2378
        %vm2380 = vcmask 883712
        %v2381 = vsel %vm2380, %v2379, 0
        %v2383 = vsel %vm2380, %v2378, 0
        %vm2385 = vcmask 1043456
        %v2387 = vsel %vm2385, %v2374, 0
        %2389 = vmatprep.subr.mxu0 0.0
        %2390 = vmatpush1.msra.mxu0 %v2361
        %2391 = vmatprep.subr.mxu0 0.0
        %2392 = vmatpush1.msra.mxu0 %v2362
        %2393 = vmatprep.subr.mxu0 0.0
        %2394 = vmatpush1.msra.mxu0 %v2363
        %2395 = vmatprep.subr.mxu0 0.0
        %2396 = vmatpush1.msra.mxu0 %v2364
        %2397 = vmatprep.subr.mxu0 0.0
        %2398 = vmatpush1.msra.mxu0 %v2365
        %2399 = vmatprep.subr.mxu0 0.0
        %2400 = vmatpush1.msra.mxu0 %v2366
        %2401 = vmatprep.subr.mxu0 0.0
        %2402 = vmatpush1.msra.mxu0 %v2367
        %2403 = vmatprep.subr.mxu0 0.0
        %2404 = vmatpush1.msra.mxu0 %v2368
        %2405 = vmatprep.subr.mxu0 0.0
        %2406 = vmatpush1.msra.mxu0 %v2369
        %2407 = vmatprep.subr.mxu0 0.0
        %2408 = vmatpush1.msra.mxu0 %v2370
        %2409 = vmatprep.subr.mxu0 0.0
        %2410 = vmatpush1.msra.mxu0 %v2371
        %2411 = vmatprep.subr.mxu0 0.0
        %2412 = vmatpush1.msra.mxu0 %v2372
        %2413 = vmatprep.subr.mxu0 0.0
        %2414 = vmatpush1.msra.mxu0 %v2373
        %2415 = vmatprep.subr.mxu0 0.0
        %2416 = vmatpush1.msra.mxu0 %v2387
        %2417 = vmatprep.subr.mxu0 0.0
        %2418 = vmatpush1.msra.mxu0 0.0
        %2419 = vmatprep.subr.mxu0 0.0
        %2420 = vmatpush1.msra.mxu0 0.0
        %2421 = vmatprep.subr.mxu0 0.0
        %2422 = vmatpush1.msra.mxu0 0.0
        %2423 = vmatprep.subr.mxu0 0.0
        %2424 = vmatpush1.msra.mxu0 0.0
        %2425 = vmatprep.subr.mxu0 0.0
        %2426 = vmatpush1.msra.mxu0 0.0
        %2427 = vmatprep.subr.mxu0 0.0
        %2428 = vmatpush1.msra.mxu0 0.0
        %2429 = vmatprep.subr.mxu0 0.0
        %2430 = vmatpush1.msra.mxu0 0.0
        %2431 = vmatprep.subr.mxu0 0.0
        %2432 = vmatpush1.msra.mxu0 0.0
        %2433 = vmatprep.subr.mxu0 0.0
        %2434 = vmatpush1.msra.mxu0 0.0
        %2435 = vmatprep.subr.mxu0 0.0
        %2436 = vmatpush1.msra.mxu0 0.0
        %2437 = vmatprep.subr.mxu0 0.0
        %2438 = vmatpush1.msra.mxu0 0.0
        %2439 = vmatprep.subr.mxu0 0.0
        %2440 = vmatpush1.msra.mxu0 0.0
        %2441 = vmatprep.subr.mxu0 0.0
        %2442 = vmatpush1.msra.mxu0 0.0
        %2443 = vmatprep.subr.mxu0 0.0
        %2444 = vmatpush1.msra.mxu0 0.0
        %2445 = vmatprep.subr.mxu0 0.0
        %2446 = vmatpush1.msra.mxu0 0.0
        %2447 = vmatprep.subr.mxu0 0.0
        %2448 = vmatpush1.msra.mxu0 0.0
        %2449 = vmatprep.subr.mxu0 0.0
        %2450 = vmatpush1.msra.mxu0 0.0
        %2451 = vmatprep.subr.mxu0 0.0
        %2452 = vmatpush1.msra.mxu0 0.0
        %2453 = vmatprep.mubr.f32.mxu0 0.0
        %2454 = vmatmul.mubr.f32.gmra.mrb[0].mxu0 %v2381
        %v2455 = vpop.f32.mrb[0].mxu0
        %v2456 = vadd.f32 0.0, %v2455
        %v2457 = vpop.f32.mrb[0].mxu0
        %2458 = vmatprep.mubr.f32.mxu0 0.0
        %2459 = vmatmul.mubr.f32.gmra.mrb[0].mxu0 %v2383
        %v2460 = vpop.f32.mrb[0].mxu0
        %v2461 = vadd.f32 0.0, %v2460
        %v2462 = vpop.f32.mrb[0].mxu0
        %2463 = vdwg.mxu0
        %v2464 = vsel %vm2380, %v2338, 0
        %v2466 = vsel %vm2380, %v2343, 0
        %v2469 = vsel %vm2385, %v2359, 0
        %2471 = vmatprep.subr.mxu0 0.0
        %2472 = vmatpush1.msra.mxu0 %v2346
        %2473 = vmatprep.subr.mxu0 0.0
        %2474 = vmatpush1.msra.mxu0 %v2347
        %2475 = vmatprep.subr.mxu0 0.0
        %2476 = vmatpush1.msra.mxu0 %v2348
        %2477 = vmatprep.subr.mxu0 0.0
        %2478 = vmatpush1.msra.mxu0 %v2349
        %2479 = vmatprep.subr.mxu0 0.0
        %2480 = vmatpush1.msra.mxu0 %v2350
        %2481 = vmatprep.subr.mxu0 0.0
        %2482 = vmatpush1.msra.mxu0 %v2351
        %2483 = vmatprep.subr.mxu0 0.0
        %2484 = vmatpush1.msra.mxu0 %v2352
        %2485 = vmatprep.subr.mxu0 0.0
        %2486 = vmatpush1.msra.mxu0 %v2353
        %2487 = vmatprep.subr.mxu0 0.0
        %2488 = vmatpush1.msra.mxu0 %v2354
        %2489 = vmatprep.subr.mxu0 0.0
        %2490 = vmatpush1.msra.mxu0 %v2355
        %2491 = vmatprep.subr.mxu0 0.0
        %2492 = vmatpush1.msra.mxu0 %v2356
        %2493 = vmatprep.subr.mxu0 0.0
        %2494 = vmatpush1.msra.mxu0 %v2357
        %2495 = vmatprep.subr.mxu0 0.0
        %2496 = vmatpush1.msra.mxu0 %v2358
        %2497 = vmatprep.subr.mxu0 0.0
        %2498 = vmatpush1.msra.mxu0 %v2469
        %2499 = vmatprep.subr.mxu0 0.0
        %2500 = vmatpush1.msra.mxu0 0.0
        %2501 = vmatprep.subr.mxu0 0.0
        %2502 = vmatpush1.msra.mxu0 0.0
        %2503 = vmatprep.subr.mxu0 0.0
        %2504 = vmatpush1.msra.mxu0 0.0
        %2505 = vmatprep.subr.mxu0 0.0
        %2506 = vmatpush1.msra.mxu0 0.0
        %2507 = vmatprep.subr.mxu0 0.0
        %2508 = vmatpush1.msra.mxu0 0.0
        %2509 = vmatprep.subr.mxu0 0.0
        %2510 = vmatpush1.msra.mxu0 0.0
        %2511 = vmatprep.subr.mxu0 0.0
        %2512 = vmatpush1.msra.mxu0 0.0
        %2513 = vmatprep.subr.mxu0 0.0
        %2514 = vmatpush1.msra.mxu0 0.0
        %2515 = vmatprep.subr.mxu0 0.0
        %2516 = vmatpush1.msra.mxu0 0.0
        %2517 = vmatprep.subr.mxu0 0.0
        %2518 = vmatpush1.msra.mxu0 0.0
        %2519 = vmatprep.subr.mxu0 0.0
        %2520 = vmatpush1.msra.mxu0 0.0
        %2521 = vmatprep.subr.mxu0 0.0
        %2522 = vmatpush1.msra.mxu0 0.0
        %2523 = vmatprep.subr.mxu0 0.0
        %2524 = vmatpush1.msra.mxu0 0.0
        %2525 = vmatprep.subr.mxu0 0.0
        %2526 = vmatpush1.msra.mxu0 0.0
        %2527 = vmatprep.subr.mxu0 0.0
        %2528 = vmatpush1.msra.mxu0 0.0
        %2529 = vmatprep.subr.mxu0 0.0
        %2530 = vmatpush1.msra.mxu0 0.0
        %2531 = vmatprep.subr.mxu0 0.0
        %2532 = vmatpush1.msra.mxu0 0.0
        %2533 = vmatprep.subr.mxu0 0.0
        %2534 = vmatpush1.msra.mxu0 0.0
        %2535 = vmatprep.mubr.f32.mxu0 0.0
        %2536 = vmatmul.mubr.f32.gmra.mrb[0].mxu0 %v2464
        %v2537 = vpop.f32.mrb[0].mxu0
        %v2538 = vadd.f32 %v2456, %v2537
        %v2539 = vpop.f32.mrb[0].mxu0
        %2540 = vmatprep.mubr.f32.mxu0 0.0
        %2541 = vmatmul.mubr.f32.gmra.mrb[0].mxu0 %v2466
        %v2542 = vpop.f32.mrb[0].mxu0
        %v2543 = vadd.f32 %v2461, %v2542
        %v2544 = vpop.f32.mrb[0].mxu0
        %2545 = vdwg.mxu0
        %s2546 = scalar_lea.vmem [#allocation8], 224
        %v2547 = vld [vmem:[%s2546] sm:$0xff]
        %v2548 = vld [vmem:[%s2546 + $0x8] sm:$0xff]
        %v2549 = vld [vmem:[%s2546 + $0x10] sm:$0xff]
        %v2550 = vld [vmem:[%s2546 + $0x18] sm:$0xff]
        %v2551 = vld [vmem:[%s2546 + $0x20] sm:$0xff]
        %v2552 = vld [vmem:[%s2546 + $0x28] sm:$0xff]
        %v2553 = vld [vmem:[%s2546 + $0x30] sm:$0xff]
        %v2554 = vld [vmem:[%s2546 + $0x38] sm:$0xff]
        %v2555 = vld [vmem:[%s2546 + $0x40] sm:$0xff]
        %v2556 = vld [vmem:[%s2546 + $0x48] sm:$0xff]
        %v2557 = vld [vmem:[%s2546 + $0x50] sm:$0xff]
        %v2558 = vld [vmem:[%s2546 + $0x58] sm:$0xff]
        %v2559 = vld [vmem:[%s2546 + $0x60] sm:$0xff]
        %v2560 = vld [vmem:[%s2546 + $0x68] sm:$0xf]
        %v2561 = vrot.slane %v2338, 2
        %v2562 = vrot.slane %v2343, 2
        %v2563 = vsel %vm1759, %v2561, %v2562
        %v2564 = vsel %vm2380, %v2563, 0
        %v2566 = vsel %vm2380, %v2562, 0
        %v2569 = vsel %vm2385, %v2560, 0
        %2571 = vmatprep.subr.mxu0 0.0
        %2572 = vmatpush1.msra.mxu0 %v2547
        %2573 = vmatprep.subr.mxu0 0.0
        %2574 = vmatpush1.msra.mxu0 %v2548
        %2575 = vmatprep.subr.mxu0 0.0
        %2576 = vmatpush1.msra.mxu0 %v2549
        %2577 = vmatprep.subr.mxu0 0.0
        %2578 = vmatpush1.msra.mxu0 %v2550
        %2579 = vmatprep.subr.mxu0 0.0
        %2580 = vmatpush1.msra.mxu0 %v2551
        %2581 = vmatprep.subr.mxu0 0.0
        %2582 = vmatpush1.msra.mxu0 %v2552
        %2583 = vmatprep.subr.mxu0 0.0
        %2584 = vmatpush1.msra.mxu0 %v2553
        %2585 = vmatprep.subr.mxu0 0.0
        %2586 = vmatpush1.msra.mxu0 %v2554
        %2587 = vmatprep.subr.mxu0 0.0
        %2588 = vmatpush1.msra.mxu0 %v2555
        %2589 = vmatprep.subr.mxu0 0.0
        %2590 = vmatpush1.msra.mxu0 %v2556
        %2591 = vmatprep.subr.mxu0 0.0
        %2592 = vmatpush1.msra.mxu0 %v2557
        %2593 = vmatprep.subr.mxu0 0.0
        %2594 = vmatpush1.msra.mxu0 %v2558
        %2595 = vmatprep.subr.mxu0 0.0
        %2596 = vmatpush1.msra.mxu0 %v2559
        %2597 = vmatprep.subr.mxu0 0.0
        %2598 = vmatpush1.msra.mxu0 %v2569
        %2599 = vmatprep.subr.mxu0 0.0
        %2600 = vmatpush1.msra.mxu0 0.0
        %2601 = vmatprep.subr.mxu0 0.0
        %2602 = vmatpush1.msra.mxu0 0.0
        %2603 = vmatprep.subr.mxu0 0.0
        %2604 = vmatpush1.msra.mxu0 0.0
        %2605 = vmatprep.subr.mxu0 0.0
        %2606 = vmatpush1.msra.mxu0 0.0
        %2607 = vmatprep.subr.mxu0 0.0
        %2608 = vmatpush1.msra.mxu0 0.0
        %2609 = vmatprep.subr.mxu0 0.0
        %2610 = vmatpush1.msra.mxu0 0.0
        %2611 = vmatprep.subr.mxu0 0.0
        %2612 = vmatpush1.msra.mxu0 0.0
        %2613 = vmatprep.subr.mxu0 0.0
        %2614 = vmatpush1.msra.mxu0 0.0
        %2615 = vmatprep.subr.mxu0 0.0
        %2616 = vmatpush1.msra.mxu0 0.0
        %2617 = vmatprep.subr.mxu0 0.0
        %2618 = vmatpush1.msra.mxu0 0.0
        %2619 = vmatprep.subr.mxu0 0.0
        %2620 = vmatpush1.msra.mxu0 0.0
        %2621 = vmatprep.subr.mxu0 0.0
        %2622 = vmatpush1.msra.mxu0 0.0
        %2623 = vmatprep.subr.mxu0 0.0
        %2624 = vmatpush1.msra.mxu0 0.0
        %2625 = vmatprep.subr.mxu0 0.0
        %2626 = vmatpush1.msra.mxu0 0.0
        %2627 = vmatprep.subr.mxu0 0.0
        %2628 = vmatpush1.msra.mxu0 0.0
        %2629 = vmatprep.subr.mxu0 0.0
        %2630 = vmatpush1.msra.mxu0 0.0
        %2631 = vmatprep.subr.mxu0 0.0
        %2632 = vmatpush1.msra.mxu0 0.0
        %2633 = vmatprep.subr.mxu0 0.0
        %2634 = vmatpush1.msra.mxu0 0.0
        %2635 = vmatprep.mubr.f32.mxu0 0.0
        %2636 = vmatmul.mubr.f32.gmra.mrb[0].mxu0 %v2564
        %v2637 = vpop.f32.mrb[0].mxu0
        %v2638 = vadd.f32 0.0, %v2637
        %v2639 = vpop.f32.mrb[0].mxu0
        %2640 = vmatprep.mubr.f32.mxu0 0.0
        %2641 = vmatmul.mubr.f32.gmra.mrb[0].mxu0 %v2566
        %v2642 = vpop.f32.mrb[0].mxu0
        %v2643 = vadd.f32 0.0, %v2642
        %v2644 = vpop.f32.mrb[0].mxu0
        %2645 = vdwg.mxu0
        %v2646 = vadd.f32 %v2538, %v2638
        %v2647 = vadd.f32 %v2543, %v2643
        %s2648 = scalar_lea.vmem [#allocation8], 336
        %v2649 = vld [vmem:[%s2648] sm:$0xff]
        %v2650 = vld [vmem:[%s2648 + $0x8] sm:$0xff]
        %v2651 = vld [vmem:[%s2648 + $0x10] sm:$0xff]
        %v2652 = vld [vmem:[%s2648 + $0x18] sm:$0xff]
        %v2653 = vld [vmem:[%s2648 + $0x20] sm:$0xff]
        %v2654 = vld [vmem:[%s2648 + $0x28] sm:$0xff]
        %v2655 = vld [vmem:[%s2648 + $0x30] sm:$0xff]
        %v2656 = vld [vmem:[%s2648 + $0x38] sm:$0xff]
        %v2657 = vld [vmem:[%s2648 + $0x40] sm:$0xff]
        %v2658 = vld [vmem:[%s2648 + $0x48] sm:$0xff]
        %v2659 = vld [vmem:[%s2648 + $0x50] sm:$0xff]
        %v2660 = vld [vmem:[%s2648 + $0x58] sm:$0xff]
        %v2661 = vld [vmem:[%s2648 + $0x60] sm:$0xff]
        %v2662 = vld [vmem:[%s2648 + $0x68] sm:$0xf]
        %vm2663 = vcmask 1044480
        %v2664 = vrot.slane %v2338, 3
        %v2665 = vrot.slane %v2343, 3
        %v2666 = vsel %vm2663, %v2664, %v2665
        %v2667 = vsel %vm2380, %v2666, 0
        %v2669 = vsel %vm2380, %v2665, 0
        %v2672 = vsel %vm2385, %v2662, 0
        %2674 = vmatprep.subr.mxu0 0.0
        %2675 = vmatpush1.msra.mxu0 %v2649
        %2676 = vmatprep.subr.mxu0 0.0
        %2677 = vmatpush1.msra.mxu0 %v2650
        %2678 = vmatprep.subr.mxu0 0.0
        %2679 = vmatpush1.msra.mxu0 %v2651
        %2680 = vmatprep.subr.mxu0 0.0
        %2681 = vmatpush1.msra.mxu0 %v2652
        %2682 = vmatprep.subr.mxu0 0.0
        %2683 = vmatpush1.msra.mxu0 %v2653
        %2684 = vmatprep.subr.mxu0 0.0
        %2685 = vmatpush1.msra.mxu0 %v2654
        %2686 = vmatprep.subr.mxu0 0.0
        %2687 = vmatpush1.msra.mxu0 %v2655
        %2688 = vmatprep.subr.mxu0 0.0
        %2689 = vmatpush1.msra.mxu0 %v2656
        %2690 = vmatprep.subr.mxu0 0.0
        %2691 = vmatpush1.msra.mxu0 %v2657
        %2692 = vmatprep.subr.mxu0 0.0
        %2693 = vmatpush1.msra.mxu0 %v2658
        %2694 = vmatprep.subr.mxu0 0.0
        %2695 = vmatpush1.msra.mxu0 %v2659
        %2696 = vmatprep.subr.mxu0 0.0
        %2697 = vmatpush1.msra.mxu0 %v2660
        %2698 = vmatprep.subr.mxu0 0.0
        %2699 = vmatpush1.msra.mxu0 %v2661
        %2700 = vmatprep.subr.mxu0 0.0
        %2701 = vmatpush1.msra.mxu0 %v2672
        %2702 = vmatprep.subr.mxu0 0.0
        %2703 = vmatpush1.msra.mxu0 0.0
        %2704 = vmatprep.subr.mxu0 0.0
        %2705 = vmatpush1.msra.mxu0 0.0
        %2706 = vmatprep.subr.mxu0 0.0
        %2707 = vmatpush1.msra.mxu0 0.0
        %2708 = vmatprep.subr.mxu0 0.0
        %2709 = vmatpush1.msra.mxu0 0.0
        %2710 = vmatprep.subr.mxu0 0.0
        %2711 = vmatpush1.msra.mxu0 0.0
        %2712 = vmatprep.subr.mxu0 0.0
        %2713 = vmatpush1.msra.mxu0 0.0
        %2714 = vmatprep.subr.mxu0 0.0
        %2715 = vmatpush1.msra.mxu0 0.0
        %2716 = vmatprep.subr.mxu0 0.0
        %2717 = vmatpush1.msra.mxu0 0.0
        %2718 = vmatprep.subr.mxu0 0.0
        %2719 = vmatpush1.msra.mxu0 0.0
        %2720 = vmatprep.subr.mxu0 0.0
        %2721 = vmatpush1.msra.mxu0 0.0
        %2722 = vmatprep.subr.mxu0 0.0
        %2723 = vmatpush1.msra.mxu0 0.0
        %2724 = vmatprep.subr.mxu0 0.0
        %2725 = vmatpush1.msra.mxu0 0.0
        %2726 = vmatprep.subr.mxu0 0.0
        %2727 = vmatpush1.msra.mxu0 0.0
        %2728 = vmatprep.subr.mxu0 0.0
        %2729 = vmatpush1.msra.mxu0 0.0
        %2730 = vmatprep.subr.mxu0 0.0
        %2731 = vmatpush1.msra.mxu0 0.0
        %2732 = vmatprep.subr.mxu0 0.0
        %2733 = vmatpush1.msra.mxu0 0.0
        %2734 = vmatprep.subr.mxu0 0.0
        %2735 = vmatpush1.msra.mxu0 0.0
        %2736 = vmatprep.subr.mxu0 0.0
        %2737 = vmatpush1.msra.mxu0 0.0
        %2738 = vmatprep.mubr.f32.mxu0 0.0
        %2739 = vmatmul.mubr.f32.gmra.mrb[0].mxu0 %v2667
        %v2740 = vpop.f32.mrb[0].mxu0
        %v2741 = vadd.f32 0.0, %v2740
        %v2742 = vpop.f32.mrb[0].mxu0
        %2743 = vmatprep.mubr.f32.mxu0 0.0
        %2744 = vmatmul.mubr.f32.gmra.mrb[0].mxu0 %v2669
        %v2745 = vpop.f32.mrb[0].mxu0
        %v2746 = vadd.f32 0.0, %v2745
        %v2747 = vpop.f32.mrb[0].mxu0
        %2748 = vdwg.mxu0
        %v2749 = vadd.f32 %v2646, %v2741
        %v2750 = vadd.f32 %v2647, %v2746
        %v2751 = vld [vmem:[%s6] sm:$0x1]
        %v2753 = vlaneseq
        %v2754 = vshrl.u32 %v2753, 7
        %v2755 = vsub.s32 0, %v2754
        %v2756 = vrot.slane %v2751, %v2755
        %v2758 = vadd.f32 %v2749, %v2756
        %v2759 = vadd.f32 %v2750, %v2756
        %v2760 = vmax.f32 %v2758, 0.0
        %v2761 = vmax.f32 %v2759, 0.0
        %v2763 = vrot.slane %v2760, 1
        %v2765 = vmax.f32 %v2760, %v2763
        %v2767 = vrot.slane %v2760, 2
        %v2768 = vrot.slane %v2761, 2
        %v2769 = vsel %vm1759, %v2767, %v2768
        %v2771 = vmax.f32 %v2765, %v2769
        %2773 = vrot.lane.b32.xlu0 %v2771, 127
        %v2774 = vpop.permute.xlu0 %2773
        %v2776 = vmax.f32 %v2771, %v2774
        %2777 = vrot.lane.b32.xlu0 %v2771, 126
        %v2778 = vpop.permute.xlu0 %2777
        %v2780 = vmax.f32 %v2776, %v2778
        %v2781 = vld [vmem:[%s7] sm:$0x7]
        %vm2782 = vcmask 56320
        %v2784 = vsel %vm2782, %v2781, 0
        %v2787 = vsel %vm1701, %v2780, 0
        %2789 = vmatprep.subr.mxu0 0.0
        %2790 = vmatpush1.msra.mxu0 %v2787
        %2791 = vmatprep.subr.mxu0 0.0
        %2792 = vmatpush1.msra.mxu0 0.0
        %2793 = vmatprep.subr.mxu0 0.0
        %2794 = vmatpush1.msra.mxu0 0.0
        %2795 = vmatprep.subr.mxu0 0.0
        %2796 = vmatpush1.msra.mxu0 0.0
        %2797 = vmatprep.subr.mxu0 0.0
        %2798 = vmatpush1.msra.mxu0 0.0
        %2799 = vmatprep.subr.mxu0 0.0
        %2800 = vmatpush1.msra.mxu0 0.0
        %2801 = vmatprep.subr.mxu0 0.0
        %2802 = vmatpush1.msra.mxu0 0.0
        %2803 = vmatprep.subr.mxu0 0.0
        %2804 = vmatpush1.msra.mxu0 0.0
        %2805 = vmatprep.subr.mxu0 0.0
        %2806 = vmatpush1.msra.mxu0 0.0
        %2807 = vmatprep.subr.mxu0 0.0
        %2808 = vmatpush1.msra.mxu0 0.0
        %2809 = vmatprep.subr.mxu0 0.0
        %2810 = vmatpush1.msra.mxu0 0.0
        %2811 = vmatprep.subr.mxu0 0.0
        %2812 = vmatpush1.msra.mxu0 0.0
        %2813 = vmatprep.subr.mxu0 0.0
        %2814 = vmatpush1.msra.mxu0 0.0
        %2815 = vmatprep.subr.mxu0 0.0
        %2816 = vmatpush1.msra.mxu0 0.0
        %2817 = vmatprep.subr.mxu0 0.0
        %2818 = vmatpush1.msra.mxu0 0.0
        %2819 = vmatprep.subr.mxu0 0.0
        %2820 = vmatpush1.msra.mxu0 0.0
        %2821 = vmatprep.subr.mxu0 0.0
        %2822 = vmatpush1.msra.mxu0 0.0
        %2823 = vmatprep.subr.mxu0 0.0
        %2824 = vmatpush1.msra.mxu0 0.0
        %2825 = vmatprep.subr.mxu0 0.0
        %2826 = vmatpush1.msra.mxu0 0.0
        %2827 = vmatprep.subr.mxu0 0.0
        %2828 = vmatpush1.msra.mxu0 0.0
        %2829 = vmatprep.subr.mxu0 0.0
        %2830 = vmatpush1.msra.mxu0 0.0
        %2831 = vmatprep.subr.mxu0 0.0
        %2832 = vmatpush1.msra.mxu0 0.0
        %2833 = vmatprep.subr.mxu0 0.0
        %2834 = vmatpush1.msra.mxu0 0.0
        %2835 = vmatprep.subr.mxu0 0.0
        %2836 = vmatpush1.msra.mxu0 0.0
        %2837 = vmatprep.subr.mxu0 0.0
        %2838 = vmatpush1.msra.mxu0 0.0
        %2839 = vmatprep.subr.mxu0 0.0
        %2840 = vmatpush1.msra.mxu0 0.0
        %2841 = vmatprep.subr.mxu0 0.0
        %2842 = vmatpush1.msra.mxu0 0.0
        %2843 = vmatprep.subr.mxu0 0.0
        %2844 = vmatpush1.msra.mxu0 0.0
        %2845 = vmatprep.subr.mxu0 0.0
        %2846 = vmatpush1.msra.mxu0 0.0
        %2847 = vmatprep.subr.mxu0 0.0
        %2848 = vmatpush1.msra.mxu0 0.0
        %2849 = vmatprep.subr.mxu0 0.0
        %2850 = vmatpush1.msra.mxu0 0.0
        %2851 = vmatprep.subr.mxu0 0.0
        %2852 = vmatpush1.msra.mxu0 0.0
        %2853 = vmatprep.mubr.f32.mxu0 0.0
        %2854 = vmatmul.mubr.f32.gmra.mrb[0].mxu0 %v2784
        %v2855 = vpop.f32.mrb[0].mxu0
        %v2856 = vadd.f32 0.0, %v2855
        %v2857 = vpop.f32.mrb[0].mxu0
        %2858 = vdwg.mxu0
        %v2859 = vld [vmem:[%s9] sm:$0x1]
        %v2860 = vld [vmem:[#allocation10] sm:$0xff]
        %v2861 = vld [vmem:[#allocation10 + $0x8] sm:$0xff]
        %v2862 = vld [vmem:[#allocation10 + $0x10] sm:$0xff]
        %v2863 = vld [vmem:[#allocation10 + $0x18] sm:$0xff]
        %v2864 = vld [vmem:[#allocation10 + $0x20] sm:$0x3]
        %v2866 = vsel %vm1976, %v2856, 0
        %v2869 = vsel %vm1983, %v2864, 0
        %2871 = vmatprep.subr.mxu0 0.0
        %2872 = vmatpush1.msra.mxu0 %v2860
        %2873 = vmatprep.subr.mxu0 0.0
        %2874 = vmatpush1.msra.mxu0 %v2861
        %2875 = vmatprep.subr.mxu0 0.0
        %2876 = vmatpush1.msra.mxu0 %v2862
        %2877 = vmatprep.subr.mxu0 0.0
        %2878 = vmatpush1.msra.mxu0 %v2863
        %2879 = vmatprep.subr.mxu0 0.0
        %2880 = vmatpush1.msra.mxu0 %v2869
        %2881 = vmatprep.subr.mxu0 0.0
        %2882 = vmatpush1.msra.mxu0 0.0
        %2883 = vmatprep.subr.mxu0 0.0
        %2884 = vmatpush1.msra.mxu0 0.0
        %2885 = vmatprep.subr.mxu0 0.0
        %2886 = vmatpush1.msra.mxu0 0.0
        %2887 = vmatprep.subr.mxu0 0.0
        %2888 = vmatpush1.msra.mxu0 0.0
        %2889 = vmatprep.subr.mxu0 0.0
        %2890 = vmatpush1.msra.mxu0 0.0
        %2891 = vmatprep.subr.mxu0 0.0
        %2892 = vmatpush1.msra.mxu0 0.0
        %2893 = vmatprep.subr.mxu0 0.0
        %2894 = vmatpush1.msra.mxu0 0.0
        %2895 = vmatprep.subr.mxu0 0.0
        %2896 = vmatpush1.msra.mxu0 0.0
        %2897 = vmatprep.subr.mxu0 0.0
        %2898 = vmatpush1.msra.mxu0 0.0
        %2899 = vmatprep.subr.mxu0 0.0
        %2900 = vmatpush1.msra.mxu0 0.0
        %2901 = vmatprep.subr.mxu0 0.0
        %2902 = vmatpush1.msra.mxu0 0.0
        %2903 = vmatprep.subr.mxu0 0.0
        %2904 = vmatpush1.msra.mxu0 0.0
        %2905 = vmatprep.subr.mxu0 0.0
        %2906 = vmatpush1.msra.mxu0 0.0
        %2907 = vmatprep.subr.mxu0 0.0
        %2908 = vmatpush1.msra.mxu0 0.0
        %2909 = vmatprep.subr.mxu0 0.0
        %2910 = vmatpush1.msra.mxu0 0.0
        %2911 = vmatprep.subr.mxu0 0.0
        %2912 = vmatpush1.msra.mxu0 0.0
        %2913 = vmatprep.subr.mxu0 0.0
        %2914 = vmatpush1.msra.mxu0 0.0
        %2915 = vmatprep.subr.mxu0 0.0
        %2916 = vmatpush1.msra.mxu0 0.0
        %2917 = vmatprep.subr.mxu0 0.0
        %2918 = vmatpush1.msra.mxu0 0.0
        %2919 = vmatprep.subr.mxu0 0.0
        %2920 = vmatpush1.msra.mxu0 0.0
        %2921 = vmatprep.subr.mxu0 0.0
        %2922 = vmatpush1.msra.mxu0 0.0
        %2923 = vmatprep.subr.mxu0 0.0
        %2924 = vmatpush1.msra.mxu0 0.0
        %2925 = vmatprep.subr.mxu0 0.0
        %2926 = vmatpush1.msra.mxu0 0.0
        %2927 = vmatprep.subr.mxu0 0.0
        %2928 = vmatpush1.msra.mxu0 0.0
        %2929 = vmatprep.subr.mxu0 0.0
        %2930 = vmatpush1.msra.mxu0 0.0
        %2931 = vmatprep.subr.mxu0 0.0
        %2932 = vmatpush1.msra.mxu0 0.0
        %2933 = vmatprep.subr.mxu0 0.0
        %2934 = vmatpush1.msra.mxu0 0.0
        %2935 = vmatprep.mubr.f32.mxu0 0.0
        %2936 = vmatmul.mubr.f32.gmra.mrb[0].mxu0 %v2866
        %v2937 = vpop.f32.mrb[0].mxu0
        %v2938 = vadd.f32 0.0, %v2937
        %v2939 = vpop.f32.mrb[0].mxu0
        %2940 = vdwg.mxu0
        %v2941 = vadd.f32 %v2859, %v2938
        %s2942 = scalar_lea.vmem [#allocation10], 40
        %v2943 = vld [vmem:[%s2942] sm:$0xff]
        %v2944 = vld [vmem:[%s2942 + $0x8] sm:$0xff]
        %v2945 = vld [vmem:[%s2942 + $0x10] sm:$0xff]
        %v2946 = vld [vmem:[%s2942 + $0x18] sm:$0xff]
        %v2947 = vld [vmem:[%s2942 + $0x20] sm:$0x3]
        %v2948 = vrot.slane %v2856, 1
        %v2949 = vsel %vm1976, %v2948, 0
        %v2952 = vsel %vm1983, %v2947, 0
        %2954 = vmatprep.subr.mxu0 0.0
        %2955 = vmatpush1.msra.mxu0 %v2943
        %2956 = vmatprep.subr.mxu0 0.0
        %2957 = vmatpush1.msra.mxu0 %v2944
        %2958 = vmatprep.subr.mxu0 0.0
        %2959 = vmatpush1.msra.mxu0 %v2945
        %2960 = vmatprep.subr.mxu0 0.0
        %2961 = vmatpush1.msra.mxu0 %v2946
        %2962 = vmatprep.subr.mxu0 0.0
        %2963 = vmatpush1.msra.mxu0 %v2952
        %2964 = vmatprep.subr.mxu0 0.0
        %2965 = vmatpush1.msra.mxu0 0.0
        %2966 = vmatprep.subr.mxu0 0.0
        %2967 = vmatpush1.msra.mxu0 0.0
        %2968 = vmatprep.subr.mxu0 0.0
        %2969 = vmatpush1.msra.mxu0 0.0
        %2970 = vmatprep.subr.mxu0 0.0
        %2971 = vmatpush1.msra.mxu0 0.0
        %2972 = vmatprep.subr.mxu0 0.0
        %2973 = vmatpush1.msra.mxu0 0.0
        %2974 = vmatprep.subr.mxu0 0.0
        %2975 = vmatpush1.msra.mxu0 0.0
        %2976 = vmatprep.subr.mxu0 0.0
        %2977 = vmatpush1.msra.mxu0 0.0
        %2978 = vmatprep.subr.mxu0 0.0
        %2979 = vmatpush1.msra.mxu0 0.0
        %2980 = vmatprep.subr.mxu0 0.0
        %2981 = vmatpush1.msra.mxu0 0.0
        %2982 = vmatprep.subr.mxu0 0.0
        %2983 = vmatpush1.msra.mxu0 0.0
        %2984 = vmatprep.subr.mxu0 0.0
        %2985 = vmatpush1.msra.mxu0 0.0
        %2986 = vmatprep.subr.mxu0 0.0
        %2987 = vmatpush1.msra.mxu0 0.0
        %2988 = vmatprep.subr.mxu0 0.0
        %2989 = vmatpush1.msra.mxu0 0.0
        %2990 = vmatprep.subr.mxu0 0.0
        %2991 = vmatpush1.msra.mxu0 0.0
        %2992 = vmatprep.subr.mxu0 0.0
        %2993 = vmatpush1.msra.mxu0 0.0
        %2994 = vmatprep.subr.mxu0 0.0
        %2995 = vmatpush1.msra.mxu0 0.0
        %2996 = vmatprep.subr.mxu0 0.0
        %2997 = vmatpush1.msra.mxu0 0.0
        %2998 = vmatprep.subr.mxu0 0.0
        %2999 = vmatpush1.msra.mxu0 0.0
        %3000 = vmatprep.subr.mxu0 0.0
        %3001 = vmatpush1.msra.mxu0 0.0
        %3002 = vmatprep.subr.mxu0 0.0
        %3003 = vmatpush1.msra.mxu0 0.0
        %3004 = vmatprep.subr.mxu0 0.0
        %3005 = vmatpush1.msra.mxu0 0.0
        %3006 = vmatprep.subr.mxu0 0.0
        %3007 = vmatpush1.msra.mxu0 0.0
        %3008 = vmatprep.subr.mxu0 0.0
        %3009 = vmatpush1.msra.mxu0 0.0
        %3010 = vmatprep.subr.mxu0 0.0
        %3011 = vmatpush1.msra.mxu0 0.0
        %3012 = vmatprep.subr.mxu0 0.0
        %3013 = vmatpush1.msra.mxu0 0.0
        %3014 = vmatprep.subr.mxu0 0.0
        %3015 = vmatpush1.msra.mxu0 0.0
        %3016 = vmatprep.subr.mxu0 0.0
        %3017 = vmatpush1.msra.mxu0 0.0
        %3018 = vmatprep.mubr.f32.mxu0 0.0
        %3019 = vmatmul.mubr.f32.gmra.mrb[0].mxu0 %v2949
        %v3020 = vpop.f32.mrb[0].mxu0
        %v3021 = vadd.f32 0.0, %v3020
        %v3022 = vpop.f32.mrb[0].mxu0
        %3023 = vdwg.mxu0
        %v3024 = vadd.f32 %v2941, %v3021
        %s3025 = scalar_lea.vmem [#allocation10], 80
        %v3026 = vld [vmem:[%s3025] sm:$0xff]
        %v3027 = vld [vmem:[%s3025 + $0x8] sm:$0xff]
        %v3028 = vld [vmem:[%s3025 + $0x10] sm:$0xff]
        %v3029 = vld [vmem:[%s3025 + $0x18] sm:$0xff]
        %v3030 = vld [vmem:[%s3025 + $0x20] sm:$0x3]
        %v3031 = vrot.slane %v2856, 2
        %v3032 = vsel %vm1976, %v3031, 0
        %v3035 = vsel %vm1983, %v3030, 0
        %3037 = vmatprep.subr.mxu0 0.0
        %3038 = vmatpush1.msra.mxu0 %v3026
        %3039 = vmatprep.subr.mxu0 0.0
        %3040 = vmatpush1.msra.mxu0 %v3027
        %3041 = vmatprep.subr.mxu0 0.0
        %3042 = vmatpush1.msra.mxu0 %v3028
        %3043 = vmatprep.subr.mxu0 0.0
        %3044 = vmatpush1.msra.mxu0 %v3029
        %3045 = vmatprep.subr.mxu0 0.0
        %3046 = vmatpush1.msra.mxu0 %v3035
        %3047 = vmatprep.subr.mxu0 0.0
        %3048 = vmatpush1.msra.mxu0 0.0
        %3049 = vmatprep.subr.mxu0 0.0
        %3050 = vmatpush1.msra.mxu0 0.0
        %3051 = vmatprep.subr.mxu0 0.0
        %3052 = vmatpush1.msra.mxu0 0.0
        %3053 = vmatprep.subr.mxu0 0.0
        %3054 = vmatpush1.msra.mxu0 0.0
        %3055 = vmatprep.subr.mxu0 0.0
        %3056 = vmatpush1.msra.mxu0 0.0
        %3057 = vmatprep.subr.mxu0 0.0
        %3058 = vmatpush1.msra.mxu0 0.0
        %3059 = vmatprep.subr.mxu0 0.0
        %3060 = vmatpush1.msra.mxu0 0.0
        %3061 = vmatprep.subr.mxu0 0.0
        %3062 = vmatpush1.msra.mxu0 0.0
        %3063 = vmatprep.subr.mxu0 0.0
        %3064 = vmatpush1.msra.mxu0 0.0
        %3065 = vmatprep.subr.mxu0 0.0
        %3066 = vmatpush1.msra.mxu0 0.0
        %3067 = vmatprep.subr.mxu0 0.0
        %3068 = vmatpush1.msra.mxu0 0.0
        %3069 = vmatprep.subr.mxu0 0.0
        %3070 = vmatpush1.msra.mxu0 0.0
        %3071 = vmatprep.subr.mxu0 0.0
        %3072 = vmatpush1.msra.mxu0 0.0
        %3073 = vmatprep.subr.mxu0 0.0
        %3074 = vmatpush1.msra.mxu0 0.0
        %3075 = vmatprep.subr.mxu0 0.0
        %3076 = vmatpush1.msra.mxu0 0.0
        %3077 = vmatprep.subr.mxu0 0.0
        %3078 = vmatpush1.msra.mxu0 0.0
        %3079 = vmatprep.subr.mxu0 0.0
        %3080 = vmatpush1.msra.mxu0 0.0
        %3081 = vmatprep.subr.mxu0 0.0
        %3082 = vmatpush1.msra.mxu0 0.0
        %3083 = vmatprep.subr.mxu0 0.0
        %3084 = vmatpush1.msra.mxu0 0.0
        %3085 = vmatprep.subr.mxu0 0.0
        %3086 = vmatpush1.msra.mxu0 0.0
        %3087 = vmatprep.subr.mxu0 0.0
        %3088 = vmatpush1.msra.mxu0 0.0
        %3089 = vmatprep.subr.mxu0 0.0
        %3090 = vmatpush1.msra.mxu0 0.0
        %3091 = vmatprep.subr.mxu0 0.0
        %3092 = vmatpush1.msra.mxu0 0.0
        %3093 = vmatprep.subr.mxu0 0.0
        %3094 = vmatpush1.msra.mxu0 0.0
        %3095 = vmatprep.subr.mxu0 0.0
        %3096 = vmatpush1.msra.mxu0 0.0
        %3097 = vmatprep.subr.mxu0 0.0
        %3098 = vmatpush1.msra.mxu0 0.0
        %3099 = vmatprep.subr.mxu0 0.0
        %3100 = vmatpush1.msra.mxu0 0.0
        %3101 = vmatprep.mubr.f32.mxu0 0.0
        %3102 = vmatmul.mubr.f32.gmra.mrb[0].mxu0 %v3032
        %v3103 = vpop.f32.mrb[0].mxu0
        %v3104 = vadd.f32 0.0, %v3103
        %v3105 = vpop.f32.mrb[0].mxu0
        %3106 = vdwg.mxu0
        %v3107 = vadd.f32 %v3024, %v3104
        %v3108 = vmax.f32 %v3107, 0.0
        %v3109 = vld [vmem:[%s10] sm:$0x7f]
        %v3110 = vld [vmem:[%s11] sm:$0x1]
        %v3112 = vsel %vm2782, %v3108, 0
        %v3115 = vsel %vm1701, %v3109, 0
        %3117 = vmatprep.subr.mxu0 0.0
        %3118 = vmatpush1.msra.mxu0 %v3115
        %3119 = vmatprep.subr.mxu0 0.0
        %3120 = vmatpush1.msra.mxu0 0.0
        %3121 = vmatprep.subr.mxu0 0.0
        %3122 = vmatpush1.msra.mxu0 0.0
        %3123 = vmatprep.subr.mxu0 0.0
        %3124 = vmatpush1.msra.mxu0 0.0
        %3125 = vmatprep.subr.mxu0 0.0
        %3126 = vmatpush1.msra.mxu0 0.0
        %3127 = vmatprep.subr.mxu0 0.0
        %3128 = vmatpush1.msra.mxu0 0.0
        %3129 = vmatprep.subr.mxu0 0.0
        %3130 = vmatpush1.msra.mxu0 0.0
        %3131 = vmatprep.subr.mxu0 0.0
        %3132 = vmatpush1.msra.mxu0 0.0
        %3133 = vmatprep.subr.mxu0 0.0
        %3134 = vmatpush1.msra.mxu0 0.0
        %3135 = vmatprep.subr.mxu0 0.0
        %3136 = vmatpush1.msra.mxu0 0.0
        %3137 = vmatprep.subr.mxu0 0.0
        %3138 = vmatpush1.msra.mxu0 0.0
        %3139 = vmatprep.subr.mxu0 0.0
        %3140 = vmatpush1.msra.mxu0 0.0
        %3141 = vmatprep.subr.mxu0 0.0
        %3142 = vmatpush1.msra.mxu0 0.0
        %3143 = vmatprep.subr.mxu0 0.0
        %3144 = vmatpush1.msra.mxu0 0.0
        %3145 = vmatprep.subr.mxu0 0.0
        %3146 = vmatpush1.msra.mxu0 0.0
        %3147 = vmatprep.subr.mxu0 0.0
        %3148 = vmatpush1.msra.mxu0 0.0
        %3149 = vmatprep.subr.mxu0 0.0
        %3150 = vmatpush1.msra.mxu0 0.0
        %3151 = vmatprep.subr.mxu0 0.0
        %3152 = vmatpush1.msra.mxu0 0.0
        %3153 = vmatprep.subr.mxu0 0.0
        %3154 = vmatpush1.msra.mxu0 0.0
        %3155 = vmatprep.subr.mxu0 0.0
        %3156 = vmatpush1.msra.mxu0 0.0
        %3157 = vmatprep.subr.mxu0 0.0
        %3158 = vmatpush1.msra.mxu0 0.0
        %3159 = vmatprep.subr.mxu0 0.0
        %3160 = vmatpush1.msra.mxu0 0.0
        %3161 = vmatprep.subr.mxu0 0.0
        %3162 = vmatpush1.msra.mxu0 0.0
        %3163 = vmatprep.subr.mxu0 0.0
        %3164 = vmatpush1.msra.mxu0 0.0
        %3165 = vmatprep.subr.mxu0 0.0
        %3166 = vmatpush1.msra.mxu0 0.0
        %3167 = vmatprep.subr.mxu0 0.0
        %3168 = vmatpush1.msra.mxu0 0.0
        %3169 = vmatprep.subr.mxu0 0.0
        %3170 = vmatpush1.msra.mxu0 0.0
        %3171 = vmatprep.subr.mxu0 0.0
        %3172 = vmatpush1.msra.mxu0 0.0
        %3173 = vmatprep.subr.mxu0 0.0
        %3174 = vmatpush1.msra.mxu0 0.0
        %3175 = vmatprep.subr.mxu0 0.0
        %3176 = vmatpush1.msra.mxu0 0.0
        %3177 = vmatprep.subr.mxu0 0.0
        %3178 = vmatpush1.msra.mxu0 0.0
        %3179 = vmatprep.subr.mxu0 0.0
        %3180 = vmatpush1.msra.mxu0 0.0
        %3181 = vmatprep.mubr.f32.mxu0 0.0
        %3182 = vmatmul.mubr.f32.gmra.mrb[0].mxu0 %v3112
        %v3183 = vpop.f32.mrb[0].mxu0
        %v3184 = vadd.f32 %v3110, %v3183
        %v3185 = vpop.f32.mrb[0].mxu0
        %3186 = vdwg.mxu0
        %vm3187 = vcmask 8192
        %v3188 = vsel %vm3187, %v3184, -inf
        %3189 = vmax.xlane.f32.xlu0 %v3188
        %v3190 = vpop.xlane.xlu0 %3189
        %v3191 = vsub.f32 %v3184, %v3190
        %v3192 = vmul.f32 %v3191, 1.442695
        %v3193 = vpow.pop %v3192
        %v3194 = vsel %vm3187, %v3193, 0.0
        %3195 = vadd.xlane.f32.xlu0 %v3194
        %v3196 = vpop.xlane.xlu0 %3195
        %v3197 = vrcp.pop %v3196
        %v3198 = vmul.f32 %v3196, %v3197
        %v3199 = vsub.f32 2.0, %v3198
        %v3200 = vmul.f32 %v3197, %v3199
        %v3201 = vmul.f32 %v3193, %v3200
        %3202 = vst.msk [vmem:[%s488] sm:$0x1] %vm3187, %v3201
        %s3203 = sand.u32 %s296, 1
        %s3204 = scalar_lea.sflag [#allocation4], %s3203
        %s3205 = sand.u32 %s296, 1
        %s3206 = scalar_lea.vmem [#allocation11], %s3205
        // Predicated region
        $region89: #{billnet_forward.1} parent=67 // pred_check
          %p3207 = pneg %p306
        $region90: #{billnet_forward.1} parent=67 // pred_check_branch
          %3209 = sbr.rel (%p3207) target = $region92
        $region91: #{billnet_forward.1} parent=67 // pred_region
          %s3211 = ssub.s32 16, 16
          %3212 = vsyncadd %s3204, %s3211
          %s3213 = smul.addr %s31, 16
          %s3214 = scalar_lea.hbm %s12, %s3213
          %s3216 = sshll.u32 %s3206, 4
          %s3217 = int_to_ptr.vmem [resolvable:$true] %s3216
          %3219 = dma.vmem_to_hbm [thread:$0]  %s3217, 16, %s3214, %s3204
        $region92: #{billnet_forward.1} parent=67 // pred_fallthru
          _
      $region68: #{billnet_forward.1} parent=5 // pred_fallthru
        _
      %p3220 = scmp.le.s32.totalorder 2, %s26
      // Predicated region
      $region93: #{billnet_forward.1} parent=5 // pred_check
        %p3221 = pneg %p3220
      $region94: #{billnet_forward.1} parent=5 // pred_check_branch
        %3223 = sbr.rel (%p3221) target = $region96
      $region95: #{billnet_forward.1} parent=5 // pred_region
        %s3224 = ssub.s32 %s26, 2
        // Predicated region
        $region97: #{billnet_forward.1} parent=95 // pred_check
          %p3225 = pneg %p312
        $region98: #{billnet_forward.1} parent=95 // pred_check_branch
          %3227 = sbr.rel (%p3225) target = $region100
        $region99: #{billnet_forward.1} parent=95 // pred_region
          %s3228 = sand.u32 %s297, 1
          %s3229 = scalar_lea.sflag [#allocation4], %s3228
          %s3230 = sand.u32 %s297, 1
          %s3231 = scalar_lea.vmem [#allocation11], %s3230
          %3232 = dma.done %s3229, 16
        $region100: #{billnet_forward.1} parent=95 // pred_fallthru
          _
      $region96: #{billnet_forward.1} parent=5 // pred_fallthru
        _
    $region6: #{billnet_forward.1} parent=1 // loop_footer
      %s30 = sadd.s32 1, %s26
    $region7: #{billnet_forward.1} parent=1 // loop_footer_branch
      %25 = sbr.rel target = $region3
    $region8: #{billnet_forward.1} parent=1 // loop_exit
      _
    %3233 = vsyncpa [#allocation3], 1
    %s3234 = scalar_lea.sflag [#allocation3], 1
    %3235 = vsyncpa %s3234, 1
    %3236 = vsyncpa [#allocation6], 1
    %3237 = vsyncpa [#allocation9], 1
    %3238 = vsyncpa [#allocation4], 1
    %s3239 = scalar_lea.sflag [#allocation4], 1
    %3240 = vsyncpa %s3239, 1

</llo_original>
